<compile_context>
chip_gen: v7x
topology: tpu7x:2x2x1
jax: 0.10.0
libtpu: 0.0.40
codegen_flags: <defaults>
</compile_context>

<pallas_src>
import jax
import jax.numpy as jnp
from jax import lax
from jax.experimental import pallas as pl
from jax.experimental.pallas import tpu as pltpu

# ----------------------------- model config ---------------------------------
SEQ = 8          # input_shape[0]
FEAT = 32        # input_shape[1]
EMBED = 128      # embed_dim
HEADS = 4        # num_heads
HEAD_DIM = EMBED // HEADS
FC1 = 512
FCH = 256
OUTPUT_SHAPE = (2, 2)
NUM_ACTIONS = 4  # prod(output_shape)
NF = 128         # lane-padded width of the fused (dueling-combined) output head
LN_EPS = 1e-5
MAX_TB = 128     # batch tile; raise to 256 on v6e if desired (VMEM permitting)


def _round_up(a, m):
    return (a + m - 1) // m * m


# ------------------------------ Pallas kernel -------------------------------
def dueling_attn_kernel(
    x_ref,              # (SEQ, TB, F)     f32   seq-major batch tile
    wcat_ref,           # (F, 4E)          bf16  fused linear+in_proj (q pre-scaled)
    bcat_ref,           # (1, 4E)          f32
    hsum_ref,           # (E, E)           bf16  block-diagonal per-head ones
    wout_ref,           # (E, E)           bf16  MHA out_proj
    bout_ref,           # (1, E)           f32
    lng_ref, lnb_ref,   # (1, E)           f32   LayerNorm gamma / beta
    w1_ref,             # (S*E, 512)       bf16  fc1
    b1_ref,             # (1, 512)         f32
    wva_ref,            # (512, 512)       bf16  fused fc_value | fc_advantage
    bva_ref,            # (1, 512)         f32
    wq_ref,             # (512, NF)        bf16  fused heads + dueling combine
    bq_ref,             # (1, NF)          f32
    q_ref,              # (TB, NF)         f32   output (cols 0..3 = q-values)
    ctx_ref,            # (SEQ, TB, E)     f32   VMEM scratch
):
    f32, bf16 = jnp.float32, jnp.bfloat16
    tb = x_ref.shape[1]
    rows = SEQ * tb

    # ---- fused attention_layer.linear + MHA in_proj: one K=32 matmul --------
    x2 = x_ref[...].reshape(rows, FEAT)
    fused = jnp.dot(x2.astype(bf16), wcat_ref[...],
                    preferred_element_type=f32) + bcat_ref[...]          # (rows, 4E)
    xe = fused[:, :EMBED]                                                # residual branch
    qh = fused[:, EMBED:2 * EMBED].reshape(SEQ, tb, EMBED)               # already scaled
    kh = fused[:, 2 * EMBED:3 * EMBED].reshape(SEQ, tb, EMBED)
    vh = fused[:, 3 * EMBED:].reshape(SEQ, tb, EMBED)

    hsum = hsum_ref[...]                                                 # (E, E) bf16

    # ---- multi-head self-attention, heads packed along the 128 lanes --------
    for qi in range(SEQ):
        # scores (replicated across each head's 32 lanes):
        #   s[k, b, e] = sum_{e' in head(e)} q[qi, b, e'] * k[k, b, e']
        prod = qh[qi][None, :, :] * kh                                   # (S, tb, E) f32
        s = jnp.dot(prod.reshape(rows, EMBED).astype(bf16), hsum,
                    preferred_element_type=f32).reshape(SEQ, tb, EMBED)
        m = jnp.max(s, axis=0)                                           # (tb, E)
        p = jnp.exp(s - m[None, :, :])                                   # (S, tb, E)
        denom = jnp.sum(p, axis=0)                                       # (tb, E)
        ctx = jnp.sum(p * vh, axis=0)                                    # (tb, E)
        ctx_ref[qi] = ctx * pl.reciprocal(denom, approx=True)

    # ---- MHA out_proj (single K=128 matmul) + residual + LayerNorm ----------
    attn = jnp.dot(ctx_ref[...].reshape(rows, EMBED).astype(bf16), wout_ref[...],
                   preferred_element_type=f32) + bout_ref[...]           # (rows, E)
    res = attn + xe
    mu = jnp.mean(res, axis=-1, keepdims=True)
    var = jnp.mean((res - mu) ** 2, axis=-1, keepdims=True)
    normed = (res - mu) * lax.rsqrt(var + LN_EPS) * lng_ref[...] + lnb_ref[...]

    # ---- fc1: 8 accumulated K=128 matmuls over contiguous seq-major slabs ---
    n3 = normed.astype(bf16).reshape(SEQ, tb, EMBED)
    acc = jnp.dot(n3[0], w1_ref[pl.ds(0, EMBED), :], preferred_element_type=f32)
    for si in range(1, SEQ):
        acc = acc + jnp.dot(n3[si], w1_ref[pl.ds(si * EMBED, EMBED), :],
                            preferred_element_type=f32)
    h1 = jnp.maximum(acc + b1_ref[...], 0.0)                             # (tb, 512)

    hva = jnp.maximum(
        jnp.dot(h1.astype(bf16), wva_ref[...], preferred_element_type=f32)
        + bva_ref[...], 0.0)                                             # (tb, 512)

    # final head already contains the dueling combine -> pure lane-dense store
    qv = jnp.dot(hva.astype(bf16), wq_ref[...], preferred_element_type=f32) + bq_ref[...]
    q_ref[...] = qv.astype(q_ref.dtype)                                  # (tb, NF)


# ------------------------------ wrapper --------------------------------------
def dueling_q_forward(x, params, tb=None):
    B = x.shape[0]
    if tb is None:
        tb = min(MAX_TB, _round_up(B, 8))
        if B > 8:  # prefer >=2 grid steps (helps v7x 2-TC sharding), keep multiple of 8
            tb = min(tb, _round_up((B + 1) // 2, 8))
    b_pad = _round_up(B, tb)
    if b_pad != B:
        x = jnp.pad(x, ((0, b_pad - B), (0, 0), (0, 0)))
    x_t = jnp.transpose(x, (1, 0, 2))                       # (SEQ, b_pad, F) seq-major

    f32, bf16 = jnp.float32, jnp.bfloat16
    scale = 1.0 / (HEAD_DIM ** 0.5)

    # fold attention_layer.linear into the MHA in_proj (f32 pre-multiply, one bf16 cast)
    wl, bl = params["wl"], params["bl"]
    win, b_in = params["win"], params["bin"]
    w_qkv = wl @ win                                        # (F, 3E)
    b_qkv = bl @ win + b_in                                 # (1, 3E)
    w_qkv = w_qkv.at[:, :EMBED].multiply(scale)             # fold 1/sqrt(Dh) into q
    b_qkv = b_qkv.at[:, :EMBED].multiply(scale)
    wcat = jnp.concatenate([wl, w_qkv], axis=1).astype(bf16)    # (F, 4E)
    bcat = jnp.concatenate([bl, b_qkv], axis=1).astype(f32)     # (1, 4E)

    # block-diagonal per-head lane-sum matrix
    head_id = jnp.arange(EMBED) // HEAD_DIM
    hsum = (head_id[:, None] == head_id[None, :]).astype(bf16)  # (E, E)

    wout = params["wout"].astype(bf16)
    bout = params["bout"].astype(f32)
    lng = params["g"].astype(f32)
    lnb = params["be"].astype(f32)
    w1 = params["w1"].astype(bf16)
    b1 = params["b1"].astype(f32)

    # fused fc_value | fc_advantage trunk
    wva = jnp.concatenate([params["wv"], params["wa"]], axis=1).astype(bf16)  # (512, 512)
    bva = jnp.concatenate([params["bv"], params["ba"]], axis=1).astype(f32)   # (1, 512)

    # fused value/advantage output head with the dueling combine folded in:
    #   q_j = hv@wvo + bvo + ha@(wao_j - mean_i wao_i) + (bao_j - mean_i bao_i)
    wao_c = params["wao"] - jnp.mean(params["wao"], axis=1, keepdims=True)    # (FCH, A)
    bao_c = params["bao"] - jnp.mean(params["bao"], axis=1, keepdims=True)    # (1, A)
    wq = jnp.zeros((2 * FCH, NF), f32)
    wq = wq.at[:FCH, :NUM_ACTIONS].set(jnp.tile(params["wvo"], (1, NUM_ACTIONS)))
    wq = wq.at[FCH:, :NUM_ACTIONS].set(wao_c)
    wq = wq.astype(bf16)
    bq = jnp.zeros((1, NF), f32)
    bq = bq.at[:, :NUM_ACTIONS].set(params["bvo"] + bao_c)

    weights = [wcat, bcat, hsum, wout, bout, lng, lnb, w1, b1, wva, bva, wq, bq]

    def const_spec(shape):
        return pl.BlockSpec(shape, lambda b: (0,) * len(shape))

    in_specs = [pl.BlockSpec((SEQ, tb, FEAT), lambda b: (0, b, 0))]
    in_specs += [const_spec(w.shape) for w in weights]

    out = pl.pallas_call(
        dueling_attn_kernel,
        out_shape=jax.ShapeDtypeStruct((b_pad, NF), jnp.float32),
        grid=(b_pad // tb,),
        in_specs=in_specs,
        out_specs=pl.BlockSpec((tb, NF), lambda b: (b, 0)),
        scratch_shapes=[pltpu.VMEM((SEQ, tb, EMBED), jnp.float32)],
        compiler_params=pltpu.CompilerParams(
            dimension_semantics=("parallel",),
            vmem_limit_bytes=32 * 1024 * 1024),
    )(x_t, *weights)
    return out[:B, :NUM_ACTIONS].reshape(B, *OUTPUT_SHAPE)


# ------------------------- pure-JAX reference --------------------------------
def reference_forward(x, p):
    """Faithful (unfused, per-head) reference of the PyTorch module.  The big
    linear layers use the same bf16-in / f32-accumulate precision as the kernel;
    attention statistics / LayerNorm / softmax stay in f32."""
    bf16, f32 = jnp.bfloat16, jnp.float32

    def bmm(a, w):
        return jnp.dot(a.astype(bf16), w.astype(bf16), preferred_element_type=f32)

    B = x.shape[0]
    xe = bmm(x, p["wl"]) + p["bl"]                              # (B, S, E)
    qkv = bmm(xe, p["win"]) + p["bin"]                          # (B, S, 3E)
    q_, k_, v_ = qkv[..., :EMBED], qkv[..., EMBED:2 * EMBED], qkv[..., 2 * EMBED:]

    def split_heads(t):  # (B, S, E) -> (B, H, S, Dh)
        return t.reshape(B, SEQ, HEADS, HEAD_DIM).transpose(0, 2, 1, 3)

    qh, kh, vh = split_heads(q_), split_heads(k_), split_heads(v_)
    s = jnp.einsum("bhqd,bhkd->bhqk", qh, kh) / (HEAD_DIM ** 0.5)
    pattn = jax.nn.softmax(s, axis=-1)
    ctx = jnp.einsum("bhqk,bhkd->bhqd", pattn, vh)
    ctx = ctx.transpose(0, 2, 1, 3).reshape(B, SEQ, EMBED)
    attn_out = bmm(ctx, p["wout"]) + p["bout"]
    res = attn_out + xe
    mu = res.mean(-1, keepdims=True)
    var = ((res - mu) ** 2).mean(-1, keepdims=True)
    normed = (res - mu) * lax.rsqrt(var + LN_EPS) * p["g"] + p["be"]
    flat = normed.reshape(B, SEQ * EMBED)
    h1 = jax.nn.relu(bmm(flat, p["w1"]) + p["b1"])
    hv = jax.nn.relu(bmm(h1, p["wv"]) + p["bv"])
    ha = jax.nn.relu(bmm(h1, p["wa"]) + p["ba"])
    v = bmm(hv, p["wvo"]) + p["bvo"]
    a = bmm(ha, p["wao"]) + p["bao"]
    q = v + (a - a.mean(-1, keepdims=True))
    return q.reshape(B, *OUTPUT_SHAPE)


# ------------------------------ param init -----------------------------------
def init_params(key):
    ks = jax.random.split(key, 20)
    sc = 0.05

    def w(k, shape):
        return jax.random.normal(k, shape, jnp.float32) * sc

    return {
        # attention_layer.linear  (torch: (E, F)) -> transposed (F, E)
        "wl":  w(ks[0], (FEAT, EMBED)),
        "bl":  w(ks[1], (1, EMBED)),
        # MHA in_proj (torch: (3E, E)) -> (E, 3E)
        "win": w(ks[2], (EMBED, 3 * EMBED)),
        "bin": w(ks[3], (1, 3 * EMBED)),
        # MHA out_proj (torch: (E, E)) -> (E, E)
        "wout": w(ks[4], (EMBED, EMBED)),
        "bout": w(ks[5], (1, EMBED)),
        # LayerNorm
        "g":  jnp.ones((1, EMBED), jnp.float32),
        "be": jnp.zeros((1, EMBED), jnp.float32),
        # fc1 (torch: (512, S*E)) -> (S*E, 512)
        "w1": w(ks[6], (SEQ * EMBED, FC1)),
        "b1": w(ks[7], (1, FC1)),
        # fc_value / fc_advantage (torch: (256, 512)) -> (512, 256)
        "wv": w(ks[8], (FC1, FCH)),
        "bv": w(ks[9], (1, FCH)),
        "wa": w(ks[10], (FC1, FCH)),
        "ba": w(ks[11], (1, FCH)),
        # value (torch: (1, 256)) -> (256, 1)
        "wvo": w(ks[12], (FCH, 1)),
        "bvo": w(ks[13], (1, 1)),
        # advantage (torch: (A, 256)) -> (256, A)
        "wao": w(ks[14], (FCH, NUM_ACTIONS)),
        "bao": w(ks[15], (1, NUM_ACTIONS)),
    }


if __name__ == "__main__":
    key = jax.random.PRNGKey(0)
    pkey, xkey = jax.random.split(key)
    params = init_params(pkey)

    B = 2
    x = jax.random.normal(xkey, (B, SEQ, FEAT), jnp.float32)

    q_kernel = dueling_q_forward(x, params)
    jax.block_until_ready(q_kernel)

    q_ref = reference_forward(x, params)
    jax.block_until_ready(q_ref)

    assert q_kernel.shape == (B,) + OUTPUT_SHAPE
    # bf16 matmuls + f32-side weight folding (linear->in_proj, dueling combine)
    # cause small deviations vs the unfused reference; structural bugs would be O(1).
    if not jnp.allclose(q_kernel, q_ref, rtol=2e-2, atol=2e-2):
        diff = float(jnp.max(jnp.abs(q_kernel - q_ref)))
        raise AssertionError(f"Pallas kernel output mismatch vs reference (max abs diff {diff})")

    print("KERNEL_OK")
</pallas_src>

<mosaic_0001>
module attributes {stable_mosaic.version = 11 : i64} {
  func.func @dueling_attn_kernel(%arg0: i32, %arg1: memref<8x8x32xf32, #tpu.memory_space<vmem>>, %arg2: memref<32x512xbf16, #tpu.memory_space<vmem>>, %arg3: memref<1x512xf32, #tpu.memory_space<vmem>>, %arg4: memref<128x128xbf16, #tpu.memory_space<vmem>>, %arg5: memref<128x128xbf16, #tpu.memory_space<vmem>>, %arg6: memref<1x128xf32, #tpu.memory_space<vmem>>, %arg7: memref<1x128xf32, #tpu.memory_space<vmem>>, %arg8: memref<1x128xf32, #tpu.memory_space<vmem>>, %arg9: memref<1024x512xbf16, #tpu.memory_space<vmem>>, %arg10: memref<1x512xf32, #tpu.memory_space<vmem>>, %arg11: memref<512x512xbf16, #tpu.memory_space<vmem>>, %arg12: memref<1x512xf32, #tpu.memory_space<vmem>>, %arg13: memref<512x128xbf16, #tpu.memory_space<vmem>>, %arg14: memref<1x128xf32, #tpu.memory_space<vmem>>, %arg15: memref<8x128xf32, #tpu.memory_space<vmem>>, %arg16: memref<8x8x128xf32, #tpu.memory_space<vmem>>) attributes {dimension_semantics = [#tpu.dimension_semantics<parallel>], iteration_bounds = array<i64: 1>, scalar_prefetch = 0 : i64, scratch_operands = 1 : i64, tpu.core_type = #tpu.core_type<tc>, window_params = [{transform_indices = @transform_0, window_bounds = array<i64: 8, 8, 32>}, {pipeline_mode = #tpu.pipeline_mode<synchronous>, transform_indices = @transform_1, window_bounds = array<i64: 32, 512>}, {pipeline_mode = #tpu.pipeline_mode<synchronous>, transform_indices = @transform_2, window_bounds = array<i64: 1, 512>}, {pipeline_mode = #tpu.pipeline_mode<synchronous>, transform_indices = @transform_3, window_bounds = array<i64: 128, 128>}, {pipeline_mode = #tpu.pipeline_mode<synchronous>, transform_indices = @transform_4, window_bounds = array<i64: 128, 128>}, {pipeline_mode = #tpu.pipeline_mode<synchronous>, transform_indices = @transform_5, window_bounds = array<i64: 1, 128>}, {pipeline_mode = #tpu.pipeline_mode<synchronous>, transform_indices = @transform_6, window_bounds = array<i64: 1, 128>}, {pipeline_mode = #tpu.pipeline_mode<synchronous>, transform_indices = @transform_7, window_bounds = array<i64: 1, 128>}, {pipeline_mode = #tpu.pipeline_mode<synchronous>, transform_indices = @transform_8, window_bounds = array<i64: 1024, 512>}, {pipeline_mode = #tpu.pipeline_mode<synchronous>, transform_indices = @transform_9, window_bounds = array<i64: 1, 512>}, {pipeline_mode = #tpu.pipeline_mode<synchronous>, transform_indices = @transform_10, window_bounds = array<i64: 512, 512>}, {pipeline_mode = #tpu.pipeline_mode<synchronous>, transform_indices = @transform_11, window_bounds = array<i64: 1, 512>}, {pipeline_mode = #tpu.pipeline_mode<synchronous>, transform_indices = @transform_12, window_bounds = array<i64: 512, 128>}, {pipeline_mode = #tpu.pipeline_mode<synchronous>, transform_indices = @transform_13, window_bounds = array<i64: 1, 128>}, {transform_indices = @transform_14, window_bounds = array<i64: 8, 128>}]} {
    %c0 = arith.constant 0 : index
    %c0_0 = arith.constant 0 : index
    %c0_1 = arith.constant 0 : index
    %0 = vector.load %arg1[%c0, %c0_0, %c0_1] : memref<8x8x32xf32, #tpu.memory_space<vmem>>, vector<8x8x32xf32>
    %1 = vector.shape_cast %0 : vector<8x8x32xf32> to vector<64x32xf32>
    %2 = arith.truncf %1 : vector<64x32xf32> to vector<64x32xbf16>
    %c0_2 = arith.constant 0 : index
    %c0_3 = arith.constant 0 : index
    %3 = vector.load %arg2[%c0_2, %c0_3] : memref<32x512xbf16, #tpu.memory_space<vmem>>, vector<32x512xbf16>
    %cst = arith.constant dense<0.000000e+00> : vector<64x512xf32>
    %4 = tpu.matmul %2, %3, %cst {dimension_numbers = #tpu.dot_dimension_numbers<[1], [0], [0], [1], [0, 0, 1, 1], [], []>} : vector<64x32xbf16>, vector<32x512xbf16>, vector<64x512xf32> -> vector<64x512xf32>
    %c0_4 = arith.constant 0 : index
    %c0_5 = arith.constant 0 : index
    %5 = vector.load %arg3[%c0_4, %c0_5] : memref<1x512xf32, #tpu.memory_space<vmem>>, vector<1x512xf32>
    %6 = vector.broadcast %5 : vector<1x512xf32> to vector<64x512xf32>
    %7 = arith.addf %4, %6 : vector<64x512xf32>
    %8 = vector.extract_strided_slice %7 {offsets = [0, 0], sizes = [64, 128], strides = [1, 1]} : vector<64x512xf32> to vector<64x128xf32>
    %9 = vector.extract_strided_slice %7 {offsets = [0, 128], sizes = [64, 128], strides = [1, 1]} : vector<64x512xf32> to vector<64x128xf32>
    %10 = vector.shape_cast %9 : vector<64x128xf32> to vector<8x8x128xf32>
    %11 = vector.extract_strided_slice %7 {offsets = [0, 256], sizes = [64, 128], strides = [1, 1]} : vector<64x512xf32> to vector<64x128xf32>
    %12 = vector.shape_cast %11 : vector<64x128xf32> to vector<8x8x128xf32>
    %13 = vector.extract_strided_slice %7 {offsets = [0, 384], sizes = [64, 128], strides = [1, 1]} : vector<64x512xf32> to vector<64x128xf32>
    %14 = vector.shape_cast %13 : vector<64x128xf32> to vector<8x8x128xf32>
    %c0_6 = arith.constant 0 : index
    %c0_7 = arith.constant 0 : index
    %15 = vector.load %arg4[%c0_6, %c0_7] : memref<128x128xbf16, #tpu.memory_space<vmem>>, vector<128x128xbf16>
    %16 = vector.extract_strided_slice %10 {offsets = [0, 0, 0], sizes = [1, 8, 128], strides = [1, 1, 1]} : vector<8x8x128xf32> to vector<1x8x128xf32>
    %17 = vector.shape_cast %16 : vector<1x8x128xf32> to vector<8x128xf32>
    %18 = vector.shape_cast %17 : vector<8x128xf32> to vector<1x8x128xf32>
    %19 = vector.broadcast %18 : vector<1x8x128xf32> to vector<8x8x128xf32>
    %20 = arith.mulf %19, %12 : vector<8x8x128xf32>
    %21 = vector.shape_cast %20 : vector<8x8x128xf32> to vector<64x128xf32>
    %22 = arith.truncf %21 : vector<64x128xf32> to vector<64x128xbf16>
    %cst_8 = arith.constant dense<0.000000e+00> : vector<64x128xf32>
    %23 = tpu.matmul %22, %15, %cst_8 {dimension_numbers = #tpu.dot_dimension_numbers<[1], [0], [0], [1], [0, 0, 1, 1], [], []>} : vector<64x128xbf16>, vector<128x128xbf16>, vector<64x128xf32> -> vector<64x128xf32>
    %24 = vector.shape_cast %23 : vector<64x128xf32> to vector<8x8x128xf32>
    %cst_9 = arith.constant dense<0xFF800000> : vector<8x128xf32>
    %25 = vector.multi_reduction <maximumf>, %24, %cst_9 [0] : vector<8x8x128xf32> to vector<8x128xf32>
    %26 = vector.shape_cast %25 : vector<8x128xf32> to vector<1x8x128xf32>
    %27 = vector.broadcast %26 : vector<1x8x128xf32> to vector<8x8x128xf32>
    %28 = arith.subf %24, %27 : vector<8x8x128xf32>
    %29 = math.exp %28 : vector<8x8x128xf32>
    %cst_10 = arith.constant dense<0.000000e+00> : vector<8x128xf32>
    %30 = vector.multi_reduction <add>, %29, %cst_10 [0] : vector<8x8x128xf32> to vector<8x128xf32>
    %31 = arith.mulf %29, %14 : vector<8x8x128xf32>
    %cst_11 = arith.constant dense<0.000000e+00> : vector<8x128xf32>
    %32 = vector.multi_reduction <add>, %31, %cst_11 [0] : vector<8x8x128xf32> to vector<8x128xf32>
    %33 = tpu.reciprocal %30 {approx = true} : vector<8x128xf32> -> vector<8x128xf32>
    %34 = arith.mulf %32, %33 : vector<8x128xf32>
    %c0_12 = arith.constant 0 : index
    %c0_13 = arith.constant 0 : index
    %c0_14 = arith.constant 0 : index
    %35 = vector.load %arg16[%c0_12, %c0_13, %c0_14] : memref<8x8x128xf32, #tpu.memory_space<vmem>>, vector<1x8x128xf32>
    %36 = vector.shape_cast %35 : vector<1x8x128xf32> to vector<8x128xf32>
    %37 = vector.shape_cast %34 : vector<8x128xf32> to vector<1x8x128xf32>
    tpu.vector_store %arg16[%c0_12, %c0_13, %c0_14], %37 {strides = array<i32>} : memref<8x8x128xf32, #tpu.memory_space<vmem>>, vector<1x8x128xf32>,
    %38 = vector.extract_strided_slice %10 {offsets = [1, 0, 0], sizes = [1, 8, 128], strides = [1, 1, 1]} : vector<8x8x128xf32> to vector<1x8x128xf32>
    %39 = vector.shape_cast %38 : vector<1x8x128xf32> to vector<8x128xf32>
    %40 = vector.shape_cast %39 : vector<8x128xf32> to vector<1x8x128xf32>
    %41 = vector.broadcast %40 : vector<1x8x128xf32> to vector<8x8x128xf32>
    %42 = arith.mulf %41, %12 : vector<8x8x128xf32>
    %43 = vector.shape_cast %42 : vector<8x8x128xf32> to vector<64x128xf32>
    %44 = arith.truncf %43 : vector<64x128xf32> to vector<64x128xbf16>
    %cst_15 = arith.constant dense<0.000000e+00> : vector<64x128xf32>
    %45 = tpu.matmul %44, %15, %cst_15 {dimension_numbers = #tpu.dot_dimension_numbers<[1], [0], [0], [1], [0, 0, 1, 1], [], []>} : vector<64x128xbf16>, vector<128x128xbf16>, vector<64x128xf32> -> vector<64x128xf32>
    %46 = vector.shape_cast %45 : vector<64x128xf32> to vector<8x8x128xf32>
    %cst_16 = arith.constant dense<0xFF800000> : vector<8x128xf32>
    %47 = vector.multi_reduction <maximumf>, %46, %cst_16 [0] : vector<8x8x128xf32> to vector<8x128xf32>
    %48 = vector.shape_cast %47 : vector<8x128xf32> to vector<1x8x128xf32>
    %49 = vector.broadcast %48 : vector<1x8x128xf32> to vector<8x8x128xf32>
    %50 = arith.subf %46, %49 : vector<8x8x128xf32>
    %51 = math.exp %50 : vector<8x8x128xf32>
    %cst_17 = arith.constant dense<0.000000e+00> : vector<8x128xf32>
    %52 = vector.multi_reduction <add>, %51, %cst_17 [0] : vector<8x8x128xf32> to vector<8x128xf32>
    %53 = arith.mulf %51, %14 : vector<8x8x128xf32>
    %cst_18 = arith.constant dense<0.000000e+00> : vector<8x128xf32>
    %54 = vector.multi_reduction <add>, %53, %cst_18 [0] : vector<8x8x128xf32> to vector<8x128xf32>
    %55 = tpu.reciprocal %52 {approx = true} : vector<8x128xf32> -> vector<8x128xf32>
    %56 = arith.mulf %54, %55 : vector<8x128xf32>
    %c1 = arith.constant 1 : index
    %c0_19 = arith.constant 0 : index
    %c0_20 = arith.constant 0 : index
    %57 = vector.load %arg16[%c1, %c0_19, %c0_20] : memref<8x8x128xf32, #tpu.memory_space<vmem>>, vector<1x8x128xf32>
    %58 = vector.shape_cast %57 : vector<1x8x128xf32> to vector<8x128xf32>
    %59 = vector.shape_cast %56 : vector<8x128xf32> to vector<1x8x128xf32>
    tpu.vector_store %arg16[%c1, %c0_19, %c0_20], %59 {strides = array<i32>} : memref<8x8x128xf32, #tpu.memory_space<vmem>>, vector<1x8x128xf32>,
    %60 = vector.extract_strided_slice %10 {offsets = [2, 0, 0], sizes = [1, 8, 128], strides = [1, 1, 1]} : vector<8x8x128xf32> to vector<1x8x128xf32>
    %61 = vector.shape_cast %60 : vector<1x8x128xf32> to vector<8x128xf32>
    %62 = vector.shape_cast %61 : vector<8x128xf32> to vector<1x8x128xf32>
    %63 = vector.broadcast %62 : vector<1x8x128xf32> to vector<8x8x128xf32>
    %64 = arith.mulf %63, %12 : vector<8x8x128xf32>
    %65 = vector.shape_cast %64 : vector<8x8x128xf32> to vector<64x128xf32>
    %66 = arith.truncf %65 : vector<64x128xf32> to vector<64x128xbf16>
    %cst_21 = arith.constant dense<0.000000e+00> : vector<64x128xf32>
    %67 = tpu.matmul %66, %15, %cst_21 {dimension_numbers = #tpu.dot_dimension_numbers<[1], [0], [0], [1], [0, 0, 1, 1], [], []>} : vector<64x128xbf16>, vector<128x128xbf16>, vector<64x128xf32> -> vector<64x128xf32>
    %68 = vector.shape_cast %67 : vector<64x128xf32> to vector<8x8x128xf32>
    %cst_22 = arith.constant dense<0xFF800000> : vector<8x128xf32>
    %69 = vector.multi_reduction <maximumf>, %68, %cst_22 [0] : vector<8x8x128xf32> to vector<8x128xf32>
    %70 = vector.shape_cast %69 : vector<8x128xf32> to vector<1x8x128xf32>
    %71 = vector.broadcast %70 : vector<1x8x128xf32> to vector<8x8x128xf32>
    %72 = arith.subf %68, %71 : vector<8x8x128xf32>
    %73 = math.exp %72 : vector<8x8x128xf32>
    %cst_23 = arith.constant dense<0.000000e+00> : vector<8x128xf32>
    %74 = vector.multi_reduction <add>, %73, %cst_23 [0] : vector<8x8x128xf32> to vector<8x128xf32>
    %75 = arith.mulf %73, %14 : vector<8x8x128xf32>
    %cst_24 = arith.constant dense<0.000000e+00> : vector<8x128xf32>
    %76 = vector.multi_reduction <add>, %75, %cst_24 [0] : vector<8x8x128xf32> to vector<8x128xf32>
    %77 = tpu.reciprocal %74 {approx = true} : vector<8x128xf32> -> vector<8x128xf32>
    %78 = arith.mulf %76, %77 : vector<8x128xf32>
    %c2 = arith.constant 2 : index
    %c0_25 = arith.constant 0 : index
    %c0_26 = arith.constant 0 : index
    %79 = vector.load %arg16[%c2, %c0_25, %c0_26] : memref<8x8x128xf32, #tpu.memory_space<vmem>>, vector<1x8x128xf32>
    %80 = vector.shape_cast %79 : vector<1x8x128xf32> to vector<8x128xf32>
    %81 = vector.shape_cast %78 : vector<8x128xf32> to vector<1x8x128xf32>
    tpu.vector_store %arg16[%c2, %c0_25, %c0_26], %81 {strides = array<i32>} : memref<8x8x128xf32, #tpu.memory_space<vmem>>, vector<1x8x128xf32>,
    %82 = vector.extract_strided_slice %10 {offsets = [3, 0, 0], sizes = [1, 8, 128], strides = [1, 1, 1]} : vector<8x8x128xf32> to vector<1x8x128xf32>
    %83 = vector.shape_cast %82 : vector<1x8x128xf32> to vector<8x128xf32>
    %84 = vector.shape_cast %83 : vector<8x128xf32> to vector<1x8x128xf32>
    %85 = vector.broadcast %84 : vector<1x8x128xf32> to vector<8x8x128xf32>
    %86 = arith.mulf %85, %12 : vector<8x8x128xf32>
    %87 = vector.shape_cast %86 : vector<8x8x128xf32> to vector<64x128xf32>
    %88 = arith.truncf %87 : vector<64x128xf32> to vector<64x128xbf16>
    %cst_27 = arith.constant dense<0.000000e+00> : vector<64x128xf32>
    %89 = tpu.matmul %88, %15, %cst_27 {dimension_numbers = #tpu.dot_dimension_numbers<[1], [0], [0], [1], [0, 0, 1, 1], [], []>} : vector<64x128xbf16>, vector<128x128xbf16>, vector<64x128xf32> -> vector<64x128xf32>
    %90 = vector.shape_cast %89 : vector<64x128xf32> to vector<8x8x128xf32>
    %cst_28 = arith.constant dense<0xFF800000> : vector<8x128xf32>
    %91 = vector.multi_reduction <maximumf>, %90, %cst_28 [0] : vector<8x8x128xf32> to vector<8x128xf32>
    %92 = vector.shape_cast %91 : vector<8x128xf32> to vector<1x8x128xf32>
    %93 = vector.broadcast %92 : vector<1x8x128xf32> to vector<8x8x128xf32>
    %94 = arith.subf %90, %93 : vector<8x8x128xf32>
    %95 = math.exp %94 : vector<8x8x128xf32>
    %cst_29 = arith.constant dense<0.000000e+00> : vector<8x128xf32>
    %96 = vector.multi_reduction <add>, %95, %cst_29 [0] : vector<8x8x128xf32> to vector<8x128xf32>
    %97 = arith.mulf %95, %14 : vector<8x8x128xf32>
    %cst_30 = arith.constant dense<0.000000e+00> : vector<8x128xf32>
    %98 = vector.multi_reduction <add>, %97, %cst_30 [0] : vector<8x8x128xf32> to vector<8x128xf32>
    %99 = tpu.reciprocal %96 {approx = true} : vector<8x128xf32> -> vector<8x128xf32>
    %100 = arith.mulf %98, %99 : vector<8x128xf32>
    %c3 = arith.constant 3 : index
    %c0_31 = arith.constant 0 : index
    %c0_32 = arith.constant 0 : index
    %101 = vector.load %arg16[%c3, %c0_31, %c0_32] : memref<8x8x128xf32, #tpu.memory_space<vmem>>, vector<1x8x128xf32>
    %102 = vector.shape_cast %101 : vector<1x8x128xf32> to vector<8x128xf32>
    %103 = vector.shape_cast %100 : vector<8x128xf32> to vector<1x8x128xf32>
    tpu.vector_store %arg16[%c3, %c0_31, %c0_32], %103 {strides = array<i32>} : memref<8x8x128xf32, #tpu.memory_space<vmem>>, vector<1x8x128xf32>,
    %104 = vector.extract_strided_slice %10 {offsets = [4, 0, 0], sizes = [1, 8, 128], strides = [1, 1, 1]} : vector<8x8x128xf32> to vector<1x8x128xf32>
    %105 = vector.shape_cast %104 : vector<1x8x128xf32> to vector<8x128xf32>
    %106 = vector.shape_cast %105 : vector<8x128xf32> to vector<1x8x128xf32>
    %107 = vector.broadcast %106 : vector<1x8x128xf32> to vector<8x8x128xf32>
    %108 = arith.mulf %107, %12 : vector<8x8x128xf32>
    %109 = vector.shape_cast %108 : vector<8x8x128xf32> to vector<64x128xf32>
    %110 = arith.truncf %109 : vector<64x128xf32> to vector<64x128xbf16>
    %cst_33 = arith.constant dense<0.000000e+00> : vector<64x128xf32>
    %111 = tpu.matmul %110, %15, %cst_33 {dimension_numbers = #tpu.dot_dimension_numbers<[1], [0], [0], [1], [0, 0, 1, 1], [], []>} : vector<64x128xbf16>, vector<128x128xbf16>, vector<64x128xf32> -> vector<64x128xf32>
    %112 = vector.shape_cast %111 : vector<64x128xf32> to vector<8x8x128xf32>
    %cst_34 = arith.constant dense<0xFF800000> : vector<8x128xf32>
    %113 = vector.multi_reduction <maximumf>, %112, %cst_34 [0] : vector<8x8x128xf32> to vector<8x128xf32>
    %114 = vector.shape_cast %113 : vector<8x128xf32> to vector<1x8x128xf32>
    %115 = vector.broadcast %114 : vector<1x8x128xf32> to vector<8x8x128xf32>
    %116 = arith.subf %112, %115 : vector<8x8x128xf32>
    %117 = math.exp %116 : vector<8x8x128xf32>
    %cst_35 = arith.constant dense<0.000000e+00> : vector<8x128xf32>
    %118 = vector.multi_reduction <add>, %117, %cst_35 [0] : vector<8x8x128xf32> to vector<8x128xf32>
    %119 = arith.mulf %117, %14 : vector<8x8x128xf32>
    %cst_36 = arith.constant dense<0.000000e+00> : vector<8x128xf32>
    %120 = vector.multi_reduction <add>, %119, %cst_36 [0] : vector<8x8x128xf32> to vector<8x128xf32>
    %121 = tpu.reciprocal %118 {approx = true} : vector<8x128xf32> -> vector<8x128xf32>
    %122 = arith.mulf %120, %121 : vector<8x128xf32>
    %c4 = arith.constant 4 : index
    %c0_37 = arith.constant 0 : index
    %c0_38 = arith.constant 0 : index
    %123 = vector.load %arg16[%c4, %c0_37, %c0_38] : memref<8x8x128xf32, #tpu.memory_space<vmem>>, vector<1x8x128xf32>
    %124 = vector.shape_cast %123 : vector<1x8x128xf32> to vector<8x128xf32>
    %125 = vector.shape_cast %122 : vector<8x128xf32> to vector<1x8x128xf32>
    tpu.vector_store %arg16[%c4, %c0_37, %c0_38], %125 {strides = array<i32>} : memref<8x8x128xf32, #tpu.memory_space<vmem>>, vector<1x8x128xf32>,
    %126 = vector.extract_strided_slice %10 {offsets = [5, 0, 0], sizes = [1, 8, 128], strides = [1, 1, 1]} : vector<8x8x128xf32> to vector<1x8x128xf32>
    %127 = vector.shape_cast %126 : vector<1x8x128xf32> to vector<8x128xf32>
    %128 = vector.shape_cast %127 : vector<8x128xf32> to vector<1x8x128xf32>
    %129 = vector.broadcast %128 : vector<1x8x128xf32> to vector<8x8x128xf32>
    %130 = arith.mulf %129, %12 : vector<8x8x128xf32>
    %131 = vector.shape_cast %130 : vector<8x8x128xf32> to vector<64x128xf32>
    %132 = arith.truncf %131 : vector<64x128xf32> to vector<64x128xbf16>
    %cst_39 = arith.constant dense<0.000000e+00> : vector<64x128xf32>
    %133 = tpu.matmul %132, %15, %cst_39 {dimension_numbers = #tpu.dot_dimension_numbers<[1], [0], [0], [1], [0, 0, 1, 1], [], []>} : vector<64x128xbf16>, vector<128x128xbf16>, vector<64x128xf32> -> vector<64x128xf32>
    %134 = vector.shape_cast %133 : vector<64x128xf32> to vector<8x8x128xf32>
    %cst_40 = arith.constant dense<0xFF800000> : vector<8x128xf32>
    %135 = vector.multi_reduction <maximumf>, %134, %cst_40 [0] : vector<8x8x128xf32> to vector<8x128xf32>
    %136 = vector.shape_cast %135 : vector<8x128xf32> to vector<1x8x128xf32>
    %137 = vector.broadcast %136 : vector<1x8x128xf32> to vector<8x8x128xf32>
    %138 = arith.subf %134, %137 : vector<8x8x128xf32>
    %139 = math.exp %138 : vector<8x8x128xf32>
    %cst_41 = arith.constant dense<0.000000e+00> : vector<8x128xf32>
    %140 = vector.multi_reduction <add>, %139, %cst_41 [0] : vector<8x8x128xf32> to vector<8x128xf32>
    %141 = arith.mulf %139, %14 : vector<8x8x128xf32>
    %cst_42 = arith.constant dense<0.000000e+00> : vector<8x128xf32>
    %142 = vector.multi_reduction <add>, %141, %cst_42 [0] : vector<8x8x128xf32> to vector<8x128xf32>
    %143 = tpu.reciprocal %140 {approx = true} : vector<8x128xf32> -> vector<8x128xf32>
    %144 = arith.mulf %142, %143 : vector<8x128xf32>
    %c5 = arith.constant 5 : index
    %c0_43 = arith.constant 0 : index
    %c0_44 = arith.constant 0 : index
    %145 = vector.load %arg16[%c5, %c0_43, %c0_44] : memref<8x8x128xf32, #tpu.memory_space<vmem>>, vector<1x8x128xf32>
    %146 = vector.shape_cast %145 : vector<1x8x128xf32> to vector<8x128xf32>
    %147 = vector.shape_cast %144 : vector<8x128xf32> to vector<1x8x128xf32>
    tpu.vector_store %arg16[%c5, %c0_43, %c0_44], %147 {strides = array<i32>} : memref<8x8x128xf32, #tpu.memory_space<vmem>>, vector<1x8x128xf32>,
    %148 = vector.extract_strided_slice %10 {offsets = [6, 0, 0], sizes = [1, 8, 128], strides = [1, 1, 1]} : vector<8x8x128xf32> to vector<1x8x128xf32>
    %149 = vector.shape_cast %148 : vector<1x8x128xf32> to vector<8x128xf32>
    %150 = vector.shape_cast %149 : vector<8x128xf32> to vector<1x8x128xf32>
    %151 = vector.broadcast %150 : vector<1x8x128xf32> to vector<8x8x128xf32>
    %152 = arith.mulf %151, %12 : vector<8x8x128xf32>
    %153 = vector.shape_cast %152 : vector<8x8x128xf32> to vector<64x128xf32>
    %154 = arith.truncf %153 : vector<64x128xf32> to vector<64x128xbf16>
    %cst_45 = arith.constant dense<0.000000e+00> : vector<64x128xf32>
    %155 = tpu.matmul %154, %15, %cst_45 {dimension_numbers = #tpu.dot_dimension_numbers<[1], [0], [0], [1], [0, 0, 1, 1], [], []>} : vector<64x128xbf16>, vector<128x128xbf16>, vector<64x128xf32> -> vector<64x128xf32>
    %156 = vector.shape_cast %155 : vector<64x128xf32> to vector<8x8x128xf32>
    %cst_46 = arith.constant dense<0xFF800000> : vector<8x128xf32>
    %157 = vector.multi_reduction <maximumf>, %156, %cst_46 [0] : vector<8x8x128xf32> to vector<8x128xf32>
    %158 = vector.shape_cast %157 : vector<8x128xf32> to vector<1x8x128xf32>
    %159 = vector.broadcast %158 : vector<1x8x128xf32> to vector<8x8x128xf32>
    %160 = arith.subf %156, %159 : vector<8x8x128xf32>
    %161 = math.exp %160 : vector<8x8x128xf32>
    %cst_47 = arith.constant dense<0.000000e+00> : vector<8x128xf32>
    %162 = vector.multi_reduction <add>, %161, %cst_47 [0] : vector<8x8x128xf32> to vector<8x128xf32>
    %163 = arith.mulf %161, %14 : vector<8x8x128xf32>
    %cst_48 = arith.constant dense<0.000000e+00> : vector<8x128xf32>
    %164 = vector.multi_reduction <add>, %163, %cst_48 [0] : vector<8x8x128xf32> to vector<8x128xf32>
    %165 = tpu.reciprocal %162 {approx = true} : vector<8x128xf32> -> vector<8x128xf32>
    %166 = arith.mulf %164, %165 : vector<8x128xf32>
    %c6 = arith.constant 6 : index
    %c0_49 = arith.constant 0 : index
    %c0_50 = arith.constant 0 : index
    %167 = vector.load %arg16[%c6, %c0_49, %c0_50] : memref<8x8x128xf32, #tpu.memory_space<vmem>>, vector<1x8x128xf32>
    %168 = vector.shape_cast %167 : vector<1x8x128xf32> to vector<8x128xf32>
    %169 = vector.shape_cast %166 : vector<8x128xf32> to vector<1x8x128xf32>
    tpu.vector_store %arg16[%c6, %c0_49, %c0_50], %169 {strides = array<i32>} : memref<8x8x128xf32, #tpu.memory_space<vmem>>, vector<1x8x128xf32>,
    %170 = vector.extract_strided_slice %10 {offsets = [7, 0, 0], sizes = [1, 8, 128], strides = [1, 1, 1]} : vector<8x8x128xf32> to vector<1x8x128xf32>
    %171 = vector.shape_cast %170 : vector<1x8x128xf32> to vector<8x128xf32>
    %172 = vector.shape_cast %171 : vector<8x128xf32> to vector<1x8x128xf32>
    %173 = vector.broadcast %172 : vector<1x8x128xf32> to vector<8x8x128xf32>
    %174 = arith.mulf %173, %12 : vector<8x8x128xf32>
    %175 = vector.shape_cast %174 : vector<8x8x128xf32> to vector<64x128xf32>
    %176 = arith.truncf %175 : vector<64x128xf32> to vector<64x128xbf16>
    %cst_51 = arith.constant dense<0.000000e+00> : vector<64x128xf32>
    %177 = tpu.matmul %176, %15, %cst_51 {dimension_numbers = #tpu.dot_dimension_numbers<[1], [0], [0], [1], [0, 0, 1, 1], [], []>} : vector<64x128xbf16>, vector<128x128xbf16>, vector<64x128xf32> -> vector<64x128xf32>
    %178 = vector.shape_cast %177 : vector<64x128xf32> to vector<8x8x128xf32>
    %cst_52 = arith.constant dense<0xFF800000> : vector<8x128xf32>
    %179 = vector.multi_reduction <maximumf>, %178, %cst_52 [0] : vector<8x8x128xf32> to vector<8x128xf32>
    %180 = vector.shape_cast %179 : vector<8x128xf32> to vector<1x8x128xf32>
    %181 = vector.broadcast %180 : vector<1x8x128xf32> to vector<8x8x128xf32>
    %182 = arith.subf %178, %181 : vector<8x8x128xf32>
    %183 = math.exp %182 : vector<8x8x128xf32>
    %cst_53 = arith.constant dense<0.000000e+00> : vector<8x128xf32>
    %184 = vector.multi_reduction <add>, %183, %cst_53 [0] : vector<8x8x128xf32> to vector<8x128xf32>
    %185 = arith.mulf %183, %14 : vector<8x8x128xf32>
    %cst_54 = arith.constant dense<0.000000e+00> : vector<8x128xf32>
    %186 = vector.multi_reduction <add>, %185, %cst_54 [0] : vector<8x8x128xf32> to vector<8x128xf32>
    %187 = tpu.reciprocal %184 {approx = true} : vector<8x128xf32> -> vector<8x128xf32>
    %188 = arith.mulf %186, %187 : vector<8x128xf32>
    %c7 = arith.constant 7 : index
    %c0_55 = arith.constant 0 : index
    %c0_56 = arith.constant 0 : index
    %189 = vector.load %arg16[%c7, %c0_55, %c0_56] : memref<8x8x128xf32, #tpu.memory_space<vmem>>, vector<1x8x128xf32>
    %190 = vector.shape_cast %189 : vector<1x8x128xf32> to vector<8x128xf32>
    %191 = vector.shape_cast %188 : vector<8x128xf32> to vector<1x8x128xf32>
    tpu.vector_store %arg16[%c7, %c0_55, %c0_56], %191 {strides = array<i32>} : memref<8x8x128xf32, #tpu.memory_space<vmem>>, vector<1x8x128xf32>,
    %c0_57 = arith.constant 0 : index
    %c0_58 = arith.constant 0 : index
    %c0_59 = arith.constant 0 : index
    %192 = vector.load %arg16[%c0_57, %c0_58, %c0_59] : memref<8x8x128xf32, #tpu.memory_space<vmem>>, vector<8x8x128xf32>
    %193 = vector.shape_cast %192 : vector<8x8x128xf32> to vector<64x128xf32>
    %194 = arith.truncf %193 : vector<64x128xf32> to vector<64x128xbf16>
    %c0_60 = arith.constant 0 : index
    %c0_61 = arith.constant 0 : index
    %195 = vector.load %arg5[%c0_60, %c0_61] : memref<128x128xbf16, #tpu.memory_space<vmem>>, vector<128x128xbf16>
    %cst_62 = arith.constant dense<0.000000e+00> : vector<64x128xf32>
    %196 = tpu.matmul %194, %195, %cst_62 {dimension_numbers = #tpu.dot_dimension_numbers<[1], [0], [0], [1], [0, 0, 1, 1], [], []>} : vector<64x128xbf16>, vector<128x128xbf16>, vector<64x128xf32> -> vector<64x128xf32>
    %c0_63 = arith.constant 0 : index
    %c0_64 = arith.constant 0 : index
    %197 = vector.load %arg6[%c0_63, %c0_64] : memref<1x128xf32, #tpu.memory_space<vmem>>, vector<1x128xf32>
    %198 = vector.broadcast %197 : vector<1x128xf32> to vector<64x128xf32>
    %199 = arith.addf %196, %198 : vector<64x128xf32>
    %200 = arith.addf %199, %8 : vector<64x128xf32>
    %cst_65 = arith.constant dense<0.000000e+00> : vector<64xf32>
    %201 = vector.multi_reduction <add>, %200, %cst_65 [1] : vector<64x128xf32> to vector<64xf32>
    %202 = vector.shape_cast %201 : vector<64xf32> to vector<64x1xf32>
    %cst_66 = arith.constant 1.280000e+02 : f32
    %203 = vector.broadcast %cst_66 : f32 to vector<64x1xf32>
    %204 = arith.divf %202, %203 : vector<64x1xf32>
    %205 = vector.broadcast %204 : vector<64x1xf32> to vector<64x128xf32>
    %206 = arith.subf %200, %205 : vector<64x128xf32>
    %207 = arith.mulf %206, %206 : vector<64x128xf32>
    %cst_67 = arith.constant dense<0.000000e+00> : vector<64xf32>
    %208 = vector.multi_reduction <add>, %207, %cst_67 [1] : vector<64x128xf32> to vector<64xf32>
    %209 = vector.shape_cast %208 : vector<64xf32> to vector<64x1xf32>
    %cst_68 = arith.constant 1.280000e+02 : f32
    %210 = vector.broadcast %cst_68 : f32 to vector<64x1xf32>
    %211 = arith.divf %209, %210 : vector<64x1xf32>
    %212 = vector.broadcast %204 : vector<64x1xf32> to vector<64x128xf32>
    %213 = arith.subf %200, %212 : vector<64x128xf32>
    %cst_69 = arith.constant 9.99999974E-6 : f32
    %214 = vector.broadcast %cst_69 : f32 to vector<64x1xf32>
    %215 = arith.addf %211, %214 : vector<64x1xf32>
    %216 = math.rsqrt %215 : vector<64x1xf32>
    %217 = vector.broadcast %216 : vector<64x1xf32> to vector<64x128xf32>
    %218 = arith.mulf %213, %217 : vector<64x128xf32>
    %c0_70 = arith.constant 0 : index
    %c0_71 = arith.constant 0 : index
    %219 = vector.load %arg7[%c0_70, %c0_71] : memref<1x128xf32, #tpu.memory_space<vmem>>, vector<1x128xf32>
    %220 = vector.broadcast %219 : vector<1x128xf32> to vector<64x128xf32>
    %221 = arith.mulf %218, %220 : vector<64x128xf32>
    %c0_72 = arith.constant 0 : index
    %c0_73 = arith.constant 0 : index
    %222 = vector.load %arg8[%c0_72, %c0_73] : memref<1x128xf32, #tpu.memory_space<vmem>>, vector<1x128xf32>
    %223 = vector.broadcast %222 : vector<1x128xf32> to vector<64x128xf32>
    %224 = arith.addf %221, %223 : vector<64x128xf32>
    %225 = arith.truncf %224 : vector<64x128xf32> to vector<64x128xbf16>
    %226 = vector.shape_cast %225 : vector<64x128xbf16> to vector<8x8x128xbf16>
    %227 = vector.extract_strided_slice %226 {offsets = [0, 0, 0], sizes = [1, 8, 128], strides = [1, 1, 1]} : vector<8x8x128xbf16> to vector<1x8x128xbf16>
    %228 = vector.shape_cast %227 : vector<1x8x128xbf16> to vector<8x128xbf16>
    %c0_74 = arith.constant 0 : index
    %c0_75 = arith.constant 0 : index
    %229 = vector.load %arg9[%c0_74, %c0_75] : memref<1024x512xbf16, #tpu.memory_space<vmem>>, vector<128x512xbf16>
    %cst_76 = arith.constant dense<0.000000e+00> : vector<8x512xf32>
    %230 = tpu.matmul %228, %229, %cst_76 {dimension_numbers = #tpu.dot_dimension_numbers<[1], [0], [0], [1], [0, 0, 1, 1], [], []>} : vector<8x128xbf16>, vector<128x512xbf16>, vector<8x512xf32> -> vector<8x512xf32>
    %231 = vector.extract_strided_slice %226 {offsets = [1, 0, 0], sizes = [1, 8, 128], strides = [1, 1, 1]} : vector<8x8x128xbf16> to vector<1x8x128xbf16>
    %232 = vector.shape_cast %231 : vector<1x8x128xbf16> to vector<8x128xbf16>
    %c128 = arith.constant 128 : index
    %c0_77 = arith.constant 0 : index
    %233 = vector.load %arg9[%c128, %c0_77] : memref<1024x512xbf16, #tpu.memory_space<vmem>>, vector<128x512xbf16>
    %cst_78 = arith.constant dense<0.000000e+00> : vector<8x512xf32>
    %234 = tpu.matmul %232, %233, %cst_78 {dimension_numbers = #tpu.dot_dimension_numbers<[1], [0], [0], [1], [0, 0, 1, 1], [], []>} : vector<8x128xbf16>, vector<128x512xbf16>, vector<8x512xf32> -> vector<8x512xf32>
    %235 = arith.addf %230, %234 : vector<8x512xf32>
    %236 = vector.extract_strided_slice %226 {offsets = [2, 0, 0], sizes = [1, 8, 128], strides = [1, 1, 1]} : vector<8x8x128xbf16> to vector<1x8x128xbf16>
    %237 = vector.shape_cast %236 : vector<1x8x128xbf16> to vector<8x128xbf16>
    %c256 = arith.constant 256 : index
    %c0_79 = arith.constant 0 : index
    %238 = vector.load %arg9[%c256, %c0_79] : memref<1024x512xbf16, #tpu.memory_space<vmem>>, vector<128x512xbf16>
    %cst_80 = arith.constant dense<0.000000e+00> : vector<8x512xf32>
    %239 = tpu.matmul %237, %238, %cst_80 {dimension_numbers = #tpu.dot_dimension_numbers<[1], [0], [0], [1], [0, 0, 1, 1], [], []>} : vector<8x128xbf16>, vector<128x512xbf16>, vector<8x512xf32> -> vector<8x512xf32>
    %240 = arith.addf %235, %239 : vector<8x512xf32>
    %241 = vector.extract_strided_slice %226 {offsets = [3, 0, 0], sizes = [1, 8, 128], strides = [1, 1, 1]} : vector<8x8x128xbf16> to vector<1x8x128xbf16>
    %242 = vector.shape_cast %241 : vector<1x8x128xbf16> to vector<8x128xbf16>
    %c384 = arith.constant 384 : index
    %c0_81 = arith.constant 0 : index
    %243 = vector.load %arg9[%c384, %c0_81] : memref<1024x512xbf16, #tpu.memory_space<vmem>>, vector<128x512xbf16>
    %cst_82 = arith.constant dense<0.000000e+00> : vector<8x512xf32>
    %244 = tpu.matmul %242, %243, %cst_82 {dimension_numbers = #tpu.dot_dimension_numbers<[1], [0], [0], [1], [0, 0, 1, 1], [], []>} : vector<8x128xbf16>, vector<128x512xbf16>, vector<8x512xf32> -> vector<8x512xf32>
    %245 = arith.addf %240, %244 : vector<8x512xf32>
    %246 = vector.extract_strided_slice %226 {offsets = [4, 0, 0], sizes = [1, 8, 128], strides = [1, 1, 1]} : vector<8x8x128xbf16> to vector<1x8x128xbf16>
    %247 = vector.shape_cast %246 : vector<1x8x128xbf16> to vector<8x128xbf16>
    %c512 = arith.constant 512 : index
    %c0_83 = arith.constant 0 : index
    %248 = vector.load %arg9[%c512, %c0_83] : memref<1024x512xbf16, #tpu.memory_space<vmem>>, vector<128x512xbf16>
    %cst_84 = arith.constant dense<0.000000e+00> : vector<8x512xf32>
    %249 = tpu.matmul %247, %248, %cst_84 {dimension_numbers = #tpu.dot_dimension_numbers<[1], [0], [0], [1], [0, 0, 1, 1], [], []>} : vector<8x128xbf16>, vector<128x512xbf16>, vector<8x512xf32> -> vector<8x512xf32>
    %250 = arith.addf %245, %249 : vector<8x512xf32>
    %251 = vector.extract_strided_slice %226 {offsets = [5, 0, 0], sizes = [1, 8, 128], strides = [1, 1, 1]} : vector<8x8x128xbf16> to vector<1x8x128xbf16>
    %252 = vector.shape_cast %251 : vector<1x8x128xbf16> to vector<8x128xbf16>
    %c640 = arith.constant 640 : index
    %c0_85 = arith.constant 0 : index
    %253 = vector.load %arg9[%c640, %c0_85] : memref<1024x512xbf16, #tpu.memory_space<vmem>>, vector<128x512xbf16>
    %cst_86 = arith.constant dense<0.000000e+00> : vector<8x512xf32>
    %254 = tpu.matmul %252, %253, %cst_86 {dimension_numbers = #tpu.dot_dimension_numbers<[1], [0], [0], [1], [0, 0, 1, 1], [], []>} : vector<8x128xbf16>, vector<128x512xbf16>, vector<8x512xf32> -> vector<8x512xf32>
    %255 = arith.addf %250, %254 : vector<8x512xf32>
    %256 = vector.extract_strided_slice %226 {offsets = [6, 0, 0], sizes = [1, 8, 128], strides = [1, 1, 1]} : vector<8x8x128xbf16> to vector<1x8x128xbf16>
    %257 = vector.shape_cast %256 : vector<1x8x128xbf16> to vector<8x128xbf16>
    %c768 = arith.constant 768 : index
    %c0_87 = arith.constant 0 : index
    %258 = vector.load %arg9[%c768, %c0_87] : memref<1024x512xbf16, #tpu.memory_space<vmem>>, vector<128x512xbf16>
    %cst_88 = arith.constant dense<0.000000e+00> : vector<8x512xf32>
    %259 = tpu.matmul %257, %258, %cst_88 {dimension_numbers = #tpu.dot_dimension_numbers<[1], [0], [0], [1], [0, 0, 1, 1], [], []>} : vector<8x128xbf16>, vector<128x512xbf16>, vector<8x512xf32> -> vector<8x512xf32>
    %260 = arith.addf %255, %259 : vector<8x512xf32>
    %261 = vector.extract_strided_slice %226 {offsets = [7, 0, 0], sizes = [1, 8, 128], strides = [1, 1, 1]} : vector<8x8x128xbf16> to vector<1x8x128xbf16>
    %262 = vector.shape_cast %261 : vector<1x8x128xbf16> to vector<8x128xbf16>
    %c896 = arith.constant 896 : index
    %c0_89 = arith.constant 0 : index
    %263 = vector.load %arg9[%c896, %c0_89] : memref<1024x512xbf16, #tpu.memory_space<vmem>>, vector<128x512xbf16>
    %cst_90 = arith.constant dense<0.000000e+00> : vector<8x512xf32>
    %264 = tpu.matmul %262, %263, %cst_90 {dimension_numbers = #tpu.dot_dimension_numbers<[1], [0], [0], [1], [0, 0, 1, 1], [], []>} : vector<8x128xbf16>, vector<128x512xbf16>, vector<8x512xf32> -> vector<8x512xf32>
    %265 = arith.addf %260, %264 : vector<8x512xf32>
    %c0_91 = arith.constant 0 : index
    %c0_92 = arith.constant 0 : index
    %266 = vector.load %arg10[%c0_91, %c0_92] : memref<1x512xf32, #tpu.memory_space<vmem>>, vector<1x512xf32>
    %267 = vector.broadcast %266 : vector<1x512xf32> to vector<8x512xf32>
    %268 = arith.addf %265, %267 : vector<8x512xf32>
    %cst_93 = arith.constant 0.000000e+00 : f32
    %269 = vector.broadcast %cst_93 : f32 to vector<8x512xf32>
    %270 = arith.maximumf %268, %269 : vector<8x512xf32>
    %271 = arith.truncf %270 : vector<8x512xf32> to vector<8x512xbf16>
    %c0_94 = arith.constant 0 : index
    %c0_95 = arith.constant 0 : index
    %272 = vector.load %arg11[%c0_94, %c0_95] : memref<512x512xbf16, #tpu.memory_space<vmem>>, vector<512x512xbf16>
    %cst_96 = arith.constant dense<0.000000e+00> : vector<8x512xf32>
    %273 = tpu.matmul %271, %272, %cst_96 {dimension_numbers = #tpu.dot_dimension_numbers<[1], [0], [0], [1], [0, 0, 1, 1], [], []>} : vector<8x512xbf16>, vector<512x512xbf16>, vector<8x512xf32> -> vector<8x512xf32>
    %c0_97 = arith.constant 0 : index
    %c0_98 = arith.constant 0 : index
    %274 = vector.load %arg12[%c0_97, %c0_98] : memref<1x512xf32, #tpu.memory_space<vmem>>, vector<1x512xf32>
    %275 = vector.broadcast %274 : vector<1x512xf32> to vector<8x512xf32>
    %276 = arith.addf %273, %275 : vector<8x512xf32>
    %cst_99 = arith.constant 0.000000e+00 : f32
    %277 = vector.broadcast %cst_99 : f32 to vector<8x512xf32>
    %278 = arith.maximumf %276, %277 : vector<8x512xf32>
    %279 = arith.truncf %278 : vector<8x512xf32> to vector<8x512xbf16>
    %c0_100 = arith.constant 0 : index
    %c0_101 = arith.constant 0 : index
    %280 = vector.load %arg13[%c0_100, %c0_101] : memref<512x128xbf16, #tpu.memory_space<vmem>>, vector<512x128xbf16>
    %cst_102 = arith.constant dense<0.000000e+00> : vector<8x128xf32>
    %281 = tpu.matmul %279, %280, %cst_102 {dimension_numbers = #tpu.dot_dimension_numbers<[1], [0], [0], [1], [0, 0, 1, 1], [], []>} : vector<8x512xbf16>, vector<512x128xbf16>, vector<8x128xf32> -> vector<8x128xf32>
    %c0_103 = arith.constant 0 : index
    %c0_104 = arith.constant 0 : index
    %282 = vector.load %arg14[%c0_103, %c0_104] : memref<1x128xf32, #tpu.memory_space<vmem>>, vector<1x128xf32>
    %283 = vector.broadcast %282 : vector<1x128xf32> to vector<8x128xf32>
    %284 = arith.addf %281, %283 : vector<8x128xf32>
    %c0_105 = arith.constant 0 : index
    %c0_106 = arith.constant 0 : index
    %285 = vector.load %arg15[%c0_105, %c0_106] : memref<8x128xf32, #tpu.memory_space<vmem>>, vector<8x128xf32>
    tpu.vector_store %arg15[%c0_105, %c0_106], %284 {strides = array<i32>} : memref<8x128xf32, #tpu.memory_space<vmem>>, vector<8x128xf32>,
    return
  }
  func.func @transform_0(%arg0: i32) -> (i32, i32, i32) {
    %c0_i32 = arith.constant 0 : i32
    %c0_i32_0 = arith.constant 0 : i32
    %c0_i32_1 = arith.constant 0 : i32
    return %c0_i32, %arg0, %c0_i32_0 : i32, i32, i32
  }
  func.func @transform_1(%arg0: i32) -> (i32, i32) {
    %c0_i32 = arith.constant 0 : i32
    %c0_i32_0 = arith.constant 0 : i32
    %c0_i32_1 = arith.constant 0 : i32
    return %c0_i32, %c0_i32_0 : i32, i32
  }
  func.func @transform_2(%arg0: i32) -> (i32, i32) {
    %c0_i32 = arith.constant 0 : i32
    %c0_i32_0 = arith.constant 0 : i32
    %c0_i32_1 = arith.constant 0 : i32
    return %c0_i32, %c0_i32_0 : i32, i32
  }
  func.func @transform_3(%arg0: i32) -> (i32, i32) {
    %c0_i32 = arith.constant 0 : i32
    %c0_i32_0 = arith.constant 0 : i32
    %c0_i32_1 = arith.constant 0 : i32
    return %c0_i32, %c0_i32_0 : i32, i32
  }
  func.func @transform_4(%arg0: i32) -> (i32, i32) {
    %c0_i32 = arith.constant 0 : i32
    %c0_i32_0 = arith.constant 0 : i32
    %c0_i32_1 = arith.constant 0 : i32
    return %c0_i32, %c0_i32_0 : i32, i32
  }
  func.func @transform_5(%arg0: i32) -> (i32, i32) {
    %c0_i32 = arith.constant 0 : i32
    %c0_i32_0 = arith.constant 0 : i32
    %c0_i32_1 = arith.constant 0 : i32
    return %c0_i32, %c0_i32_0 : i32, i32
  }
  func.func @transform_6(%arg0: i32) -> (i32, i32) {
    %c0_i32 = arith.constant 0 : i32
    %c0_i32_0 = arith.constant 0 : i32
    %c0_i32_1 = arith.constant 0 : i32
    return %c0_i32, %c0_i32_0 : i32, i32
  }
  func.func @transform_7(%arg0: i32) -> (i32, i32) {
    %c0_i32 = arith.constant 0 : i32
    %c0_i32_0 = arith.constant 0 : i32
    %c0_i32_1 = arith.constant 0 : i32
    return %c0_i32, %c0_i32_0 : i32, i32
  }
  func.func @transform_8(%arg0: i32) -> (i32, i32) {
    %c0_i32 = arith.constant 0 : i32
    %c0_i32_0 = arith.constant 0 : i32
    %c0_i32_1 = arith.constant 0 : i32
    return %c0_i32, %c0_i32_0 : i32, i32
  }
  func.func @transform_9(%arg0: i32) -> (i32, i32) {
    %c0_i32 = arith.constant 0 : i32
    %c0_i32_0 = arith.constant 0 : i32
    %c0_i32_1 = arith.constant 0 : i32
    return %c0_i32, %c0_i32_0 : i32, i32
  }
  func.func @transform_10(%arg0: i32) -> (i32, i32) {
    %c0_i32 = arith.constant 0 : i32
    %c0_i32_0 = arith.constant 0 : i32
    %c0_i32_1 = arith.constant 0 : i32
    return %c0_i32, %c0_i32_0 : i32, i32
  }
  func.func @transform_11(%arg0: i32) -> (i32, i32) {
    %c0_i32 = arith.constant 0 : i32
    %c0_i32_0 = arith.constant 0 : i32
    %c0_i32_1 = arith.constant 0 : i32
    return %c0_i32, %c0_i32_0 : i32, i32
  }
  func.func @transform_12(%arg0: i32) -> (i32, i32) {
    %c0_i32 = arith.constant 0 : i32
    %c0_i32_0 = arith.constant 0 : i32
    %c0_i32_1 = arith.constant 0 : i32
    return %c0_i32, %c0_i32_0 : i32, i32
  }
  func.func @transform_13(%arg0: i32) -> (i32, i32) {
    %c0_i32 = arith.constant 0 : i32
    %c0_i32_0 = arith.constant 0 : i32
    %c0_i32_1 = arith.constant 0 : i32
    return %c0_i32, %c0_i32_0 : i32, i32
  }
  func.func @transform_14(%arg0: i32) -> (i32, i32) {
    %c0_i32 = arith.constant 0 : i32
    %c0_i32_0 = arith.constant 0 : i32
    return %arg0, %c0_i32 : i32, i32
  }
}

</mosaic_0001>

<llo_original>
// kernel: tpu_custom_call.1
$region0: #{tpu_custom_call.1}
  #allocation0 [shape = 'u32[]', space=smem, size = 0x4, offset = 0x4, fixed_abs, tag = 'smem constant byte address 0x4 - core index']
  #allocation1 [shape = 'u32[144,128]{1,0:T(1,128)}', space=vmem, size = 0x12000, scoped, tag = 'internal scratch']
  #allocation2 [shape = 'f32[8,8,128]{2,1,0:T(8,128)}', space=vmem, size = 0x8000, scoped, tag = 'scratch operand']
  %s0 = inlined_call_operand.hbm [shape: f32[8,8,32], index: 0, kind: input, shape index: {}]
  %s1 = inlined_call_operand.hbm [shape: bf16[32,512], index: 1, kind: input, shape index: {}]
  %s2 = inlined_call_operand.vmem [shape: f32[1,512], index: 2, kind: input, shape index: {}]
  %s3 = inlined_call_operand.hbm [shape: bf16[128,128], index: 3, kind: input, shape index: {}]
  %s4 = inlined_call_operand.hbm [shape: bf16[128,128], index: 4, kind: input, shape index: {}]
  %s5 = inlined_call_operand.vmem [shape: f32[1,128], index: 5, kind: input, shape index: {}]
  %s6 = inlined_call_operand.vmem [shape: f32[1,128], index: 6, kind: input, shape index: {}]
  %s7 = inlined_call_operand.vmem [shape: f32[1,128], index: 7, kind: input, shape index: {}]
  %s8 = inlined_call_operand.hbm [shape: bf16[1024,512], index: 8, kind: input, shape index: {}]
  %s9 = inlined_call_operand.vmem [shape: f32[1,512], index: 9, kind: input, shape index: {}]
  %s10 = inlined_call_operand.hbm [shape: bf16[512,512], index: 10, kind: input, shape index: {}]
  %s11 = inlined_call_operand.vmem [shape: f32[1,512], index: 11, kind: input, shape index: {}]
  %s12 = inlined_call_operand.hbm [shape: bf16[512,128], index: 12, kind: input, shape index: {}]
  %s13 = inlined_call_operand.vmem [shape: f32[1,128], index: 13, kind: input, shape index: {}]
  %s14 = inlined_call_operand.hbm [shape: f32[8,128], index: 14, kind: output, shape index: {}]
  %s15 = sld [smem:[#allocation0]]
  $region94: #{tpu_custom_call.1} parent=0
    _
  %s17 = ssub.s32 1, %s15
  %s18 = scalar_select 0, %s17, %s15
  $region1: #{tpu_custom_call.1} parent=0
    #allocation3 [shape = 'u8[32768]{0}', space=vmem, size = 0x8000, scoped, tag = 'input window, operand 0, single buffered']
    #allocation4 [shape = 's32[1]{0}', space=sflag, size = 0x4, scoped, tag = 'scoped memory for tpu_custom_call.1']
    #allocation5 [shape = 's32[1]{0}', space=sflag, size = 0x4, scoped, tag = 'scoped memory for tpu_custom_call.1']
    #allocation6 [shape = 'u8[32768]{0}', space=vmem, size = 0x8000, scoped, tag = 'input window, operand 1, single buffered']
    #allocation7 [shape = 's32[1]{0}', space=sflag, size = 0x4, scoped, tag = 'scoped memory for tpu_custom_call.1']
    #allocation8 [shape = 'u8[32768]{0}', space=vmem, size = 0x8000, scoped, tag = 'input window, operand 3, single buffered']
    #allocation9 [shape = 'u8[32768]{0}', space=vmem, size = 0x8000, scoped, tag = 'input window, operand 4, single buffered']
    #allocation10 [shape = 's32[1]{0}', space=sflag, size = 0x4, scoped, tag = 'scoped memory for tpu_custom_call.1']
    #allocation11 [shape = 'u8[1048576]{0}', space=vmem, size = 0x100000, scoped, tag = 'input window, operand 8, single buffered']
    #allocation12 [shape = 'u8[524288]{0}', space=vmem, size = 0x80000, scoped, tag = 'input window, operand 10, single buffered']
    #allocation13 [shape = 's32[1]{0}', space=sflag, size = 0x4, scoped, tag = 'scoped memory for tpu_custom_call.1']
    #allocation14 [shape = 'u8[131072]{0}', space=vmem, size = 0x20000, scoped, tag = 'input window, operand 12, single buffered']
    #allocation15 [shape = 'u8[4096]{0}', space=vmem, size = 0x1000, scoped, tag = 'output window, operand 0, single buffered']
    %19 = vsyncpa [#allocation4], 0
    %20 = vsyncpa [#allocation7], 0
    %21 = vsyncpa [#allocation10], 0
    %22 = vsyncpa [#allocation13], 0
    %23 = vsyncpa [#allocation5], 0
    // Predicated region
    $region2: #{tpu_custom_call.1} parent=1 // pred_check
      _
    $region3: #{tpu_custom_call.1} parent=1 // pred_check_branch
      %25 = sbr.rel (0) target = $region5
    $region4: #{tpu_custom_call.1} parent=1 // pred_region
      %s27 = ssub.s32 1024, 1024
      %28 = vsyncadd [#allocation4], %s27
      %s29 = sshll.u32 [#allocation3], 4
      %s30 = int_to_ptr.vmem [resolvable:$true] %s29
      %35 = dma.hbm_to_vmem [thread:$0]  %s0, 1024, %s30, [#allocation4], 128, 128, 8
    $region5: #{tpu_custom_call.1} parent=1 // pred_fallthru
      _
    // Predicated region
    $region6: #{tpu_custom_call.1} parent=1 // pred_check
      _
    $region7: #{tpu_custom_call.1} parent=1 // pred_check_branch
      %37 = sbr.rel (0) target = $region9
    $region8: #{tpu_custom_call.1} parent=1 // pred_region
      %s39 = ssub.s32 1024, 1024
      %40 = vsyncadd [#allocation7], %s39
      %s41 = sshll.u32 [#allocation6], 4
      %s42 = int_to_ptr.vmem [resolvable:$true] %s41
      %47 = dma.hbm_to_vmem [thread:$0]  %s1, 1024, %s42, [#allocation7], 256, 256, 16
    $region9: #{tpu_custom_call.1} parent=1 // pred_fallthru
      _
    // Predicated region
    $region10: #{tpu_custom_call.1} parent=1 // pred_check
      _
    $region11: #{tpu_custom_call.1} parent=1 // pred_check_branch
      %49 = sbr.rel (0) target = $region13
    $region12: #{tpu_custom_call.1} parent=1 // pred_region
      _
    $region13: #{tpu_custom_call.1} parent=1 // pred_fallthru
      _
    // Predicated region
    $region14: #{tpu_custom_call.1} parent=1 // pred_check
      _
    $region15: #{tpu_custom_call.1} parent=1 // pred_check_branch
      %51 = sbr.rel (0) target = $region17
    $region16: #{tpu_custom_call.1} parent=1 // pred_region
      %s53 = ssub.s32 1024, 1024
      %54 = vsyncadd [#allocation7], %s53
      %s55 = sshll.u32 [#allocation8], 4
      %s56 = int_to_ptr.vmem [resolvable:$true] %s55
      %61 = dma.hbm_to_vmem [thread:$0]  %s3, 1024, %s56, [#allocation7], 64, 64, 4
    $region17: #{tpu_custom_call.1} parent=1 // pred_fallthru
      _
    // Predicated region
    $region18: #{tpu_custom_call.1} parent=1 // pred_check
      _
    $region19: #{tpu_custom_call.1} parent=1 // pred_check_branch
      %63 = sbr.rel (0) target = $region21
    $region20: #{tpu_custom_call.1} parent=1 // pred_region
      %s65 = ssub.s32 1024, 1024
      %66 = vsyncadd [#allocation10], %s65
      %s67 = sshll.u32 [#allocation9], 4
      %s68 = int_to_ptr.vmem [resolvable:$true] %s67
      %73 = dma.hbm_to_vmem [thread:$0]  %s4, 1024, %s68, [#allocation10], 64, 64, 4
    $region21: #{tpu_custom_call.1} parent=1 // pred_fallthru
      _
    // Predicated region
    $region22: #{tpu_custom_call.1} parent=1 // pred_check
      _
    $region23: #{tpu_custom_call.1} parent=1 // pred_check_branch
      %75 = sbr.rel (0) target = $region25
    $region24: #{tpu_custom_call.1} parent=1 // pred_region
      _
    $region25: #{tpu_custom_call.1} parent=1 // pred_fallthru
      _
    // Predicated region
    $region26: #{tpu_custom_call.1} parent=1 // pred_check
      _
    $region27: #{tpu_custom_call.1} parent=1 // pred_check_branch
      %77 = sbr.rel (0) target = $region29
    $region28: #{tpu_custom_call.1} parent=1 // pred_region
      _
    $region29: #{tpu_custom_call.1} parent=1 // pred_fallthru
      _
    // Predicated region
    $region30: #{tpu_custom_call.1} parent=1 // pred_check
      _
    $region31: #{tpu_custom_call.1} parent=1 // pred_check_branch
      %79 = sbr.rel (0) target = $region33
    $region32: #{tpu_custom_call.1} parent=1 // pred_region
      _
    $region33: #{tpu_custom_call.1} parent=1 // pred_fallthru
      _
    // Predicated region
    $region34: #{tpu_custom_call.1} parent=1 // pred_check
      _
    $region35: #{tpu_custom_call.1} parent=1 // pred_check_branch
      %81 = sbr.rel (0) target = $region37
    $region36: #{tpu_custom_call.1} parent=1 // pred_region
      %s83 = ssub.s32 32768, 32768
      %84 = vsyncadd [#allocation10], %s83
      %s85 = sshll.u32 [#allocation11], 4
      %s86 = int_to_ptr.vmem [resolvable:$true] %s85
      %91 = dma.hbm_to_vmem [thread:$0]  %s8, 32768, %s86, [#allocation10], 256, 256, 16
    $region37: #{tpu_custom_call.1} parent=1 // pred_fallthru
      _
    // Predicated region
    $region38: #{tpu_custom_call.1} parent=1 // pred_check
      _
    $region39: #{tpu_custom_call.1} parent=1 // pred_check_branch
      %93 = sbr.rel (0) target = $region41
    $region40: #{tpu_custom_call.1} parent=1 // pred_region
      _
    $region41: #{tpu_custom_call.1} parent=1 // pred_fallthru
      _
    // Predicated region
    $region42: #{tpu_custom_call.1} parent=1 // pred_check
      _
    $region43: #{tpu_custom_call.1} parent=1 // pred_check_branch
      %95 = sbr.rel (0) target = $region45
    $region44: #{tpu_custom_call.1} parent=1 // pred_region
      %s97 = ssub.s32 16384, 16384
      %98 = vsyncadd [#allocation13], %s97
      %s99 = sshll.u32 [#allocation12], 4
      %s100 = int_to_ptr.vmem [resolvable:$true] %s99
      %105 = dma.hbm_to_vmem [thread:$0]  %s10, 16384, %s100, [#allocation13], 256, 256, 16
    $region45: #{tpu_custom_call.1} parent=1 // pred_fallthru
      _
    // Predicated region
    $region46: #{tpu_custom_call.1} parent=1 // pred_check
      _
    $region47: #{tpu_custom_call.1} parent=1 // pred_check_branch
      %107 = sbr.rel (0) target = $region49
    $region48: #{tpu_custom_call.1} parent=1 // pred_region
      _
    $region49: #{tpu_custom_call.1} parent=1 // pred_fallthru
      _
    // Predicated region
    $region50: #{tpu_custom_call.1} parent=1 // pred_check
      _
    $region51: #{tpu_custom_call.1} parent=1 // pred_check_branch
      %109 = sbr.rel (0) target = $region53
    $region52: #{tpu_custom_call.1} parent=1 // pred_region
      %s111 = ssub.s32 4096, 4096
      %112 = vsyncadd [#allocation13], %s111
      %s113 = sshll.u32 [#allocation14], 4
      %s114 = int_to_ptr.vmem [resolvable:$true] %s113
      %119 = dma.hbm_to_vmem [thread:$0]  %s12, 4096, %s114, [#allocation13], 64, 64, 4
    $region53: #{tpu_custom_call.1} parent=1 // pred_fallthru
      _
    // Predicated region
    $region54: #{tpu_custom_call.1} parent=1 // pred_check
      _
    $region55: #{tpu_custom_call.1} parent=1 // pred_check_branch
      %121 = sbr.rel (0) target = $region57
    $region56: #{tpu_custom_call.1} parent=1 // pred_region
      _
    $region57: #{tpu_custom_call.1} parent=1 // pred_fallthru
      _
    // Predicated region
    $region58: #{tpu_custom_call.1} parent=1 // pred_check
      _
    $region59: #{tpu_custom_call.1} parent=1 // pred_check_branch
      %123 = sbr.rel (0) target = $region61
    $region60: #{tpu_custom_call.1} parent=1 // pred_region
      %124 = dma.done [#allocation4], 1024
    $region61: #{tpu_custom_call.1} parent=1 // pred_fallthru
      _
    // Predicated region
    $region62: #{tpu_custom_call.1} parent=1 // pred_check
      _
    $region63: #{tpu_custom_call.1} parent=1 // pred_check_branch
      %126 = sbr.rel (0) target = $region65
    $region64: #{tpu_custom_call.1} parent=1 // pred_region
      %127 = dma.done [#allocation7], 1024
    $region65: #{tpu_custom_call.1} parent=1 // pred_fallthru
      _
    // Predicated region
    $region66: #{tpu_custom_call.1} parent=1 // pred_check
      _
    $region67: #{tpu_custom_call.1} parent=1 // pred_check_branch
      %129 = sbr.rel (0) target = $region69
    $region68: #{tpu_custom_call.1} parent=1 // pred_region
      %130 = dma.done [#allocation7], 1024
    $region69: #{tpu_custom_call.1} parent=1 // pred_fallthru
      _
    // Predicated region
    $region70: #{tpu_custom_call.1} parent=1 // pred_check
      _
    $region71: #{tpu_custom_call.1} parent=1 // pred_check_branch
      %132 = sbr.rel (0) target = $region73
    $region72: #{tpu_custom_call.1} parent=1 // pred_region
      %133 = dma.done [#allocation10], 1024
    $region73: #{tpu_custom_call.1} parent=1 // pred_fallthru
      _
    // Predicated region
    $region74: #{tpu_custom_call.1} parent=1 // pred_check
      _
    $region75: #{tpu_custom_call.1} parent=1 // pred_check_branch
      %135 = sbr.rel (0) target = $region77
    $region76: #{tpu_custom_call.1} parent=1 // pred_region
      %136 = dma.done [#allocation10], 32768
    $region77: #{tpu_custom_call.1} parent=1 // pred_fallthru
      _
    // Predicated region
    $region78: #{tpu_custom_call.1} parent=1 // pred_check
      _
    $region79: #{tpu_custom_call.1} parent=1 // pred_check_branch
      %138 = sbr.rel (0) target = $region81
    $region80: #{tpu_custom_call.1} parent=1 // pred_region
      %139 = dma.done [#allocation13], 16384
    $region81: #{tpu_custom_call.1} parent=1 // pred_fallthru
      _
    // Predicated region
    $region82: #{tpu_custom_call.1} parent=1 // pred_check
      _
    $region83: #{tpu_custom_call.1} parent=1 // pred_check_branch
      %141 = sbr.rel (0) target = $region85
    $region84: #{tpu_custom_call.1} parent=1 // pred_region
      %142 = dma.done [#allocation13], 4096
    $region85: #{tpu_custom_call.1} parent=1 // pred_fallthru
      _
    %v144 = vld [vmem:[#allocation3] sm:$0xff]
    %v145 = vld [vmem:[#allocation3 + $0x8] sm:$0xff]
    %v146 = vld [vmem:[#allocation3 + $0x10] sm:$0xff]
    %v147 = vld [vmem:[#allocation3 + $0x18] sm:$0xff]
    %v148 = vld [vmem:[#allocation3 + $0x20] sm:$0xff]
    %v149 = vld [vmem:[#allocation3 + $0x28] sm:$0xff]
    %v150 = vld [vmem:[#allocation3 + $0x30] sm:$0xff]
    %v151 = vld [vmem:[#allocation3 + $0x38] sm:$0xff]
    %v152 = vpack.c.bf16 %v145, %v144
    %v153 = vpack.c.bf16 %v147, %v146
    %v154 = vpack.c.bf16 %v149, %v148
    %v155 = vpack.c.bf16 %v151, %v150
    %v156 = vld [vmem:[#allocation6] sm:$0xff]
    %v157 = vld [vmem:[#allocation6 + $0x8] sm:$0xff]
    %v158 = vld [vmem:[#allocation6 + $0x10] sm:$0xff]
    %v159 = vld [vmem:[#allocation6 + $0x18] sm:$0xff]
    %v160 = vld [vmem:[#allocation6 + $0x20] sm:$0xff]
    %v161 = vld [vmem:[#allocation6 + $0x28] sm:$0xff]
    %v162 = vld [vmem:[#allocation6 + $0x30] sm:$0xff]
    %v163 = vld [vmem:[#allocation6 + $0x38] sm:$0xff]
    %v164 = vld [vmem:[%s2] sm:$0xf]
    %v166 = vlaneseq
    %v167 = vshrl.u32 %v166, 7
    %v168 = vsub.s32 0, %v167
    %v169 = vrot.slane %v164, %v168
    %v170 = vlaneseq
    %v171 = vshrl.u32 %v170, 7
    %v172 = vsub.s32 1, %v171
    %v173 = vrot.slane %v164, %v172
    %v174 = vlaneseq
    %v175 = vshrl.u32 %v174, 7
    %v176 = vsub.s32 2, %v175
    %v177 = vrot.slane %v164, %v176
    %v178 = vlaneseq
    %v179 = vshrl.u32 %v178, 7
    %v180 = vsub.s32 3, %v179
    %v181 = vrot.slane %v164, %v180
    %v194 = vunpack.c.l.b16 %v156
    %v195 = vunpack.c.h.b16 %v156
    %v196 = vunpack.c.l.b16 %v157
    %v197 = vunpack.c.h.b16 %v157
    %v198 = vunpack.c.l.b16 %v158
    %v199 = vunpack.c.h.b16 %v158
    %v200 = vunpack.c.l.b16 %v159
    %v201 = vunpack.c.h.b16 %v159
    %v202 = vunpack.c.l.b16 %v160
    %v203 = vunpack.c.h.b16 %v160
    %v204 = vunpack.c.l.b16 %v161
    %v205 = vunpack.c.h.b16 %v161
    %v206 = vunpack.c.l.b16 %v162
    %v207 = vunpack.c.h.b16 %v162
    %v208 = vunpack.c.l.b16 %v163
    %v209 = vunpack.c.h.b16 %v163
    %v210 = vpack.c.b16 %v198, %v194
    %v211 = vpack.c.b16 %v199, %v195
    %v212 = vpack.c.b16 %v200, %v196
    %v213 = vpack.c.b16 %v201, %v197
    %v214 = vpack.c.b16 %v206, %v202
    %v215 = vpack.c.b16 %v207, %v203
    %v216 = vpack.c.b16 %v208, %v204
    %v217 = vpack.c.b16 %v209, %v205
    %vm226 = vcmask 261120
    %v228 = vsel %vm226, %v152, 0
    %v231 = vsel %vm226, %v153, 0
    %v234 = vsel %vm226, %v154, 0
    %v237 = vsel %vm226, %v155, 0
    %239 = vmatprep.subr.bf16.mxu0 %v211
    %240 = vmatpush1.bf16.msra.mxu0 %v210
    %241 = vmatprep.subr.bf16.mxu0 %v215
    %242 = vmatpush1.bf16.msra.mxu0 %v214
    %243 = vmatprep.subr.bf16.mxu0 0
    %244 = vmatpush1.bf16.msra.mxu0 0
    %245 = vmatprep.subr.bf16.mxu0 0
    %246 = vmatpush1.bf16.msra.mxu0 0
    %247 = vmatprep.subr.bf16.mxu0 0
    %248 = vmatpush1.bf16.msra.mxu0 0
    %249 = vmatprep.subr.bf16.mxu0 0
    %250 = vmatpush1.bf16.msra.mxu0 0
    %251 = vmatprep.subr.bf16.mxu0 0
    %252 = vmatpush1.bf16.msra.mxu0 0
    %253 = vmatprep.subr.bf16.mxu0 0
    %254 = vmatpush1.bf16.msra.mxu0 0
    %255 = vmatprep.subr.bf16.mxu0 0
    %256 = vmatpush1.bf16.msra.mxu0 0
    %257 = vmatprep.subr.bf16.mxu0 0
    %258 = vmatpush1.bf16.msra.mxu0 0
    %259 = vmatprep.subr.bf16.mxu0 0
    %260 = vmatpush1.bf16.msra.mxu0 0
    %261 = vmatprep.subr.bf16.mxu0 0
    %262 = vmatpush1.bf16.msra.mxu0 0
    %263 = vmatprep.subr.bf16.mxu0 0
    %264 = vmatpush1.bf16.msra.mxu0 0
    %265 = vmatprep.subr.bf16.mxu0 0
    %266 = vmatpush1.bf16.msra.mxu0 0
    %267 = vmatprep.subr.bf16.mxu0 0
    %268 = vmatpush1.bf16.msra.mxu0 0
    %269 = vmatprep.subr.bf16.mxu0 0
    %270 = vmatpush1.bf16.msra.mxu0 0
    %271 = vmatprep.mubr.bf16.mxu0 0
    %272 = vmatmul.mubr.bf16.gmra.mrb[0].mxu0 %v228
    %v273 = vpop.f32.mrb[0].mxu0
    %v274 = vadd.f32 %v169, %v273
    %v275 = vpop.f32.mrb[0].mxu0
    %v276 = vadd.f32 %v173, %v275
    %v277 = vpop.f32.mrb[0].mxu0
    %v278 = vadd.f32 %v169, %v277
    %v279 = vpop.f32.mrb[0].mxu0
    %v280 = vadd.f32 %v173, %v279
    %281 = vmatprep.mubr.bf16.mxu0 0
    %282 = vmatmul.mubr.bf16.gmra.mrb[0].mxu0 %v231
    %v283 = vpop.f32.mrb[0].mxu0
    %v284 = vadd.f32 %v169, %v283
    %v285 = vpop.f32.mrb[0].mxu0
    %v286 = vadd.f32 %v173, %v285
    %v287 = vpop.f32.mrb[0].mxu0
    %v288 = vadd.f32 %v169, %v287
    %v289 = vpop.f32.mrb[0].mxu0
    %v290 = vadd.f32 %v173, %v289
    %291 = vmatprep.mubr.bf16.mxu0 0
    %292 = vmatmul.mubr.bf16.gmra.mrb[0].mxu0 %v234
    %v293 = vpop.f32.mrb[0].mxu0
    %v294 = vadd.f32 %v169, %v293
    %v295 = vpop.f32.mrb[0].mxu0
    %v296 = vadd.f32 %v173, %v295
    %v297 = vpop.f32.mrb[0].mxu0
    %v298 = vadd.f32 %v169, %v297
    %v299 = vpop.f32.mrb[0].mxu0
    %v300 = vadd.f32 %v173, %v299
    %301 = vmatprep.mubr.bf16.mxu0 0
    %302 = vmatmul.mubr.bf16.gmra.mrb[0].mxu0 %v237
    %v303 = vpop.f32.mrb[0].mxu0
    %v304 = vadd.f32 %v169, %v303
    %v305 = vpop.f32.mrb[0].mxu0
    %v306 = vadd.f32 %v173, %v305
    %v307 = vpop.f32.mrb[0].mxu0
    %v308 = vadd.f32 %v169, %v307
    %v309 = vpop.f32.mrb[0].mxu0
    %v310 = vadd.f32 %v173, %v309
    %311 = vdwg.mxu0
    %312 = vmatprep.subr.bf16.mxu0 %v213
    %313 = vmatpush1.bf16.msra.mxu0 %v212
    %314 = vmatprep.subr.bf16.mxu0 %v217
    %315 = vmatpush1.bf16.msra.mxu0 %v216
    %316 = vmatprep.subr.bf16.mxu0 0
    %317 = vmatpush1.bf16.msra.mxu0 0
    %318 = vmatprep.subr.bf16.mxu0 0
    %319 = vmatpush1.bf16.msra.mxu0 0
    %320 = vmatprep.subr.bf16.mxu0 0
    %321 = vmatpush1.bf16.msra.mxu0 0
    %322 = vmatprep.subr.bf16.mxu0 0
    %323 = vmatpush1.bf16.msra.mxu0 0
    %324 = vmatprep.subr.bf16.mxu0 0
    %325 = vmatpush1.bf16.msra.mxu0 0
    %326 = vmatprep.subr.bf16.mxu0 0
    %327 = vmatpush1.bf16.msra.mxu0 0
    %328 = vmatprep.subr.bf16.mxu0 0
    %329 = vmatpush1.bf16.msra.mxu0 0
    %330 = vmatprep.subr.bf16.mxu0 0
    %331 = vmatpush1.bf16.msra.mxu0 0
    %332 = vmatprep.subr.bf16.mxu0 0
    %333 = vmatpush1.bf16.msra.mxu0 0
    %334 = vmatprep.subr.bf16.mxu0 0
    %335 = vmatpush1.bf16.msra.mxu0 0
    %336 = vmatprep.subr.bf16.mxu0 0
    %337 = vmatpush1.bf16.msra.mxu0 0
    %338 = vmatprep.subr.bf16.mxu0 0
    %339 = vmatpush1.bf16.msra.mxu0 0
    %340 = vmatprep.subr.bf16.mxu0 0
    %341 = vmatpush1.bf16.msra.mxu0 0
    %342 = vmatprep.subr.bf16.mxu0 0
    %343 = vmatpush1.bf16.msra.mxu0 0
    %344 = vmatprep.mubr.bf16.mxu0 0
    %345 = vmatmul.mubr.bf16.gmra.mrb[0].mxu0 %v228
    %v346 = vpop.f32.mrb[0].mxu0
    %v347 = vadd.f32 %v177, %v346
    %v348 = vpop.f32.mrb[0].mxu0
    %v349 = vadd.f32 %v181, %v348
    %v350 = vpop.f32.mrb[0].mxu0
    %v351 = vadd.f32 %v177, %v350
    %v352 = vpop.f32.mrb[0].mxu0
    %v353 = vadd.f32 %v181, %v352
    %354 = vmatprep.mubr.bf16.mxu0 0
    %355 = vmatmul.mubr.bf16.gmra.mrb[0].mxu0 %v231
    %v356 = vpop.f32.mrb[0].mxu0
    %v357 = vadd.f32 %v177, %v356
    %v358 = vpop.f32.mrb[0].mxu0
    %v359 = vadd.f32 %v181, %v358
    %v360 = vpop.f32.mrb[0].mxu0
    %v361 = vadd.f32 %v177, %v360
    %v362 = vpop.f32.mrb[0].mxu0
    %v363 = vadd.f32 %v181, %v362
    %364 = vmatprep.mubr.bf16.mxu0 0
    %365 = vmatmul.mubr.bf16.gmra.mrb[0].mxu0 %v234
    %v366 = vpop.f32.mrb[0].mxu0
    %v367 = vadd.f32 %v177, %v366
    %v368 = vpop.f32.mrb[0].mxu0
    %v369 = vadd.f32 %v181, %v368
    %v370 = vpop.f32.mrb[0].mxu0
    %v371 = vadd.f32 %v177, %v370
    %v372 = vpop.f32.mrb[0].mxu0
    %v373 = vadd.f32 %v181, %v372
    %374 = vmatprep.mubr.bf16.mxu0 0
    %375 = vmatmul.mubr.bf16.gmra.mrb[0].mxu0 %v237
    %v376 = vpop.f32.mrb[0].mxu0
    %v377 = vadd.f32 %v177, %v376
    %v378 = vpop.f32.mrb[0].mxu0
    %v379 = vadd.f32 %v181, %v378
    %v380 = vpop.f32.mrb[0].mxu0
    %v381 = vadd.f32 %v177, %v380
    %v382 = vpop.f32.mrb[0].mxu0
    %v383 = vadd.f32 %v181, %v382
    %384 = vdwg.mxu0
    %v385 = vld [vmem:[#allocation8] sm:$0xf]
    %v386 = vld [vmem:[#allocation8 + $0x4] sm:$0xf]
    %v387 = vld [vmem:[#allocation8 + $0x8] sm:$0xf]
    %v388 = vld [vmem:[#allocation8 + $0xc] sm:$0xf]
    %v389 = vld [vmem:[#allocation8 + $0x10] sm:$0xf]
    %v390 = vld [vmem:[#allocation8 + $0x14] sm:$0xf]
    %v391 = vld [vmem:[#allocation8 + $0x18] sm:$0xf]
    %v392 = vld [vmem:[#allocation8 + $0x1c] sm:$0xf]
    %v393 = vld [vmem:[#allocation8 + $0x20] sm:$0xf]
    %v394 = vld [vmem:[#allocation8 + $0x24] sm:$0xf]
    %v395 = vld [vmem:[#allocation8 + $0x28] sm:$0xf]
    %v396 = vld [vmem:[#allocation8 + $0x2c] sm:$0xf]
    %v397 = vld [vmem:[#allocation8 + $0x30] sm:$0xf]
    %v398 = vld [vmem:[#allocation8 + $0x34] sm:$0xf]
    %v399 = vld [vmem:[#allocation8 + $0x38] sm:$0xf]
    %v400 = vld [vmem:[#allocation8 + $0x3c] sm:$0xf]
    %v401 = vmul.f32 %v276, %v347
    %v402 = vmul.f32 %v276, %v351
    %v403 = vmul.f32 %v276, %v357
    %v404 = vmul.f32 %v276, %v361
    %v405 = vmul.f32 %v276, %v367
    %v406 = vmul.f32 %v276, %v371
    %v407 = vmul.f32 %v276, %v377
    %v408 = vmul.f32 %v276, %v381
    %v409 = vpack.c.bf16 %v402, %v401
    %v410 = vpack.c.bf16 %v404, %v403
    %v411 = vpack.c.bf16 %v406, %v405
    %v412 = vpack.c.bf16 %v408, %v407
    %v429 = vunpack.c.l.b16 %v385
    %v430 = vunpack.c.l.b16 %v386
    %v431 = vunpack.c.l.b16 %v387
    %v432 = vunpack.c.l.b16 %v388
    %v433 = vunpack.c.l.b16 %v389
    %v434 = vunpack.c.l.b16 %v390
    %v435 = vunpack.c.l.b16 %v391
    %v436 = vunpack.c.l.b16 %v392
    %v437 = vunpack.c.l.b16 %v393
    %v438 = vunpack.c.l.b16 %v394
    %v439 = vunpack.c.l.b16 %v395
    %v440 = vunpack.c.l.b16 %v396
    %v441 = vunpack.c.l.b16 %v397
    %v442 = vunpack.c.l.b16 %v398
    %v443 = vunpack.c.l.b16 %v399
    %v444 = vunpack.c.l.b16 %v400
    %v445 = vpack.c.b16 %v430, %v429
    %v446 = vpack.c.b16 %v432, %v431
    %v447 = vpack.c.b16 %v434, %v433
    %v448 = vpack.c.b16 %v436, %v435
    %v449 = vpack.c.b16 %v438, %v437
    %v450 = vpack.c.b16 %v440, %v439
    %v451 = vpack.c.b16 %v442, %v441
    %v452 = vpack.c.b16 %v444, %v443
    %461 = vmatprep.subr.bf16.mxu0 0
    %462 = vmatpush1.bf16.msra.mxu0 %v445
    %463 = vmatprep.subr.bf16.mxu0 0
    %464 = vmatpush1.bf16.msra.mxu0 %v446
    %465 = vmatprep.subr.bf16.mxu0 0
    %466 = vmatpush1.bf16.msra.mxu0 %v447
    %467 = vmatprep.subr.bf16.mxu0 0
    %468 = vmatpush1.bf16.msra.mxu0 %v448
    %469 = vmatprep.subr.bf16.mxu0 0
    %470 = vmatpush1.bf16.msra.mxu0 %v449
    %471 = vmatprep.subr.bf16.mxu0 0
    %472 = vmatpush1.bf16.msra.mxu0 %v450
    %473 = vmatprep.subr.bf16.mxu0 0
    %474 = vmatpush1.bf16.msra.mxu0 %v451
    %475 = vmatprep.subr.bf16.mxu0 0
    %476 = vmatpush1.bf16.msra.mxu0 %v452
    %477 = vmatprep.subr.bf16.mxu0 0
    %478 = vmatpush1.bf16.msra.mxu0 0
    %479 = vmatprep.subr.bf16.mxu0 0
    %480 = vmatpush1.bf16.msra.mxu0 0
    %481 = vmatprep.subr.bf16.mxu0 0
    %482 = vmatpush1.bf16.msra.mxu0 0
    %483 = vmatprep.subr.bf16.mxu0 0
    %484 = vmatpush1.bf16.msra.mxu0 0
    %485 = vmatprep.subr.bf16.mxu0 0
    %486 = vmatpush1.bf16.msra.mxu0 0
    %487 = vmatprep.subr.bf16.mxu0 0
    %488 = vmatpush1.bf16.msra.mxu0 0
    %489 = vmatprep.subr.bf16.mxu0 0
    %490 = vmatpush1.bf16.msra.mxu0 0
    %491 = vmatprep.subr.bf16.mxu0 0
    %492 = vmatpush1.bf16.msra.mxu0 0
    %493 = vmatprep.mubr.bf16.mxu0 0
    %494 = vmatmul.mubr.bf16.gmra.mrb[0].mxu0 %v409
    %v495 = vpop.f32.mrb[0].mxu0
    %v496 = vadd.f32 0.0, %v495
    %v497 = vpop.f32.mrb[0].mxu0
    %v498 = vpop.f32.mrb[0].mxu0
    %v499 = vadd.f32 0.0, %v498
    %v500 = vpop.f32.mrb[0].mxu0
    %501 = vmatprep.mubr.bf16.mxu0 0
    %502 = vmatmul.mubr.bf16.gmra.mrb[0].mxu0 %v410
    %v503 = vpop.f32.mrb[0].mxu0
    %v504 = vadd.f32 0.0, %v503
    %v505 = vpop.f32.mrb[0].mxu0
    %v506 = vpop.f32.mrb[0].mxu0
    %v507 = vadd.f32 0.0, %v506
    %v508 = vpop.f32.mrb[0].mxu0
    %509 = vmatprep.mubr.bf16.mxu0 0
    %510 = vmatmul.mubr.bf16.gmra.mrb[0].mxu0 %v411
    %v511 = vpop.f32.mrb[0].mxu0
    %v512 = vadd.f32 0.0, %v511
    %v513 = vpop.f32.mrb[0].mxu0
    %v514 = vpop.f32.mrb[0].mxu0
    %v515 = vadd.f32 0.0, %v514
    %v516 = vpop.f32.mrb[0].mxu0
    %517 = vmatprep.mubr.bf16.mxu0 0
    %518 = vmatmul.mubr.bf16.gmra.mrb[0].mxu0 %v412
    %v519 = vpop.f32.mrb[0].mxu0
    %v520 = vadd.f32 0.0, %v519
    %v521 = vpop.f32.mrb[0].mxu0
    %v522 = vpop.f32.mrb[0].mxu0
    %v523 = vadd.f32 0.0, %v522
    %v524 = vpop.f32.mrb[0].mxu0
    %525 = vdwg.mxu0
    %v526 = vmax.f32 %v496, %v512
    %v527 = vmax.f32 %v499, %v515
    %v528 = vmax.f32 %v504, %v520
    %v529 = vmax.f32 %v507, %v523
    %v530 = vmax.f32 %v526, %v527
    %v531 = vmax.f32 %v528, %v529
    %v532 = vmax.f32 %v530, %v531
    %v533 = vsub.f32 %v496, %v532
    %v534 = vsub.f32 %v499, %v532
    %v535 = vsub.f32 %v504, %v532
    %v536 = vsub.f32 %v507, %v532
    %v537 = vsub.f32 %v512, %v532
    %v538 = vsub.f32 %v515, %v532
    %v539 = vsub.f32 %v520, %v532
    %v540 = vsub.f32 %v523, %v532
    %v541 = vmul.f32 %v533, 1.442695
    %v542 = vpow.pop %v541
    %v543 = vmul.f32 %v534, 1.442695
    %v544 = vpow.pop %v543
    %v545 = vmul.f32 %v535, 1.442695
    %v546 = vpow.pop %v545
    %v547 = vmul.f32 %v536, 1.442695
    %v548 = vpow.pop %v547
    %v549 = vmul.f32 %v537, 1.442695
    %v550 = vpow.pop %v549
    %v551 = vmul.f32 %v538, 1.442695
    %v552 = vpow.pop %v551
    %v553 = vmul.f32 %v539, 1.442695
    %v554 = vpow.pop %v553
    %v555 = vmul.f32 %v540, 1.442695
    %v556 = vpow.pop %v555
    %v557 = vadd.f32 %v542, %v544
    %v558 = vadd.f32 %v557, %v546
    %v559 = vadd.f32 %v558, %v548
    %v560 = vadd.f32 %v559, %v550
    %v561 = vadd.f32 %v560, %v552
    %v562 = vadd.f32 %v561, %v554
    %v563 = vadd.f32 %v562, %v556
    %v564 = vmul.f32 %v542, %v349
    %v565 = vmul.f32 %v544, %v353
    %v566 = vmul.f32 %v546, %v359
    %v567 = vmul.f32 %v548, %v363
    %v568 = vmul.f32 %v550, %v369
    %v569 = vmul.f32 %v552, %v373
    %v570 = vmul.f32 %v554, %v379
    %v571 = vmul.f32 %v556, %v383
    %v572 = vadd.f32 %v564, %v565
    %v573 = vadd.f32 %v572, %v566
    %v574 = vadd.f32 %v573, %v567
    %v575 = vadd.f32 %v574, %v568
    %v576 = vadd.f32 %v575, %v569
    %v577 = vadd.f32 %v576, %v570
    %v578 = vadd.f32 %v577, %v571
    %v579 = vrcp.pop %v563
    %v580 = vmul.f32 %v578, %v579
    %581 = vst [vmem:[#allocation2] sm:$0xff] %v580
    %v582 = vmul.f32 %v280, %v347
    %v583 = vmul.f32 %v280, %v351
    %v584 = vmul.f32 %v280, %v357
    %v585 = vmul.f32 %v280, %v361
    %v586 = vmul.f32 %v280, %v367
    %v587 = vmul.f32 %v280, %v371
    %v588 = vmul.f32 %v280, %v377
    %v589 = vmul.f32 %v280, %v381
    %v590 = vpack.c.bf16 %v583, %v582
    %v591 = vpack.c.bf16 %v585, %v584
    %v592 = vpack.c.bf16 %v587, %v586
    %v593 = vpack.c.bf16 %v589, %v588
    %594 = vmatprep.subr.bf16.mxu0 0
    %595 = vmatpush1.bf16.msra.mxu0 %v445
    %596 = vmatprep.subr.bf16.mxu0 0
    %597 = vmatpush1.bf16.msra.mxu0 %v446
    %598 = vmatprep.subr.bf16.mxu0 0
    %599 = vmatpush1.bf16.msra.mxu0 %v447
    %600 = vmatprep.subr.bf16.mxu0 0
    %601 = vmatpush1.bf16.msra.mxu0 %v448
    %602 = vmatprep.subr.bf16.mxu0 0
    %603 = vmatpush1.bf16.msra.mxu0 %v449
    %604 = vmatprep.subr.bf16.mxu0 0
    %605 = vmatpush1.bf16.msra.mxu0 %v450
    %606 = vmatprep.subr.bf16.mxu0 0
    %607 = vmatpush1.bf16.msra.mxu0 %v451
    %608 = vmatprep.subr.bf16.mxu0 0
    %609 = vmatpush1.bf16.msra.mxu0 %v452
    %610 = vmatprep.subr.bf16.mxu0 0
    %611 = vmatpush1.bf16.msra.mxu0 0
    %612 = vmatprep.subr.bf16.mxu0 0
    %613 = vmatpush1.bf16.msra.mxu0 0
    %614 = vmatprep.subr.bf16.mxu0 0
    %615 = vmatpush1.bf16.msra.mxu0 0
    %616 = vmatprep.subr.bf16.mxu0 0
    %617 = vmatpush1.bf16.msra.mxu0 0
    %618 = vmatprep.subr.bf16.mxu0 0
    %619 = vmatpush1.bf16.msra.mxu0 0
    %620 = vmatprep.subr.bf16.mxu0 0
    %621 = vmatpush1.bf16.msra.mxu0 0
    %622 = vmatprep.subr.bf16.mxu0 0
    %623 = vmatpush1.bf16.msra.mxu0 0
    %624 = vmatprep.subr.bf16.mxu0 0
    %625 = vmatpush1.bf16.msra.mxu0 0
    %626 = vmatprep.mubr.bf16.mxu0 0
    %627 = vmatmul.mubr.bf16.gmra.mrb[0].mxu0 %v590
    %v628 = vpop.f32.mrb[0].mxu0
    %v629 = vadd.f32 0.0, %v628
    %v630 = vpop.f32.mrb[0].mxu0
    %v631 = vpop.f32.mrb[0].mxu0
    %v632 = vadd.f32 0.0, %v631
    %v633 = vpop.f32.mrb[0].mxu0
    %634 = vmatprep.mubr.bf16.mxu0 0
    %635 = vmatmul.mubr.bf16.gmra.mrb[0].mxu0 %v591
    %v636 = vpop.f32.mrb[0].mxu0
    %v637 = vadd.f32 0.0, %v636
    %v638 = vpop.f32.mrb[0].mxu0
    %v639 = vpop.f32.mrb[0].mxu0
    %v640 = vadd.f32 0.0, %v639
    %v641 = vpop.f32.mrb[0].mxu0
    %642 = vmatprep.mubr.bf16.mxu0 0
    %643 = vmatmul.mubr.bf16.gmra.mrb[0].mxu0 %v592
    %v644 = vpop.f32.mrb[0].mxu0
    %v645 = vadd.f32 0.0, %v644
    %v646 = vpop.f32.mrb[0].mxu0
    %v647 = vpop.f32.mrb[0].mxu0
    %v648 = vadd.f32 0.0, %v647
    %v649 = vpop.f32.mrb[0].mxu0
    %650 = vmatprep.mubr.bf16.mxu0 0
    %651 = vmatmul.mubr.bf16.gmra.mrb[0].mxu0 %v593
    %v652 = vpop.f32.mrb[0].mxu0
    %v653 = vadd.f32 0.0, %v652
    %v654 = vpop.f32.mrb[0].mxu0
    %v655 = vpop.f32.mrb[0].mxu0
    %v656 = vadd.f32 0.0, %v655
    %v657 = vpop.f32.mrb[0].mxu0
    %658 = vdwg.mxu0
    %v659 = vmax.f32 %v629, %v645
    %v660 = vmax.f32 %v632, %v648
    %v661 = vmax.f32 %v637, %v653
    %v662 = vmax.f32 %v640, %v656
    %v663 = vmax.f32 %v659, %v660
    %v664 = vmax.f32 %v661, %v662
    %v665 = vmax.f32 %v663, %v664
    %v666 = vsub.f32 %v629, %v665
    %v667 = vsub.f32 %v632, %v665
    %v668 = vsub.f32 %v637, %v665
    %v669 = vsub.f32 %v640, %v665
    %v670 = vsub.f32 %v645, %v665
    %v671 = vsub.f32 %v648, %v665
    %v672 = vsub.f32 %v653, %v665
    %v673 = vsub.f32 %v656, %v665
    %v674 = vmul.f32 %v666, 1.442695
    %v675 = vpow.pop %v674
    %v676 = vmul.f32 %v667, 1.442695
    %v677 = vpow.pop %v676
    %v678 = vmul.f32 %v668, 1.442695
    %v679 = vpow.pop %v678
    %v680 = vmul.f32 %v669, 1.442695
    %v681 = vpow.pop %v680
    %v682 = vmul.f32 %v670, 1.442695
    %v683 = vpow.pop %v682
    %v684 = vmul.f32 %v671, 1.442695
    %v685 = vpow.pop %v684
    %v686 = vmul.f32 %v672, 1.442695
    %v687 = vpow.pop %v686
    %v688 = vmul.f32 %v673, 1.442695
    %v689 = vpow.pop %v688
    %v690 = vadd.f32 %v675, %v677
    %v691 = vadd.f32 %v690, %v679
    %v692 = vadd.f32 %v691, %v681
    %v693 = vadd.f32 %v692, %v683
    %v694 = vadd.f32 %v693, %v685
    %v695 = vadd.f32 %v694, %v687
    %v696 = vadd.f32 %v695, %v689
    %v697 = vmul.f32 %v675, %v349
    %v698 = vmul.f32 %v677, %v353
    %v699 = vmul.f32 %v679, %v359
    %v700 = vmul.f32 %v681, %v363
    %v701 = vmul.f32 %v683, %v369
    %v702 = vmul.f32 %v685, %v373
    %v703 = vmul.f32 %v687, %v379
    %v704 = vmul.f32 %v689, %v383
    %v705 = vadd.f32 %v697, %v698
    %v706 = vadd.f32 %v705, %v699
    %v707 = vadd.f32 %v706, %v700
    %v708 = vadd.f32 %v707, %v701
    %v709 = vadd.f32 %v708, %v702
    %v710 = vadd.f32 %v709, %v703
    %v711 = vadd.f32 %v710, %v704
    %v712 = vrcp.pop %v696
    %v713 = vmul.f32 %v711, %v712
    %s714 = scalar_lea.vmem [#allocation2], 8
    %715 = vst [vmem:[%s714] sm:$0xff] %v713
    %v716 = vmul.f32 %v286, %v347
    %v717 = vmul.f32 %v286, %v351
    %v718 = vmul.f32 %v286, %v357
    %v719 = vmul.f32 %v286, %v361
    %v720 = vmul.f32 %v286, %v367
    %v721 = vmul.f32 %v286, %v371
    %v722 = vmul.f32 %v286, %v377
    %v723 = vmul.f32 %v286, %v381
    %v724 = vpack.c.bf16 %v717, %v716
    %v725 = vpack.c.bf16 %v719, %v718
    %v726 = vpack.c.bf16 %v721, %v720
    %v727 = vpack.c.bf16 %v723, %v722
    %728 = vmatprep.subr.bf16.mxu0 0
    %729 = vmatpush1.bf16.msra.mxu0 %v445
    %730 = vmatprep.subr.bf16.mxu0 0
    %731 = vmatpush1.bf16.msra.mxu0 %v446
    %732 = vmatprep.subr.bf16.mxu0 0
    %733 = vmatpush1.bf16.msra.mxu0 %v447
    %734 = vmatprep.subr.bf16.mxu0 0
    %735 = vmatpush1.bf16.msra.mxu0 %v448
    %736 = vmatprep.subr.bf16.mxu0 0
    %737 = vmatpush1.bf16.msra.mxu0 %v449
    %738 = vmatprep.subr.bf16.mxu0 0
    %739 = vmatpush1.bf16.msra.mxu0 %v450
    %740 = vmatprep.subr.bf16.mxu0 0
    %741 = vmatpush1.bf16.msra.mxu0 %v451
    %742 = vmatprep.subr.bf16.mxu0 0
    %743 = vmatpush1.bf16.msra.mxu0 %v452
    %744 = vmatprep.subr.bf16.mxu0 0
    %745 = vmatpush1.bf16.msra.mxu0 0
    %746 = vmatprep.subr.bf16.mxu0 0
    %747 = vmatpush1.bf16.msra.mxu0 0
    %748 = vmatprep.subr.bf16.mxu0 0
    %749 = vmatpush1.bf16.msra.mxu0 0
    %750 = vmatprep.subr.bf16.mxu0 0
    %751 = vmatpush1.bf16.msra.mxu0 0
    %752 = vmatprep.subr.bf16.mxu0 0
    %753 = vmatpush1.bf16.msra.mxu0 0
    %754 = vmatprep.subr.bf16.mxu0 0
    %755 = vmatpush1.bf16.msra.mxu0 0
    %756 = vmatprep.subr.bf16.mxu0 0
    %757 = vmatpush1.bf16.msra.mxu0 0
    %758 = vmatprep.subr.bf16.mxu0 0
    %759 = vmatpush1.bf16.msra.mxu0 0
    %760 = vmatprep.mubr.bf16.mxu0 0
    %761 = vmatmul.mubr.bf16.gmra.mrb[0].mxu0 %v724
    %v762 = vpop.f32.mrb[0].mxu0
    %v763 = vadd.f32 0.0, %v762
    %v764 = vpop.f32.mrb[0].mxu0
    %v765 = vpop.f32.mrb[0].mxu0
    %v766 = vadd.f32 0.0, %v765
    %v767 = vpop.f32.mrb[0].mxu0
    %768 = vmatprep.mubr.bf16.mxu0 0
    %769 = vmatmul.mubr.bf16.gmra.mrb[0].mxu0 %v725
    %v770 = vpop.f32.mrb[0].mxu0
    %v771 = vadd.f32 0.0, %v770
    %v772 = vpop.f32.mrb[0].mxu0
    %v773 = vpop.f32.mrb[0].mxu0
    %v774 = vadd.f32 0.0, %v773
    %v775 = vpop.f32.mrb[0].mxu0
    %776 = vmatprep.mubr.bf16.mxu0 0
    %777 = vmatmul.mubr.bf16.gmra.mrb[0].mxu0 %v726
    %v778 = vpop.f32.mrb[0].mxu0
    %v779 = vadd.f32 0.0, %v778
    %v780 = vpop.f32.mrb[0].mxu0
    %v781 = vpop.f32.mrb[0].mxu0
    %v782 = vadd.f32 0.0, %v781
    %v783 = vpop.f32.mrb[0].mxu0
    %784 = vmatprep.mubr.bf16.mxu0 0
    %785 = vmatmul.mubr.bf16.gmra.mrb[0].mxu0 %v727
    %v786 = vpop.f32.mrb[0].mxu0
    %v787 = vadd.f32 0.0, %v786
    %v788 = vpop.f32.mrb[0].mxu0
    %v789 = vpop.f32.mrb[0].mxu0
    %v790 = vadd.f32 0.0, %v789
    %v791 = vpop.f32.mrb[0].mxu0
    %792 = vdwg.mxu0
    %v793 = vmax.f32 %v763, %v779
    %v794 = vmax.f32 %v766, %v782
    %v795 = vmax.f32 %v771, %v787
    %v796 = vmax.f32 %v774, %v790
    %v797 = vmax.f32 %v793, %v794
    %v798 = vmax.f32 %v795, %v796
    %v799 = vmax.f32 %v797, %v798
    %v800 = vsub.f32 %v763, %v799
    %v801 = vsub.f32 %v766, %v799
    %v802 = vsub.f32 %v771, %v799
    %v803 = vsub.f32 %v774, %v799
    %v804 = vsub.f32 %v779, %v799
    %v805 = vsub.f32 %v782, %v799
    %v806 = vsub.f32 %v787, %v799
    %v807 = vsub.f32 %v790, %v799
    %v808 = vmul.f32 %v800, 1.442695
    %v809 = vpow.pop %v808
    %v810 = vmul.f32 %v801, 1.442695
    %v811 = vpow.pop %v810
    %v812 = vmul.f32 %v802, 1.442695
    %v813 = vpow.pop %v812
    %v814 = vmul.f32 %v803, 1.442695
    %v815 = vpow.pop %v814
    %v816 = vmul.f32 %v804, 1.442695
    %v817 = vpow.pop %v816
    %v818 = vmul.f32 %v805, 1.442695
    %v819 = vpow.pop %v818
    %v820 = vmul.f32 %v806, 1.442695
    %v821 = vpow.pop %v820
    %v822 = vmul.f32 %v807, 1.442695
    %v823 = vpow.pop %v822
    %v824 = vadd.f32 %v809, %v811
    %v825 = vadd.f32 %v824, %v813
    %v826 = vadd.f32 %v825, %v815
    %v827 = vadd.f32 %v826, %v817
    %v828 = vadd.f32 %v827, %v819
    %v829 = vadd.f32 %v828, %v821
    %v830 = vadd.f32 %v829, %v823
    %v831 = vmul.f32 %v809, %v349
    %v832 = vmul.f32 %v811, %v353
    %v833 = vmul.f32 %v813, %v359
    %v834 = vmul.f32 %v815, %v363
    %v835 = vmul.f32 %v817, %v369
    %v836 = vmul.f32 %v819, %v373
    %v837 = vmul.f32 %v821, %v379
    %v838 = vmul.f32 %v823, %v383
    %v839 = vadd.f32 %v831, %v832
    %v840 = vadd.f32 %v839, %v833
    %v841 = vadd.f32 %v840, %v834
    %v842 = vadd.f32 %v841, %v835
    %v843 = vadd.f32 %v842, %v836
    %v844 = vadd.f32 %v843, %v837
    %v845 = vadd.f32 %v844, %v838
    %v846 = vrcp.pop %v830
    %v847 = vmul.f32 %v845, %v846
    %s848 = scalar_lea.vmem [#allocation2], 16
    %849 = vst [vmem:[%s848] sm:$0xff] %v847
    %v850 = vmul.f32 %v290, %v347
    %v851 = vmul.f32 %v290, %v351
    %v852 = vmul.f32 %v290, %v357
    %v853 = vmul.f32 %v290, %v361
    %v854 = vmul.f32 %v290, %v367
    %v855 = vmul.f32 %v290, %v371
    %v856 = vmul.f32 %v290, %v377
    %v857 = vmul.f32 %v290, %v381
    %v858 = vpack.c.bf16 %v851, %v850
    %v859 = vpack.c.bf16 %v853, %v852
    %v860 = vpack.c.bf16 %v855, %v854
    %v861 = vpack.c.bf16 %v857, %v856
    %862 = vmatprep.subr.bf16.mxu0 0
    %863 = vmatpush1.bf16.msra.mxu0 %v445
    %864 = vmatprep.subr.bf16.mxu0 0
    %865 = vmatpush1.bf16.msra.mxu0 %v446
    %866 = vmatprep.subr.bf16.mxu0 0
    %867 = vmatpush1.bf16.msra.mxu0 %v447
    %868 = vmatprep.subr.bf16.mxu0 0
    %869 = vmatpush1.bf16.msra.mxu0 %v448
    %870 = vmatprep.subr.bf16.mxu0 0
    %871 = vmatpush1.bf16.msra.mxu0 %v449
    %872 = vmatprep.subr.bf16.mxu0 0
    %873 = vmatpush1.bf16.msra.mxu0 %v450
    %874 = vmatprep.subr.bf16.mxu0 0
    %875 = vmatpush1.bf16.msra.mxu0 %v451
    %876 = vmatprep.subr.bf16.mxu0 0
    %877 = vmatpush1.bf16.msra.mxu0 %v452
    %878 = vmatprep.subr.bf16.mxu0 0
    %879 = vmatpush1.bf16.msra.mxu0 0
    %880 = vmatprep.subr.bf16.mxu0 0
    %881 = vmatpush1.bf16.msra.mxu0 0
    %882 = vmatprep.subr.bf16.mxu0 0
    %883 = vmatpush1.bf16.msra.mxu0 0
    %884 = vmatprep.subr.bf16.mxu0 0
    %885 = vmatpush1.bf16.msra.mxu0 0
    %886 = vmatprep.subr.bf16.mxu0 0
    %887 = vmatpush1.bf16.msra.mxu0 0
    %888 = vmatprep.subr.bf16.mxu0 0
    %889 = vmatpush1.bf16.msra.mxu0 0
    %890 = vmatprep.subr.bf16.mxu0 0
    %891 = vmatpush1.bf16.msra.mxu0 0
    %892 = vmatprep.subr.bf16.mxu0 0
    %893 = vmatpush1.bf16.msra.mxu0 0
    %894 = vmatprep.mubr.bf16.mxu0 0
    %895 = vmatmul.mubr.bf16.gmra.mrb[0].mxu0 %v858
    %v896 = vpop.f32.mrb[0].mxu0
    %v897 = vadd.f32 0.0, %v896
    %v898 = vpop.f32.mrb[0].mxu0
    %v899 = vpop.f32.mrb[0].mxu0
    %v900 = vadd.f32 0.0, %v899
    %v901 = vpop.f32.mrb[0].mxu0
    %902 = vmatprep.mubr.bf16.mxu0 0
    %903 = vmatmul.mubr.bf16.gmra.mrb[0].mxu0 %v859
    %v904 = vpop.f32.mrb[0].mxu0
    %v905 = vadd.f32 0.0, %v904
    %v906 = vpop.f32.mrb[0].mxu0
    %v907 = vpop.f32.mrb[0].mxu0
    %v908 = vadd.f32 0.0, %v907
    %v909 = vpop.f32.mrb[0].mxu0
    %910 = vmatprep.mubr.bf16.mxu0 0
    %911 = vmatmul.mubr.bf16.gmra.mrb[0].mxu0 %v860
    %v912 = vpop.f32.mrb[0].mxu0
    %v913 = vadd.f32 0.0, %v912
    %v914 = vpop.f32.mrb[0].mxu0
    %v915 = vpop.f32.mrb[0].mxu0
    %v916 = vadd.f32 0.0, %v915
    %v917 = vpop.f32.mrb[0].mxu0
    %918 = vmatprep.mubr.bf16.mxu0 0
    %919 = vmatmul.mubr.bf16.gmra.mrb[0].mxu0 %v861
    %v920 = vpop.f32.mrb[0].mxu0
    %v921 = vadd.f32 0.0, %v920
    %v922 = vpop.f32.mrb[0].mxu0
    %v923 = vpop.f32.mrb[0].mxu0
    %v924 = vadd.f32 0.0, %v923
    %v925 = vpop.f32.mrb[0].mxu0
    %926 = vdwg.mxu0
    %v927 = vmax.f32 %v897, %v913
    %v928 = vmax.f32 %v900, %v916
    %v929 = vmax.f32 %v905, %v921
    %v930 = vmax.f32 %v908, %v924
    %v931 = vmax.f32 %v927, %v928
    %v932 = vmax.f32 %v929, %v930
    %v933 = vmax.f32 %v931, %v932
    %v934 = vsub.f32 %v897, %v933
    %v935 = vsub.f32 %v900, %v933
    %v936 = vsub.f32 %v905, %v933
    %v937 = vsub.f32 %v908, %v933
    %v938 = vsub.f32 %v913, %v933
    %v939 = vsub.f32 %v916, %v933
    %v940 = vsub.f32 %v921, %v933
    %v941 = vsub.f32 %v924, %v933
    %v942 = vmul.f32 %v934, 1.442695
    %v943 = vpow.pop %v942
    %v944 = vmul.f32 %v935, 1.442695
    %v945 = vpow.pop %v944
    %v946 = vmul.f32 %v936, 1.442695
    %v947 = vpow.pop %v946
    %v948 = vmul.f32 %v937, 1.442695
    %v949 = vpow.pop %v948
    %v950 = vmul.f32 %v938, 1.442695
    %v951 = vpow.pop %v950
    %v952 = vmul.f32 %v939, 1.442695
    %v953 = vpow.pop %v952
    %v954 = vmul.f32 %v940, 1.442695
    %v955 = vpow.pop %v954
    %v956 = vmul.f32 %v941, 1.442695
    %v957 = vpow.pop %v956
    %v958 = vadd.f32 %v943, %v945
    %v959 = vadd.f32 %v958, %v947
    %v960 = vadd.f32 %v959, %v949
    %v961 = vadd.f32 %v960, %v951
    %v962 = vadd.f32 %v961, %v953
    %v963 = vadd.f32 %v962, %v955
    %v964 = vadd.f32 %v963, %v957
    %v965 = vmul.f32 %v943, %v349
    %v966 = vmul.f32 %v945, %v353
    %v967 = vmul.f32 %v947, %v359
    %v968 = vmul.f32 %v949, %v363
    %v969 = vmul.f32 %v951, %v369
    %v970 = vmul.f32 %v953, %v373
    %v971 = vmul.f32 %v955, %v379
    %v972 = vmul.f32 %v957, %v383
    %v973 = vadd.f32 %v965, %v966
    %v974 = vadd.f32 %v973, %v967
    %v975 = vadd.f32 %v974, %v968
    %v976 = vadd.f32 %v975, %v969
    %v977 = vadd.f32 %v976, %v970
    %v978 = vadd.f32 %v977, %v971
    %v979 = vadd.f32 %v978, %v972
    %v980 = vrcp.pop %v964
    %v981 = vmul.f32 %v979, %v980
    %s982 = scalar_lea.vmem [#allocation2], 24
    %983 = vst [vmem:[%s982] sm:$0xff] %v981
    %v984 = vmul.f32 %v296, %v347
    %v985 = vmul.f32 %v296, %v351
    %v986 = vmul.f32 %v296, %v357
    %v987 = vmul.f32 %v296, %v361
    %v988 = vmul.f32 %v296, %v367
    %v989 = vmul.f32 %v296, %v371
    %v990 = vmul.f32 %v296, %v377
    %v991 = vmul.f32 %v296, %v381
    %v992 = vpack.c.bf16 %v985, %v984
    %v993 = vpack.c.bf16 %v987, %v986
    %v994 = vpack.c.bf16 %v989, %v988
    %v995 = vpack.c.bf16 %v991, %v990
    %996 = vmatprep.subr.bf16.mxu0 0
    %997 = vmatpush1.bf16.msra.mxu0 %v445
    %998 = vmatprep.subr.bf16.mxu0 0
    %999 = vmatpush1.bf16.msra.mxu0 %v446
    %1000 = vmatprep.subr.bf16.mxu0 0
    %1001 = vmatpush1.bf16.msra.mxu0 %v447
    %1002 = vmatprep.subr.bf16.mxu0 0
    %1003 = vmatpush1.bf16.msra.mxu0 %v448
    %1004 = vmatprep.subr.bf16.mxu0 0
    %1005 = vmatpush1.bf16.msra.mxu0 %v449
    %1006 = vmatprep.subr.bf16.mxu0 0
    %1007 = vmatpush1.bf16.msra.mxu0 %v450
    %1008 = vmatprep.subr.bf16.mxu0 0
    %1009 = vmatpush1.bf16.msra.mxu0 %v451
    %1010 = vmatprep.subr.bf16.mxu0 0
    %1011 = vmatpush1.bf16.msra.mxu0 %v452
    %1012 = vmatprep.subr.bf16.mxu0 0
    %1013 = vmatpush1.bf16.msra.mxu0 0
    %1014 = vmatprep.subr.bf16.mxu0 0
    %1015 = vmatpush1.bf16.msra.mxu0 0
    %1016 = vmatprep.subr.bf16.mxu0 0
    %1017 = vmatpush1.bf16.msra.mxu0 0
    %1018 = vmatprep.subr.bf16.mxu0 0
    %1019 = vmatpush1.bf16.msra.mxu0 0
    %1020 = vmatprep.subr.bf16.mxu0 0
    %1021 = vmatpush1.bf16.msra.mxu0 0
    %1022 = vmatprep.subr.bf16.mxu0 0
    %1023 = vmatpush1.bf16.msra.mxu0 0
    %1024 = vmatprep.subr.bf16.mxu0 0
    %1025 = vmatpush1.bf16.msra.mxu0 0
    %1026 = vmatprep.subr.bf16.mxu0 0
    %1027 = vmatpush1.bf16.msra.mxu0 0
    %1028 = vmatprep.mubr.bf16.mxu0 0
    %1029 = vmatmul.mubr.bf16.gmra.mrb[0].mxu0 %v992
    %v1030 = vpop.f32.mrb[0].mxu0
    %v1031 = vadd.f32 0.0, %v1030
    %v1032 = vpop.f32.mrb[0].mxu0
    %v1033 = vpop.f32.mrb[0].mxu0
    %v1034 = vadd.f32 0.0, %v1033
    %v1035 = vpop.f32.mrb[0].mxu0
    %1036 = vmatprep.mubr.bf16.mxu0 0
    %1037 = vmatmul.mubr.bf16.gmra.mrb[0].mxu0 %v993
    %v1038 = vpop.f32.mrb[0].mxu0
    %v1039 = vadd.f32 0.0, %v1038
    %v1040 = vpop.f32.mrb[0].mxu0
    %v1041 = vpop.f32.mrb[0].mxu0
    %v1042 = vadd.f32 0.0, %v1041
    %v1043 = vpop.f32.mrb[0].mxu0
    %1044 = vmatprep.mubr.bf16.mxu0 0
    %1045 = vmatmul.mubr.bf16.gmra.mrb[0].mxu0 %v994
    %v1046 = vpop.f32.mrb[0].mxu0
    %v1047 = vadd.f32 0.0, %v1046
    %v1048 = vpop.f32.mrb[0].mxu0
    %v1049 = vpop.f32.mrb[0].mxu0
    %v1050 = vadd.f32 0.0, %v1049
    %v1051 = vpop.f32.mrb[0].mxu0
    %1052 = vmatprep.mubr.bf16.mxu0 0
    %1053 = vmatmul.mubr.bf16.gmra.mrb[0].mxu0 %v995
    %v1054 = vpop.f32.mrb[0].mxu0
    %v1055 = vadd.f32 0.0, %v1054
    %v1056 = vpop.f32.mrb[0].mxu0
    %v1057 = vpop.f32.mrb[0].mxu0
    %v1058 = vadd.f32 0.0, %v1057
    %v1059 = vpop.f32.mrb[0].mxu0
    %1060 = vdwg.mxu0
    %v1061 = vmax.f32 %v1031, %v1047
    %v1062 = vmax.f32 %v1034, %v1050
    %v1063 = vmax.f32 %v1039, %v1055
    %v1064 = vmax.f32 %v1042, %v1058
    %v1065 = vmax.f32 %v1061, %v1062
    %v1066 = vmax.f32 %v1063, %v1064
    %v1067 = vmax.f32 %v1065, %v1066
    %v1068 = vsub.f32 %v1031, %v1067
    %v1069 = vsub.f32 %v1034, %v1067
    %v1070 = vsub.f32 %v1039, %v1067
    %v1071 = vsub.f32 %v1042, %v1067
    %v1072 = vsub.f32 %v1047, %v1067
    %v1073 = vsub.f32 %v1050, %v1067
    %v1074 = vsub.f32 %v1055, %v1067
    %v1075 = vsub.f32 %v1058, %v1067
    %v1076 = vmul.f32 %v1068, 1.442695
    %v1077 = vpow.pop %v1076
    %v1078 = vmul.f32 %v1069, 1.442695
    %v1079 = vpow.pop %v1078
    %v1080 = vmul.f32 %v1070, 1.442695
    %v1081 = vpow.pop %v1080
    %v1082 = vmul.f32 %v1071, 1.442695
    %v1083 = vpow.pop %v1082
    %v1084 = vmul.f32 %v1072, 1.442695
    %v1085 = vpow.pop %v1084
    %v1086 = vmul.f32 %v1073, 1.442695
    %v1087 = vpow.pop %v1086
    %v1088 = vmul.f32 %v1074, 1.442695
    %v1089 = vpow.pop %v1088
    %v1090 = vmul.f32 %v1075, 1.442695
    %v1091 = vpow.pop %v1090
    %v1092 = vadd.f32 %v1077, %v1079
    %v1093 = vadd.f32 %v1092, %v1081
    %v1094 = vadd.f32 %v1093, %v1083
    %v1095 = vadd.f32 %v1094, %v1085
    %v1096 = vadd.f32 %v1095, %v1087
    %v1097 = vadd.f32 %v1096, %v1089
    %v1098 = vadd.f32 %v1097, %v1091
    %v1099 = vmul.f32 %v1077, %v349
    %v1100 = vmul.f32 %v1079, %v353
    %v1101 = vmul.f32 %v1081, %v359
    %v1102 = vmul.f32 %v1083, %v363
    %v1103 = vmul.f32 %v1085, %v369
    %v1104 = vmul.f32 %v1087, %v373
    %v1105 = vmul.f32 %v1089, %v379
    %v1106 = vmul.f32 %v1091, %v383
    %v1107 = vadd.f32 %v1099, %v1100
    %v1108 = vadd.f32 %v1107, %v1101
    %v1109 = vadd.f32 %v1108, %v1102
    %v1110 = vadd.f32 %v1109, %v1103
    %v1111 = vadd.f32 %v1110, %v1104
    %v1112 = vadd.f32 %v1111, %v1105
    %v1113 = vadd.f32 %v1112, %v1106
    %v1114 = vrcp.pop %v1098
    %v1115 = vmul.f32 %v1113, %v1114
    %s1116 = scalar_lea.vmem [#allocation2], 32
    %1117 = vst [vmem:[%s1116] sm:$0xff] %v1115
    %v1118 = vmul.f32 %v300, %v347
    %v1119 = vmul.f32 %v300, %v351
    %v1120 = vmul.f32 %v300, %v357
    %v1121 = vmul.f32 %v300, %v361
    %v1122 = vmul.f32 %v300, %v367
    %v1123 = vmul.f32 %v300, %v371
    %v1124 = vmul.f32 %v300, %v377
    %v1125 = vmul.f32 %v300, %v381
    %v1126 = vpack.c.bf16 %v1119, %v1118
    %v1127 = vpack.c.bf16 %v1121, %v1120
    %v1128 = vpack.c.bf16 %v1123, %v1122
    %v1129 = vpack.c.bf16 %v1125, %v1124
    %1130 = vmatprep.subr.bf16.mxu0 0
    %1131 = vmatpush1.bf16.msra.mxu0 %v445
    %1132 = vmatprep.subr.bf16.mxu0 0
    %1133 = vmatpush1.bf16.msra.mxu0 %v446
    %1134 = vmatprep.subr.bf16.mxu0 0
    %1135 = vmatpush1.bf16.msra.mxu0 %v447
    %1136 = vmatprep.subr.bf16.mxu0 0
    %1137 = vmatpush1.bf16.msra.mxu0 %v448
    %1138 = vmatprep.subr.bf16.mxu0 0
    %1139 = vmatpush1.bf16.msra.mxu0 %v449
    %1140 = vmatprep.subr.bf16.mxu0 0
    %1141 = vmatpush1.bf16.msra.mxu0 %v450
    %1142 = vmatprep.subr.bf16.mxu0 0
    %1143 = vmatpush1.bf16.msra.mxu0 %v451
    %1144 = vmatprep.subr.bf16.mxu0 0
    %1145 = vmatpush1.bf16.msra.mxu0 %v452
    %1146 = vmatprep.subr.bf16.mxu0 0
    %1147 = vmatpush1.bf16.msra.mxu0 0
    %1148 = vmatprep.subr.bf16.mxu0 0
    %1149 = vmatpush1.bf16.msra.mxu0 0
    %1150 = vmatprep.subr.bf16.mxu0 0
    %1151 = vmatpush1.bf16.msra.mxu0 0
    %1152 = vmatprep.subr.bf16.mxu0 0
    %1153 = vmatpush1.bf16.msra.mxu0 0
    %1154 = vmatprep.subr.bf16.mxu0 0
    %1155 = vmatpush1.bf16.msra.mxu0 0
    %1156 = vmatprep.subr.bf16.mxu0 0
    %1157 = vmatpush1.bf16.msra.mxu0 0
    %1158 = vmatprep.subr.bf16.mxu0 0
    %1159 = vmatpush1.bf16.msra.mxu0 0
    %1160 = vmatprep.subr.bf16.mxu0 0
    %1161 = vmatpush1.bf16.msra.mxu0 0
    %1162 = vmatprep.mubr.bf16.mxu0 0
    %1163 = vmatmul.mubr.bf16.gmra.mrb[0].mxu0 %v1126
    %v1164 = vpop.f32.mrb[0].mxu0
    %v1165 = vadd.f32 0.0, %v1164
    %v1166 = vpop.f32.mrb[0].mxu0
    %v1167 = vpop.f32.mrb[0].mxu0
    %v1168 = vadd.f32 0.0, %v1167
    %v1169 = vpop.f32.mrb[0].mxu0
    %1170 = vmatprep.mubr.bf16.mxu0 0
    %1171 = vmatmul.mubr.bf16.gmra.mrb[0].mxu0 %v1127
    %v1172 = vpop.f32.mrb[0].mxu0
    %v1173 = vadd.f32 0.0, %v1172
    %v1174 = vpop.f32.mrb[0].mxu0
    %v1175 = vpop.f32.mrb[0].mxu0
    %v1176 = vadd.f32 0.0, %v1175
    %v1177 = vpop.f32.mrb[0].mxu0
    %1178 = vmatprep.mubr.bf16.mxu0 0
    %1179 = vmatmul.mubr.bf16.gmra.mrb[0].mxu0 %v1128
    %v1180 = vpop.f32.mrb[0].mxu0
    %v1181 = vadd.f32 0.0, %v1180
    %v1182 = vpop.f32.mrb[0].mxu0
    %v1183 = vpop.f32.mrb[0].mxu0
    %v1184 = vadd.f32 0.0, %v1183
    %v1185 = vpop.f32.mrb[0].mxu0
    %1186 = vmatprep.mubr.bf16.mxu0 0
    %1187 = vmatmul.mubr.bf16.gmra.mrb[0].mxu0 %v1129
    %v1188 = vpop.f32.mrb[0].mxu0
    %v1189 = vadd.f32 0.0, %v1188
    %v1190 = vpop.f32.mrb[0].mxu0
    %v1191 = vpop.f32.mrb[0].mxu0
    %v1192 = vadd.f32 0.0, %v1191
    %v1193 = vpop.f32.mrb[0].mxu0
    %1194 = vdwg.mxu0
    %v1195 = vmax.f32 %v1165, %v1181
    %v1196 = vmax.f32 %v1168, %v1184
    %v1197 = vmax.f32 %v1173, %v1189
    %v1198 = vmax.f32 %v1176, %v1192
    %v1199 = vmax.f32 %v1195, %v1196
    %v1200 = vmax.f32 %v1197, %v1198
    %v1201 = vmax.f32 %v1199, %v1200
    %v1202 = vsub.f32 %v1165, %v1201
    %v1203 = vsub.f32 %v1168, %v1201
    %v1204 = vsub.f32 %v1173, %v1201
    %v1205 = vsub.f32 %v1176, %v1201
    %v1206 = vsub.f32 %v1181, %v1201
    %v1207 = vsub.f32 %v1184, %v1201
    %v1208 = vsub.f32 %v1189, %v1201
    %v1209 = vsub.f32 %v1192, %v1201
    %v1210 = vmul.f32 %v1202, 1.442695
    %v1211 = vpow.pop %v1210
    %v1212 = vmul.f32 %v1203, 1.442695
    %v1213 = vpow.pop %v1212
    %v1214 = vmul.f32 %v1204, 1.442695
    %v1215 = vpow.pop %v1214
    %v1216 = vmul.f32 %v1205, 1.442695
    %v1217 = vpow.pop %v1216
    %v1218 = vmul.f32 %v1206, 1.442695
    %v1219 = vpow.pop %v1218
    %v1220 = vmul.f32 %v1207, 1.442695
    %v1221 = vpow.pop %v1220
    %v1222 = vmul.f32 %v1208, 1.442695
    %v1223 = vpow.pop %v1222
    %v1224 = vmul.f32 %v1209, 1.442695
    %v1225 = vpow.pop %v1224
    %v1226 = vadd.f32 %v1211, %v1213
    %v1227 = vadd.f32 %v1226, %v1215
    %v1228 = vadd.f32 %v1227, %v1217
    %v1229 = vadd.f32 %v1228, %v1219
    %v1230 = vadd.f32 %v1229, %v1221
    %v1231 = vadd.f32 %v1230, %v1223
    %v1232 = vadd.f32 %v1231, %v1225
    %v1233 = vmul.f32 %v1211, %v349
    %v1234 = vmul.f32 %v1213, %v353
    %v1235 = vmul.f32 %v1215, %v359
    %v1236 = vmul.f32 %v1217, %v363
    %v1237 = vmul.f32 %v1219, %v369
    %v1238 = vmul.f32 %v1221, %v373
    %v1239 = vmul.f32 %v1223, %v379
    %v1240 = vmul.f32 %v1225, %v383
    %v1241 = vadd.f32 %v1233, %v1234
    %v1242 = vadd.f32 %v1241, %v1235
    %v1243 = vadd.f32 %v1242, %v1236
    %v1244 = vadd.f32 %v1243, %v1237
    %v1245 = vadd.f32 %v1244, %v1238
    %v1246 = vadd.f32 %v1245, %v1239
    %v1247 = vadd.f32 %v1246, %v1240
    %v1248 = vrcp.pop %v1232
    %v1249 = vmul.f32 %v1247, %v1248
    %s1250 = scalar_lea.vmem [#allocation2], 40
    %1251 = vst [vmem:[%s1250] sm:$0xff] %v1249
    %v1252 = vmul.f32 %v306, %v347
    %v1253 = vmul.f32 %v306, %v351
    %v1254 = vmul.f32 %v306, %v357
    %v1255 = vmul.f32 %v306, %v361
    %v1256 = vmul.f32 %v306, %v367
    %v1257 = vmul.f32 %v306, %v371
    %v1258 = vmul.f32 %v306, %v377
    %v1259 = vmul.f32 %v306, %v381
    %v1260 = vpack.c.bf16 %v1253, %v1252
    %v1261 = vpack.c.bf16 %v1255, %v1254
    %v1262 = vpack.c.bf16 %v1257, %v1256
    %v1263 = vpack.c.bf16 %v1259, %v1258
    %1264 = vmatprep.subr.bf16.mxu0 0
    %1265 = vmatpush1.bf16.msra.mxu0 %v445
    %1266 = vmatprep.subr.bf16.mxu0 0
    %1267 = vmatpush1.bf16.msra.mxu0 %v446
    %1268 = vmatprep.subr.bf16.mxu0 0
    %1269 = vmatpush1.bf16.msra.mxu0 %v447
    %1270 = vmatprep.subr.bf16.mxu0 0
    %1271 = vmatpush1.bf16.msra.mxu0 %v448
    %1272 = vmatprep.subr.bf16.mxu0 0
    %1273 = vmatpush1.bf16.msra.mxu0 %v449
    %1274 = vmatprep.subr.bf16.mxu0 0
    %1275 = vmatpush1.bf16.msra.mxu0 %v450
    %1276 = vmatprep.subr.bf16.mxu0 0
    %1277 = vmatpush1.bf16.msra.mxu0 %v451
    %1278 = vmatprep.subr.bf16.mxu0 0
    %1279 = vmatpush1.bf16.msra.mxu0 %v452
    %1280 = vmatprep.subr.bf16.mxu0 0
    %1281 = vmatpush1.bf16.msra.mxu0 0
    %1282 = vmatprep.subr.bf16.mxu0 0
    %1283 = vmatpush1.bf16.msra.mxu0 0
    %1284 = vmatprep.subr.bf16.mxu0 0
    %1285 = vmatpush1.bf16.msra.mxu0 0
    %1286 = vmatprep.subr.bf16.mxu0 0
    %1287 = vmatpush1.bf16.msra.mxu0 0
    %1288 = vmatprep.subr.bf16.mxu0 0
    %1289 = vmatpush1.bf16.msra.mxu0 0
    %1290 = vmatprep.subr.bf16.mxu0 0
    %1291 = vmatpush1.bf16.msra.mxu0 0
    %1292 = vmatprep.subr.bf16.mxu0 0
    %1293 = vmatpush1.bf16.msra.mxu0 0
    %1294 = vmatprep.subr.bf16.mxu0 0
    %1295 = vmatpush1.bf16.msra.mxu0 0
    %1296 = vmatprep.mubr.bf16.mxu0 0
    %1297 = vmatmul.mubr.bf16.gmra.mrb[0].mxu0 %v1260
    %v1298 = vpop.f32.mrb[0].mxu0
    %v1299 = vadd.f32 0.0, %v1298
    %v1300 = vpop.f32.mrb[0].mxu0
    %v1301 = vpop.f32.mrb[0].mxu0
    %v1302 = vadd.f32 0.0, %v1301
    %v1303 = vpop.f32.mrb[0].mxu0
    %1304 = vmatprep.mubr.bf16.mxu0 0
    %1305 = vmatmul.mubr.bf16.gmra.mrb[0].mxu0 %v1261
    %v1306 = vpop.f32.mrb[0].mxu0
    %v1307 = vadd.f32 0.0, %v1306
    %v1308 = vpop.f32.mrb[0].mxu0
    %v1309 = vpop.f32.mrb[0].mxu0
    %v1310 = vadd.f32 0.0, %v1309
    %v1311 = vpop.f32.mrb[0].mxu0
    %1312 = vmatprep.mubr.bf16.mxu0 0
    %1313 = vmatmul.mubr.bf16.gmra.mrb[0].mxu0 %v1262
    %v1314 = vpop.f32.mrb[0].mxu0
    %v1315 = vadd.f32 0.0, %v1314
    %v1316 = vpop.f32.mrb[0].mxu0
    %v1317 = vpop.f32.mrb[0].mxu0
    %v1318 = vadd.f32 0.0, %v1317
    %v1319 = vpop.f32.mrb[0].mxu0
    %1320 = vmatprep.mubr.bf16.mxu0 0
    %1321 = vmatmul.mubr.bf16.gmra.mrb[0].mxu0 %v1263
    %v1322 = vpop.f32.mrb[0].mxu0
    %v1323 = vadd.f32 0.0, %v1322
    %v1324 = vpop.f32.mrb[0].mxu0
    %v1325 = vpop.f32.mrb[0].mxu0
    %v1326 = vadd.f32 0.0, %v1325
    %v1327 = vpop.f32.mrb[0].mxu0
    %1328 = vdwg.mxu0
    %v1329 = vmax.f32 %v1299, %v1315
    %v1330 = vmax.f32 %v1302, %v1318
    %v1331 = vmax.f32 %v1307, %v1323
    %v1332 = vmax.f32 %v1310, %v1326
    %v1333 = vmax.f32 %v1329, %v1330
    %v1334 = vmax.f32 %v1331, %v1332
    %v1335 = vmax.f32 %v1333, %v1334
    %v1336 = vsub.f32 %v1299, %v1335
    %v1337 = vsub.f32 %v1302, %v1335
    %v1338 = vsub.f32 %v1307, %v1335
    %v1339 = vsub.f32 %v1310, %v1335
    %v1340 = vsub.f32 %v1315, %v1335
    %v1341 = vsub.f32 %v1318, %v1335
    %v1342 = vsub.f32 %v1323, %v1335
    %v1343 = vsub.f32 %v1326, %v1335
    %v1344 = vmul.f32 %v1336, 1.442695
    %v1345 = vpow.pop %v1344
    %v1346 = vmul.f32 %v1337, 1.442695
    %v1347 = vpow.pop %v1346
    %v1348 = vmul.f32 %v1338, 1.442695
    %v1349 = vpow.pop %v1348
    %v1350 = vmul.f32 %v1339, 1.442695
    %v1351 = vpow.pop %v1350
    %v1352 = vmul.f32 %v1340, 1.442695
    %v1353 = vpow.pop %v1352
    %v1354 = vmul.f32 %v1341, 1.442695
    %v1355 = vpow.pop %v1354
    %v1356 = vmul.f32 %v1342, 1.442695
    %v1357 = vpow.pop %v1356
    %v1358 = vmul.f32 %v1343, 1.442695
    %v1359 = vpow.pop %v1358
    %v1360 = vadd.f32 %v1345, %v1347
    %v1361 = vadd.f32 %v1360, %v1349
    %v1362 = vadd.f32 %v1361, %v1351
    %v1363 = vadd.f32 %v1362, %v1353
    %v1364 = vadd.f32 %v1363, %v1355
    %v1365 = vadd.f32 %v1364, %v1357
    %v1366 = vadd.f32 %v1365, %v1359
    %v1367 = vmul.f32 %v1345, %v349
    %v1368 = vmul.f32 %v1347, %v353
    %v1369 = vmul.f32 %v1349, %v359
    %v1370 = vmul.f32 %v1351, %v363
    %v1371 = vmul.f32 %v1353, %v369
    %v1372 = vmul.f32 %v1355, %v373
    %v1373 = vmul.f32 %v1357, %v379
    %v1374 = vmul.f32 %v1359, %v383
    %v1375 = vadd.f32 %v1367, %v1368
    %v1376 = vadd.f32 %v1375, %v1369
    %v1377 = vadd.f32 %v1376, %v1370
    %v1378 = vadd.f32 %v1377, %v1371
    %v1379 = vadd.f32 %v1378, %v1372
    %v1380 = vadd.f32 %v1379, %v1373
    %v1381 = vadd.f32 %v1380, %v1374
    %v1382 = vrcp.pop %v1366
    %v1383 = vmul.f32 %v1381, %v1382
    %s1384 = scalar_lea.vmem [#allocation2], 48
    %1385 = vst [vmem:[%s1384] sm:$0xff] %v1383
    %v1386 = vmul.f32 %v310, %v347
    %v1387 = vmul.f32 %v310, %v351
    %v1388 = vmul.f32 %v310, %v357
    %v1389 = vmul.f32 %v310, %v361
    %v1390 = vmul.f32 %v310, %v367
    %v1391 = vmul.f32 %v310, %v371
    %v1392 = vmul.f32 %v310, %v377
    %v1393 = vmul.f32 %v310, %v381
    %v1394 = vpack.c.bf16 %v1387, %v1386
    %v1395 = vpack.c.bf16 %v1389, %v1388
    %v1396 = vpack.c.bf16 %v1391, %v1390
    %v1397 = vpack.c.bf16 %v1393, %v1392
    %1398 = vmatprep.subr.bf16.mxu0 0
    %1399 = vmatpush1.bf16.msra.mxu0 %v445
    %1400 = vmatprep.subr.bf16.mxu0 0
    %1401 = vmatpush1.bf16.msra.mxu0 %v446
    %1402 = vmatprep.subr.bf16.mxu0 0
    %1403 = vmatpush1.bf16.msra.mxu0 %v447
    %1404 = vmatprep.subr.bf16.mxu0 0
    %1405 = vmatpush1.bf16.msra.mxu0 %v448
    %1406 = vmatprep.subr.bf16.mxu0 0
    %1407 = vmatpush1.bf16.msra.mxu0 %v449
    %1408 = vmatprep.subr.bf16.mxu0 0
    %1409 = vmatpush1.bf16.msra.mxu0 %v450
    %1410 = vmatprep.subr.bf16.mxu0 0
    %1411 = vmatpush1.bf16.msra.mxu0 %v451
    %1412 = vmatprep.subr.bf16.mxu0 0
    %1413 = vmatpush1.bf16.msra.mxu0 %v452
    %1414 = vmatprep.subr.bf16.mxu0 0
    %1415 = vmatpush1.bf16.msra.mxu0 0
    %1416 = vmatprep.subr.bf16.mxu0 0
    %1417 = vmatpush1.bf16.msra.mxu0 0
    %1418 = vmatprep.subr.bf16.mxu0 0
    %1419 = vmatpush1.bf16.msra.mxu0 0
    %1420 = vmatprep.subr.bf16.mxu0 0
    %1421 = vmatpush1.bf16.msra.mxu0 0
    %1422 = vmatprep.subr.bf16.mxu0 0
    %1423 = vmatpush1.bf16.msra.mxu0 0
    %1424 = vmatprep.subr.bf16.mxu0 0
    %1425 = vmatpush1.bf16.msra.mxu0 0
    %1426 = vmatprep.subr.bf16.mxu0 0
    %1427 = vmatpush1.bf16.msra.mxu0 0
    %1428 = vmatprep.subr.bf16.mxu0 0
    %1429 = vmatpush1.bf16.msra.mxu0 0
    %1430 = vmatprep.mubr.bf16.mxu0 0
    %1431 = vmatmul.mubr.bf16.gmra.mrb[0].mxu0 %v1394
    %v1432 = vpop.f32.mrb[0].mxu0
    %v1433 = vadd.f32 0.0, %v1432
    %v1434 = vpop.f32.mrb[0].mxu0
    %v1435 = vpop.f32.mrb[0].mxu0
    %v1436 = vadd.f32 0.0, %v1435
    %v1437 = vpop.f32.mrb[0].mxu0
    %1438 = vmatprep.mubr.bf16.mxu0 0
    %1439 = vmatmul.mubr.bf16.gmra.mrb[0].mxu0 %v1395
    %v1440 = vpop.f32.mrb[0].mxu0
    %v1441 = vadd.f32 0.0, %v1440
    %v1442 = vpop.f32.mrb[0].mxu0
    %v1443 = vpop.f32.mrb[0].mxu0
    %v1444 = vadd.f32 0.0, %v1443
    %v1445 = vpop.f32.mrb[0].mxu0
    %1446 = vmatprep.mubr.bf16.mxu0 0
    %1447 = vmatmul.mubr.bf16.gmra.mrb[0].mxu0 %v1396
    %v1448 = vpop.f32.mrb[0].mxu0
    %v1449 = vadd.f32 0.0, %v1448
    %v1450 = vpop.f32.mrb[0].mxu0
    %v1451 = vpop.f32.mrb[0].mxu0
    %v1452 = vadd.f32 0.0, %v1451
    %v1453 = vpop.f32.mrb[0].mxu0
    %1454 = vmatprep.mubr.bf16.mxu0 0
    %1455 = vmatmul.mubr.bf16.gmra.mrb[0].mxu0 %v1397
    %v1456 = vpop.f32.mrb[0].mxu0
    %v1457 = vadd.f32 0.0, %v1456
    %v1458 = vpop.f32.mrb[0].mxu0
    %v1459 = vpop.f32.mrb[0].mxu0
    %v1460 = vadd.f32 0.0, %v1459
    %v1461 = vpop.f32.mrb[0].mxu0
    %1462 = vdwg.mxu0
    %v1463 = vmax.f32 %v1433, %v1449
    %v1464 = vmax.f32 %v1436, %v1452
    %v1465 = vmax.f32 %v1441, %v1457
    %v1466 = vmax.f32 %v1444, %v1460
    %v1467 = vmax.f32 %v1463, %v1464
    %v1468 = vmax.f32 %v1465, %v1466
    %v1469 = vmax.f32 %v1467, %v1468
    %v1470 = vsub.f32 %v1433, %v1469
    %v1471 = vsub.f32 %v1436, %v1469
    %v1472 = vsub.f32 %v1441, %v1469
    %v1473 = vsub.f32 %v1444, %v1469
    %v1474 = vsub.f32 %v1449, %v1469
    %v1475 = vsub.f32 %v1452, %v1469
    %v1476 = vsub.f32 %v1457, %v1469
    %v1477 = vsub.f32 %v1460, %v1469
    %v1478 = vmul.f32 %v1470, 1.442695
    %v1479 = vpow.pop %v1478
    %v1480 = vmul.f32 %v1471, 1.442695
    %v1481 = vpow.pop %v1480
    %v1482 = vmul.f32 %v1472, 1.442695
    %v1483 = vpow.pop %v1482
    %v1484 = vmul.f32 %v1473, 1.442695
    %v1485 = vpow.pop %v1484
    %v1486 = vmul.f32 %v1474, 1.442695
    %v1487 = vpow.pop %v1486
    %v1488 = vmul.f32 %v1475, 1.442695
    %v1489 = vpow.pop %v1488
    %v1490 = vmul.f32 %v1476, 1.442695
    %v1491 = vpow.pop %v1490
    %v1492 = vmul.f32 %v1477, 1.442695
    %v1493 = vpow.pop %v1492
    %v1494 = vadd.f32 %v1479, %v1481
    %v1495 = vadd.f32 %v1494, %v1483
    %v1496 = vadd.f32 %v1495, %v1485
    %v1497 = vadd.f32 %v1496, %v1487
    %v1498 = vadd.f32 %v1497, %v1489
    %v1499 = vadd.f32 %v1498, %v1491
    %v1500 = vadd.f32 %v1499, %v1493
    %v1501 = vmul.f32 %v1479, %v349
    %v1502 = vmul.f32 %v1481, %v353
    %v1503 = vmul.f32 %v1483, %v359
    %v1504 = vmul.f32 %v1485, %v363
    %v1505 = vmul.f32 %v1487, %v369
    %v1506 = vmul.f32 %v1489, %v373
    %v1507 = vmul.f32 %v1491, %v379
    %v1508 = vmul.f32 %v1493, %v383
    %v1509 = vadd.f32 %v1501, %v1502
    %v1510 = vadd.f32 %v1509, %v1503
    %v1511 = vadd.f32 %v1510, %v1504
    %v1512 = vadd.f32 %v1511, %v1505
    %v1513 = vadd.f32 %v1512, %v1506
    %v1514 = vadd.f32 %v1513, %v1507
    %v1515 = vadd.f32 %v1514, %v1508
    %v1516 = vrcp.pop %v1500
    %v1517 = vmul.f32 %v1515, %v1516
    %s1518 = scalar_lea.vmem [#allocation2], 56
    %1519 = vst [vmem:[%s1518] sm:$0xff] %v1517
    %v1520 = vld [vmem:[#allocation2] sm:$0xff]
    %v1521 = vld [vmem:[#allocation2 + $0x8] sm:$0xff]
    %v1522 = vld [vmem:[#allocation2 + $0x10] sm:$0xff]
    %v1523 = vld [vmem:[#allocation2 + $0x18] sm:$0xff]
    %v1524 = vld [vmem:[#allocation2 + $0x20] sm:$0xff]
    %v1525 = vld [vmem:[#allocation2 + $0x28] sm:$0xff]
    %v1526 = vld [vmem:[#allocation2 + $0x30] sm:$0xff]
    %v1527 = vld [vmem:[#allocation2 + $0x38] sm:$0xff]
    %v1528 = vpack.c.bf16 %v1521, %v1520
    %v1529 = vpack.c.bf16 %v1523, %v1522
    %v1530 = vpack.c.bf16 %v1525, %v1524
    %v1531 = vpack.c.bf16 %v1527, %v1526
    %v1532 = vld [vmem:[#allocation9] sm:$0xf]
    %v1533 = vld [vmem:[#allocation9 + $0x4] sm:$0xf]
    %v1534 = vld [vmem:[#allocation9 + $0x8] sm:$0xf]
    %v1535 = vld [vmem:[#allocation9 + $0xc] sm:$0xf]
    %v1536 = vld [vmem:[#allocation9 + $0x10] sm:$0xf]
    %v1537 = vld [vmem:[#allocation9 + $0x14] sm:$0xf]
    %v1538 = vld [vmem:[#allocation9 + $0x18] sm:$0xf]
    %v1539 = vld [vmem:[#allocation9 + $0x1c] sm:$0xf]
    %v1540 = vld [vmem:[#allocation9 + $0x20] sm:$0xf]
    %v1541 = vld [vmem:[#allocation9 + $0x24] sm:$0xf]
    %v1542 = vld [vmem:[#allocation9 + $0x28] sm:$0xf]
    %v1543 = vld [vmem:[#allocation9 + $0x2c] sm:$0xf]
    %v1544 = vld [vmem:[#allocation9 + $0x30] sm:$0xf]
    %v1545 = vld [vmem:[#allocation9 + $0x34] sm:$0xf]
    %v1546 = vld [vmem:[#allocation9 + $0x38] sm:$0xf]
    %v1547 = vld [vmem:[#allocation9 + $0x3c] sm:$0xf]
    %v1548 = vld [vmem:[%s5] sm:$0x1]
    %v1550 = vlaneseq
    %v1551 = vshrl.u32 %v1550, 7
    %v1552 = vsub.s32 0, %v1551
    %v1553 = vrot.slane %v1548, %v1552
    %v1571 = vunpack.c.l.b16 %v1532
    %v1572 = vunpack.c.l.b16 %v1533
    %v1573 = vunpack.c.l.b16 %v1534
    %v1574 = vunpack.c.l.b16 %v1535
    %v1575 = vunpack.c.l.b16 %v1536
    %v1576 = vunpack.c.l.b16 %v1537
    %v1577 = vunpack.c.l.b16 %v1538
    %v1578 = vunpack.c.l.b16 %v1539
    %v1579 = vunpack.c.l.b16 %v1540
    %v1580 = vunpack.c.l.b16 %v1541
    %v1581 = vunpack.c.l.b16 %v1542
    %v1582 = vunpack.c.l.b16 %v1543
    %v1583 = vunpack.c.l.b16 %v1544
    %v1584 = vunpack.c.l.b16 %v1545
    %v1585 = vunpack.c.l.b16 %v1546
    %v1586 = vunpack.c.l.b16 %v1547
    %v1587 = vpack.c.b16 %v1572, %v1571
    %v1588 = vpack.c.b16 %v1574, %v1573
    %v1589 = vpack.c.b16 %v1576, %v1575
    %v1590 = vpack.c.b16 %v1578, %v1577
    %v1591 = vpack.c.b16 %v1580, %v1579
    %v1592 = vpack.c.b16 %v1582, %v1581
    %v1593 = vpack.c.b16 %v1584, %v1583
    %v1594 = vpack.c.b16 %v1586, %v1585
    %1603 = vmatprep.subr.bf16.mxu0 0
    %1604 = vmatpush1.bf16.msra.mxu0 %v1587
    %1605 = vmatprep.subr.bf16.mxu0 0
    %1606 = vmatpush1.bf16.msra.mxu0 %v1588
    %1607 = vmatprep.subr.bf16.mxu0 0
    %1608 = vmatpush1.bf16.msra.mxu0 %v1589
    %1609 = vmatprep.subr.bf16.mxu0 0
    %1610 = vmatpush1.bf16.msra.mxu0 %v1590
    %1611 = vmatprep.subr.bf16.mxu0 0
    %1612 = vmatpush1.bf16.msra.mxu0 %v1591
    %1613 = vmatprep.subr.bf16.mxu0 0
    %1614 = vmatpush1.bf16.msra.mxu0 %v1592
    %1615 = vmatprep.subr.bf16.mxu0 0
    %1616 = vmatpush1.bf16.msra.mxu0 %v1593
    %1617 = vmatprep.subr.bf16.mxu0 0
    %1618 = vmatpush1.bf16.msra.mxu0 %v1594
    %1619 = vmatprep.subr.bf16.mxu0 0
    %1620 = vmatpush1.bf16.msra.mxu0 0
    %1621 = vmatprep.subr.bf16.mxu0 0
    %1622 = vmatpush1.bf16.msra.mxu0 0
    %1623 = vmatprep.subr.bf16.mxu0 0
    %1624 = vmatpush1.bf16.msra.mxu0 0
    %1625 = vmatprep.subr.bf16.mxu0 0
    %1626 = vmatpush1.bf16.msra.mxu0 0
    %1627 = vmatprep.subr.bf16.mxu0 0
    %1628 = vmatpush1.bf16.msra.mxu0 0
    %1629 = vmatprep.subr.bf16.mxu0 0
    %1630 = vmatpush1.bf16.msra.mxu0 0
    %1631 = vmatprep.subr.bf16.mxu0 0
    %1632 = vmatpush1.bf16.msra.mxu0 0
    %1633 = vmatprep.subr.bf16.mxu0 0
    %1634 = vmatpush1.bf16.msra.mxu0 0
    %1635 = vmatprep.mubr.bf16.mxu0 0
    %1636 = vmatmul.mubr.bf16.gmra.mrb[0].mxu0 %v1528
    %v1637 = vpop.f32.mrb[0].mxu0
    %v1638 = vadd.f32 %v1553, %v1637
    %v1639 = vpop.f32.mrb[0].mxu0
    %v1640 = vpop.f32.mrb[0].mxu0
    %v1641 = vadd.f32 %v1553, %v1640
    %v1642 = vpop.f32.mrb[0].mxu0
    %1643 = vmatprep.mubr.bf16.mxu0 0
    %1644 = vmatmul.mubr.bf16.gmra.mrb[0].mxu0 %v1529
    %v1645 = vpop.f32.mrb[0].mxu0
    %v1646 = vadd.f32 %v1553, %v1645
    %v1647 = vpop.f32.mrb[0].mxu0
    %v1648 = vpop.f32.mrb[0].mxu0
    %v1649 = vadd.f32 %v1553, %v1648
    %v1650 = vpop.f32.mrb[0].mxu0
    %1651 = vmatprep.mubr.bf16.mxu0 0
    %1652 = vmatmul.mubr.bf16.gmra.mrb[0].mxu0 %v1530
    %v1653 = vpop.f32.mrb[0].mxu0
    %v1654 = vadd.f32 %v1553, %v1653
    %v1655 = vpop.f32.mrb[0].mxu0
    %v1656 = vpop.f32.mrb[0].mxu0
    %v1657 = vadd.f32 %v1553, %v1656
    %v1658 = vpop.f32.mrb[0].mxu0
    %1659 = vmatprep.mubr.bf16.mxu0 0
    %1660 = vmatmul.mubr.bf16.gmra.mrb[0].mxu0 %v1531
    %v1661 = vpop.f32.mrb[0].mxu0
    %v1662 = vadd.f32 %v1553, %v1661
    %v1663 = vpop.f32.mrb[0].mxu0
    %v1664 = vpop.f32.mrb[0].mxu0
    %v1665 = vadd.f32 %v1553, %v1664
    %v1666 = vpop.f32.mrb[0].mxu0
    %1667 = vdwg.mxu0
    %v1668 = vadd.f32 %v1638, %v274
    %v1669 = vadd.f32 %v1641, %v278
    %v1670 = vadd.f32 %v1646, %v284
    %v1671 = vadd.f32 %v1649, %v288
    %v1672 = vadd.f32 %v1654, %v294
    %v1673 = vadd.f32 %v1657, %v298
    %v1674 = vadd.f32 %v1662, %v304
    %v1675 = vadd.f32 %v1665, %v308
    %1676 = vadd.xlane.f32.xlu0 %v1668
    %v1677 = vpop.xlane.xlu0 %1676
    %1678 = vadd.xlane.f32.xlu0 %v1669
    %v1679 = vpop.xlane.xlu0 %1678
    %1680 = vadd.xlane.f32.xlu0 %v1670
    %v1681 = vpop.xlane.xlu0 %1680
    %1682 = vadd.xlane.f32.xlu0 %v1671
    %v1683 = vpop.xlane.xlu0 %1682
    %1684 = vadd.xlane.f32.xlu0 %v1672
    %v1685 = vpop.xlane.xlu0 %1684
    %1686 = vadd.xlane.f32.xlu0 %v1673
    %v1687 = vpop.xlane.xlu0 %1686
    %1688 = vadd.xlane.f32.xlu0 %v1674
    %v1689 = vpop.xlane.xlu0 %1688
    %1690 = vadd.xlane.f32.xlu0 %v1675
    %v1691 = vpop.xlane.xlu0 %1690
    %v1692 = vrcp.pop 128.0
    %v1693 = vmul.f32 %v1677, %v1692
    %v1694 = vmul.f32 %v1679, %v1692
    %v1695 = vmul.f32 %v1681, %v1692
    %v1696 = vmul.f32 %v1683, %v1692
    %v1697 = vmul.f32 %v1685, %v1692
    %v1698 = vmul.f32 %v1687, %v1692
    %v1699 = vmul.f32 %v1689, %v1692
    %v1700 = vmul.f32 %v1691, %v1692
    %v1701 = vsub.f32 %v1668, %v1693
    %v1702 = vsub.f32 %v1669, %v1694
    %v1703 = vsub.f32 %v1670, %v1695
    %v1704 = vsub.f32 %v1671, %v1696
    %v1705 = vsub.f32 %v1672, %v1697
    %v1706 = vsub.f32 %v1673, %v1698
    %v1707 = vsub.f32 %v1674, %v1699
    %v1708 = vsub.f32 %v1675, %v1700
    %v1709 = vmul.f32 %v1701, %v1701
    %v1710 = vmul.f32 %v1702, %v1702
    %v1711 = vmul.f32 %v1703, %v1703
    %v1712 = vmul.f32 %v1704, %v1704
    %v1713 = vmul.f32 %v1705, %v1705
    %v1714 = vmul.f32 %v1706, %v1706
    %v1715 = vmul.f32 %v1707, %v1707
    %v1716 = vmul.f32 %v1708, %v1708
    %1717 = vadd.xlane.f32.xlu0 %v1709
    %v1718 = vpop.xlane.xlu0 %1717
    %1719 = vadd.xlane.f32.xlu0 %v1710
    %v1720 = vpop.xlane.xlu0 %1719
    %1721 = vadd.xlane.f32.xlu0 %v1711
    %v1722 = vpop.xlane.xlu0 %1721
    %1723 = vadd.xlane.f32.xlu0 %v1712
    %v1724 = vpop.xlane.xlu0 %1723
    %1725 = vadd.xlane.f32.xlu0 %v1713
    %v1726 = vpop.xlane.xlu0 %1725
    %1727 = vadd.xlane.f32.xlu0 %v1714
    %v1728 = vpop.xlane.xlu0 %1727
    %1729 = vadd.xlane.f32.xlu0 %v1715
    %v1730 = vpop.xlane.xlu0 %1729
    %1731 = vadd.xlane.f32.xlu0 %v1716
    %v1732 = vpop.xlane.xlu0 %1731
    %v1733 = vmul.f32 %v1718, %v1692
    %v1734 = vmul.f32 %v1720, %v1692
    %v1735 = vmul.f32 %v1722, %v1692
    %v1736 = vmul.f32 %v1724, %v1692
    %v1737 = vmul.f32 %v1726, %v1692
    %v1738 = vmul.f32 %v1728, %v1692
    %v1739 = vmul.f32 %v1730, %v1692
    %v1740 = vmul.f32 %v1732, %v1692
    %v1741 = vadd.f32 %v1733, 1e-05
    %v1742 = vadd.f32 %v1734, 1e-05
    %v1743 = vadd.f32 %v1735, 1e-05
    %v1744 = vadd.f32 %v1736, 1e-05
    %v1745 = vadd.f32 %v1737, 1e-05
    %v1746 = vadd.f32 %v1738, 1e-05
    %v1747 = vadd.f32 %v1739, 1e-05
    %v1748 = vadd.f32 %v1740, 1e-05
    %v1749 = vrsqrt.pop %v1741
    %v1750 = vrsqrt.pop %v1742
    %v1751 = vrsqrt.pop %v1743
    %v1752 = vrsqrt.pop %v1744
    %v1753 = vrsqrt.pop %v1745
    %v1754 = vrsqrt.pop %v1746
    %v1755 = vrsqrt.pop %v1747
    %v1756 = vrsqrt.pop %v1748
    %v1757 = vmul.f32 %v1701, %v1749
    %v1758 = vmul.f32 %v1702, %v1750
    %v1759 = vmul.f32 %v1703, %v1751
    %v1760 = vmul.f32 %v1704, %v1752
    %v1761 = vmul.f32 %v1705, %v1753
    %v1762 = vmul.f32 %v1706, %v1754
    %v1763 = vmul.f32 %v1707, %v1755
    %v1764 = vmul.f32 %v1708, %v1756
    %v1765 = vld [vmem:[%s6] sm:$0x1]
    %v1767 = vlaneseq
    %v1768 = vshrl.u32 %v1767, 7
    %v1769 = vsub.s32 0, %v1768
    %v1770 = vrot.slane %v1765, %v1769
    %v1772 = vmul.f32 %v1757, %v1770
    %v1773 = vmul.f32 %v1758, %v1770
    %v1774 = vmul.f32 %v1759, %v1770
    %v1775 = vmul.f32 %v1760, %v1770
    %v1776 = vmul.f32 %v1761, %v1770
    %v1777 = vmul.f32 %v1762, %v1770
    %v1778 = vmul.f32 %v1763, %v1770
    %v1779 = vmul.f32 %v1764, %v1770
    %v1780 = vld [vmem:[%s7] sm:$0x1]
    %v1782 = vlaneseq
    %v1783 = vshrl.u32 %v1782, 7
    %v1784 = vsub.s32 0, %v1783
    %v1785 = vrot.slane %v1780, %v1784
    %v1787 = vadd.f32 %v1772, %v1785
    %v1788 = vadd.f32 %v1773, %v1785
    %v1789 = vadd.f32 %v1774, %v1785
    %v1790 = vadd.f32 %v1775, %v1785
    %v1791 = vadd.f32 %v1776, %v1785
    %v1792 = vadd.f32 %v1777, %v1785
    %v1793 = vadd.f32 %v1778, %v1785
    %v1794 = vadd.f32 %v1779, %v1785
    %v1795 = vpack.c.bf16 %v1788, %v1787
    %v1796 = vpack.c.bf16 %v1790, %v1789
    %v1797 = vpack.c.bf16 %v1792, %v1791
    %v1798 = vpack.c.bf16 %v1794, %v1793
    %v1803 = vunpack.c.l.b16 %v1795
    %v1804 = vunpack.c.h.b16 %v1795
    %v1805 = vunpack.c.l.b16 %v1796
    %v1806 = vunpack.c.h.b16 %v1796
    %v1807 = vunpack.c.l.b16 %v1797
    %v1808 = vunpack.c.h.b16 %v1797
    %v1809 = vunpack.c.l.b16 %v1798
    %v1810 = vunpack.c.h.b16 %v1798
    %v1811 = vpack.c.b16 %v1803, %v1803
    %v1812 = vpack.c.b16 %v1804, %v1804
    %v1813 = vpack.c.b16 %v1805, %v1805
    %v1814 = vpack.c.b16 %v1806, %v1806
    %v1815 = vpack.c.b16 %v1807, %v1807
    %v1816 = vpack.c.b16 %v1808, %v1808
    %v1817 = vpack.c.b16 %v1809, %v1809
    %v1818 = vpack.c.b16 %v1810, %v1810
    %v1827 = vld [vmem:[#allocation11] sm:$0xff]
    %v1828 = vld [vmem:[#allocation11 + $0x8] sm:$0xff]
    %v1829 = vld [vmem:[#allocation11 + $0x10] sm:$0xff]
    %v1830 = vld [vmem:[#allocation11 + $0x18] sm:$0xff]
    %v1831 = vld [vmem:[#allocation11 + $0x20] sm:$0xff]
    %v1832 = vld [vmem:[#allocation11 + $0x28] sm:$0xff]
    %v1833 = vld [vmem:[#allocation11 + $0x30] sm:$0xff]
    %v1834 = vld [vmem:[#allocation11 + $0x38] sm:$0xff]
    %v1835 = vld [vmem:[#allocation11 + $0x40] sm:$0xff]
    %v1836 = vld [vmem:[#allocation11 + $0x48] sm:$0xff]
    %v1837 = vld [vmem:[#allocation11 + $0x50] sm:$0xff]
    %v1838 = vld [vmem:[#allocation11 + $0x58] sm:$0xff]
    %v1839 = vld [vmem:[#allocation11 + $0x60] sm:$0xff]
    %v1840 = vld [vmem:[#allocation11 + $0x68] sm:$0xff]
    %v1841 = vld [vmem:[#allocation11 + $0x70] sm:$0xff]
    %v1842 = vld [vmem:[#allocation11 + $0x78] sm:$0xff]
    %v1843 = vld [vmem:[#allocation11 + $0x80] sm:$0xff]
    %v1844 = vld [vmem:[#allocation11 + $0x88] sm:$0xff]
    %v1845 = vld [vmem:[#allocation11 + $0x90] sm:$0xff]
    %v1846 = vld [vmem:[#allocation11 + $0x98] sm:$0xff]
    %v1847 = vld [vmem:[#allocation11 + $0xa0] sm:$0xff]
    %v1848 = vld [vmem:[#allocation11 + $0xa8] sm:$0xff]
    %v1849 = vld [vmem:[#allocation11 + $0xb0] sm:$0xff]
    %v1850 = vld [vmem:[#allocation11 + $0xb8] sm:$0xff]
    %v1851 = vld [vmem:[#allocation11 + $0xc0] sm:$0xff]
    %v1852 = vld [vmem:[#allocation11 + $0xc8] sm:$0xff]
    %v1853 = vld [vmem:[#allocation11 + $0xd0] sm:$0xff]
    %v1854 = vld [vmem:[#allocation11 + $0xd8] sm:$0xff]
    %v1855 = vld [vmem:[#allocation11 + $0xe0] sm:$0xff]
    %v1856 = vld [vmem:[#allocation11 + $0xe8] sm:$0xff]
    %v1857 = vld [vmem:[#allocation11 + $0xf0] sm:$0xff]
    %v1858 = vld [vmem:[#allocation11 + $0xf8] sm:$0xff]
    %v1859 = vld [vmem:[#allocation11 + $0x100] sm:$0xff]
    %v1860 = vld [vmem:[#allocation11 + $0x108] sm:$0xff]
    %v1861 = vld [vmem:[#allocation11 + $0x110] sm:$0xff]
    %v1862 = vld [vmem:[#allocation11 + $0x118] sm:$0xff]
    %v1863 = vld [vmem:[#allocation11 + $0x120] sm:$0xff]
    %v1864 = vld [vmem:[#allocation11 + $0x128] sm:$0xff]
    %v1865 = vld [vmem:[#allocation11 + $0x130] sm:$0xff]
    %v1866 = vld [vmem:[#allocation11 + $0x138] sm:$0xff]
    %v1867 = vld [vmem:[#allocation11 + $0x140] sm:$0xff]
    %v1868 = vld [vmem:[#allocation11 + $0x148] sm:$0xff]
    %v1869 = vld [vmem:[#allocation11 + $0x150] sm:$0xff]
    %v1870 = vld [vmem:[#allocation11 + $0x158] sm:$0xff]
    %v1871 = vld [vmem:[#allocation11 + $0x160] sm:$0xff]
    %v1872 = vld [vmem:[#allocation11 + $0x168] sm:$0xff]
    %v1873 = vld [vmem:[#allocation11 + $0x170] sm:$0xff]
    %v1874 = vld [vmem:[#allocation11 + $0x178] sm:$0xff]
    %v1875 = vld [vmem:[#allocation11 + $0x180] sm:$0xff]
    %v1876 = vld [vmem:[#allocation11 + $0x188] sm:$0xff]
    %v1877 = vld [vmem:[#allocation11 + $0x190] sm:$0xff]
    %v1878 = vld [vmem:[#allocation11 + $0x198] sm:$0xff]
    %v1879 = vld [vmem:[#allocation11 + $0x1a0] sm:$0xff]
    %v1880 = vld [vmem:[#allocation11 + $0x1a8] sm:$0xff]
    %v1881 = vld [vmem:[#allocation11 + $0x1b0] sm:$0xff]
    %v1882 = vld [vmem:[#allocation11 + $0x1b8] sm:$0xff]
    %v1883 = vld [vmem:[#allocation11 + $0x1c0] sm:$0xff]
    %v1884 = vld [vmem:[#allocation11 + $0x1c8] sm:$0xff]
    %v1885 = vld [vmem:[#allocation11 + $0x1d0] sm:$0xff]
    %v1886 = vld [vmem:[#allocation11 + $0x1d8] sm:$0xff]
    %v1887 = vld [vmem:[#allocation11 + $0x1e0] sm:$0xff]
    %v1888 = vld [vmem:[#allocation11 + $0x1e8] sm:$0xff]
    %v1889 = vld [vmem:[#allocation11 + $0x1f0] sm:$0xff]
    %v1890 = vld [vmem:[#allocation11 + $0x1f8] sm:$0xff]
    %v1923 = vunpack.c.l.b16 %v1859
    %v1924 = vunpack.c.h.b16 %v1859
    %v1925 = vunpack.c.l.b16 %v1860
    %v1926 = vunpack.c.h.b16 %v1860
    %v1927 = vunpack.c.l.b16 %v1861
    %v1928 = vunpack.c.h.b16 %v1861
    %v1929 = vunpack.c.l.b16 %v1862
    %v1930 = vunpack.c.h.b16 %v1862
    %v1931 = vunpack.c.l.b16 %v1863
    %v1932 = vunpack.c.h.b16 %v1863
    %v1933 = vunpack.c.l.b16 %v1864
    %v1934 = vunpack.c.h.b16 %v1864
    %v1935 = vunpack.c.l.b16 %v1865
    %v1936 = vunpack.c.h.b16 %v1865
    %v1937 = vunpack.c.l.b16 %v1866
    %v1938 = vunpack.c.h.b16 %v1866
    %v1939 = vunpack.c.l.b16 %v1867
    %v1940 = vunpack.c.h.b16 %v1867
    %v1941 = vunpack.c.l.b16 %v1868
    %v1942 = vunpack.c.h.b16 %v1868
    %v1943 = vunpack.c.l.b16 %v1869
    %v1944 = vunpack.c.h.b16 %v1869
    %v1945 = vunpack.c.l.b16 %v1870
    %v1946 = vunpack.c.h.b16 %v1870
    %v1947 = vunpack.c.l.b16 %v1871
    %v1948 = vunpack.c.h.b16 %v1871
    %v1949 = vunpack.c.l.b16 %v1872
    %v1950 = vunpack.c.h.b16 %v1872
    %v1951 = vunpack.c.l.b16 %v1873
    %v1952 = vunpack.c.h.b16 %v1873
    %v1953 = vunpack.c.l.b16 %v1874
    %v1954 = vunpack.c.h.b16 %v1874
    %v1955 = vunpack.c.l.b16 %v1875
    %v1956 = vunpack.c.h.b16 %v1875
    %v1957 = vunpack.c.l.b16 %v1876
    %v1958 = vunpack.c.h.b16 %v1876
    %v1959 = vunpack.c.l.b16 %v1877
    %v1960 = vunpack.c.h.b16 %v1877
    %v1961 = vunpack.c.l.b16 %v1878
    %v1962 = vunpack.c.h.b16 %v1878
    %v1963 = vunpack.c.l.b16 %v1879
    %v1964 = vunpack.c.h.b16 %v1879
    %v1965 = vunpack.c.l.b16 %v1880
    %v1966 = vunpack.c.h.b16 %v1880
    %v1967 = vunpack.c.l.b16 %v1881
    %v1968 = vunpack.c.h.b16 %v1881
    %v1969 = vunpack.c.l.b16 %v1882
    %v1970 = vunpack.c.h.b16 %v1882
    %v1971 = vunpack.c.l.b16 %v1883
    %v1972 = vunpack.c.h.b16 %v1883
    %v1973 = vunpack.c.l.b16 %v1884
    %v1974 = vunpack.c.h.b16 %v1884
    %v1975 = vunpack.c.l.b16 %v1885
    %v1976 = vunpack.c.h.b16 %v1885
    %v1977 = vunpack.c.l.b16 %v1886
    %v1978 = vunpack.c.h.b16 %v1886
    %v1979 = vunpack.c.l.b16 %v1887
    %v1980 = vunpack.c.h.b16 %v1887
    %v1981 = vunpack.c.l.b16 %v1888
    %v1982 = vunpack.c.h.b16 %v1888
    %v1983 = vunpack.c.l.b16 %v1889
    %v1984 = vunpack.c.h.b16 %v1889
    %v1985 = vunpack.c.l.b16 %v1890
    %v1986 = vunpack.c.h.b16 %v1890
    %v1987 = vpack.c.b16 %v1927, %v1923
    %v1988 = vpack.c.b16 %v1928, %v1924
    %v1989 = vpack.c.b16 %v1929, %v1925
    %v1990 = vpack.c.b16 %v1930, %v1926
    %v1991 = vpack.c.b16 %v1935, %v1931
    %v1992 = vpack.c.b16 %v1936, %v1932
    %v1993 = vpack.c.b16 %v1937, %v1933
    %v1994 = vpack.c.b16 %v1938, %v1934
    %v1995 = vpack.c.b16 %v1943, %v1939
    %v1996 = vpack.c.b16 %v1944, %v1940
    %v1997 = vpack.c.b16 %v1945, %v1941
    %v1998 = vpack.c.b16 %v1946, %v1942
    %v1999 = vpack.c.b16 %v1951, %v1947
    %v2000 = vpack.c.b16 %v1952, %v1948
    %v2001 = vpack.c.b16 %v1953, %v1949
    %v2002 = vpack.c.b16 %v1954, %v1950
    %v2003 = vpack.c.b16 %v1959, %v1955
    %v2004 = vpack.c.b16 %v1960, %v1956
    %v2005 = vpack.c.b16 %v1961, %v1957
    %v2006 = vpack.c.b16 %v1962, %v1958
    %v2007 = vpack.c.b16 %v1967, %v1963
    %v2008 = vpack.c.b16 %v1968, %v1964
    %v2009 = vpack.c.b16 %v1969, %v1965
    %v2010 = vpack.c.b16 %v1970, %v1966
    %v2011 = vpack.c.b16 %v1975, %v1971
    %v2012 = vpack.c.b16 %v1976, %v1972
    %v2013 = vpack.c.b16 %v1977, %v1973
    %v2014 = vpack.c.b16 %v1978, %v1974
    %v2015 = vpack.c.b16 %v1983, %v1979
    %v2016 = vpack.c.b16 %v1984, %v1980
    %v2017 = vpack.c.b16 %v1985, %v1981
    %v2018 = vpack.c.b16 %v1986, %v1982
    %2051 = vmatprep.subr.bf16.mxu0 %v1988
    %2052 = vmatpush1.bf16.msra.mxu0 %v1987
    %2053 = vmatprep.subr.bf16.mxu0 %v1992
    %2054 = vmatpush1.bf16.msra.mxu0 %v1991
    %2055 = vmatprep.subr.bf16.mxu0 %v1996
    %2056 = vmatpush1.bf16.msra.mxu0 %v1995
    %2057 = vmatprep.subr.bf16.mxu0 %v2000
    %2058 = vmatpush1.bf16.msra.mxu0 %v1999
    %2059 = vmatprep.subr.bf16.mxu0 %v2004
    %2060 = vmatpush1.bf16.msra.mxu0 %v2003
    %2061 = vmatprep.subr.bf16.mxu0 %v2008
    %2062 = vmatpush1.bf16.msra.mxu0 %v2007
    %2063 = vmatprep.subr.bf16.mxu0 %v2012
    %2064 = vmatpush1.bf16.msra.mxu0 %v2011
    %2065 = vmatprep.subr.bf16.mxu0 %v2016
    %2066 = vmatpush1.bf16.msra.mxu0 %v2015
    %2067 = vmatprep.subr.bf16.mxu0 0
    %2068 = vmatpush1.bf16.msra.mxu0 0
    %2069 = vmatprep.subr.bf16.mxu0 0
    %2070 = vmatpush1.bf16.msra.mxu0 0
    %2071 = vmatprep.subr.bf16.mxu0 0
    %2072 = vmatpush1.bf16.msra.mxu0 0
    %2073 = vmatprep.subr.bf16.mxu0 0
    %2074 = vmatpush1.bf16.msra.mxu0 0
    %2075 = vmatprep.subr.bf16.mxu0 0
    %2076 = vmatpush1.bf16.msra.mxu0 0
    %2077 = vmatprep.subr.bf16.mxu0 0
    %2078 = vmatpush1.bf16.msra.mxu0 0
    %2079 = vmatprep.subr.bf16.mxu0 0
    %2080 = vmatpush1.bf16.msra.mxu0 0
    %2081 = vmatprep.subr.bf16.mxu0 0
    %2082 = vmatpush1.bf16.msra.mxu0 0
    %2083 = vmatprep.mubr.bf16.mxu0 0
    %2084 = vmatmul.mubr.bf16.gmra.mrb[0].mxu0 %v1812
    %v2085 = vpop.f32.mrb[0].mxu0
    %v2086 = vadd.f32 0.0, %v2085
    %v2087 = vpop.f32.mrb[0].mxu0
    %v2088 = vadd.f32 0.0, %v2087
    %v2089 = vpop.f32.mrb[0].mxu0
    %v2090 = vpop.f32.mrb[0].mxu0
    %2091 = vdwg.mxu0
    %2092 = vmatprep.subr.bf16.mxu0 %v1990
    %2093 = vmatpush1.bf16.msra.mxu0 %v1989
    %2094 = vmatprep.subr.bf16.mxu0 %v1994
    %2095 = vmatpush1.bf16.msra.mxu0 %v1993
    %2096 = vmatprep.subr.bf16.mxu0 %v1998
    %2097 = vmatpush1.bf16.msra.mxu0 %v1997
    %2098 = vmatprep.subr.bf16.mxu0 %v2002
    %2099 = vmatpush1.bf16.msra.mxu0 %v2001
    %2100 = vmatprep.subr.bf16.mxu0 %v2006
    %2101 = vmatpush1.bf16.msra.mxu0 %v2005
    %2102 = vmatprep.subr.bf16.mxu0 %v2010
    %2103 = vmatpush1.bf16.msra.mxu0 %v2009
    %2104 = vmatprep.subr.bf16.mxu0 %v2014
    %2105 = vmatpush1.bf16.msra.mxu0 %v2013
    %2106 = vmatprep.subr.bf16.mxu0 %v2018
    %2107 = vmatpush1.bf16.msra.mxu0 %v2017
    %2108 = vmatprep.subr.bf16.mxu0 0
    %2109 = vmatpush1.bf16.msra.mxu0 0
    %2110 = vmatprep.subr.bf16.mxu0 0
    %2111 = vmatpush1.bf16.msra.mxu0 0
    %2112 = vmatprep.subr.bf16.mxu0 0
    %2113 = vmatpush1.bf16.msra.mxu0 0
    %2114 = vmatprep.subr.bf16.mxu0 0
    %2115 = vmatpush1.bf16.msra.mxu0 0
    %2116 = vmatprep.subr.bf16.mxu0 0
    %2117 = vmatpush1.bf16.msra.mxu0 0
    %2118 = vmatprep.subr.bf16.mxu0 0
    %2119 = vmatpush1.bf16.msra.mxu0 0
    %2120 = vmatprep.subr.bf16.mxu0 0
    %2121 = vmatpush1.bf16.msra.mxu0 0
    %2122 = vmatprep.subr.bf16.mxu0 0
    %2123 = vmatpush1.bf16.msra.mxu0 0
    %2124 = vmatprep.mubr.bf16.mxu0 0
    %2125 = vmatmul.mubr.bf16.gmra.mrb[0].mxu0 %v1812
    %v2126 = vpop.f32.mrb[0].mxu0
    %v2127 = vadd.f32 0.0, %v2126
    %v2128 = vpop.f32.mrb[0].mxu0
    %v2129 = vadd.f32 0.0, %v2128
    %v2130 = vpop.f32.mrb[0].mxu0
    %v2131 = vpop.f32.mrb[0].mxu0
    %2132 = vdwg.mxu0
    %v2165 = vunpack.c.l.b16 %v1827
    %v2166 = vunpack.c.h.b16 %v1827
    %v2167 = vunpack.c.l.b16 %v1828
    %v2168 = vunpack.c.h.b16 %v1828
    %v2169 = vunpack.c.l.b16 %v1829
    %v2170 = vunpack.c.h.b16 %v1829
    %v2171 = vunpack.c.l.b16 %v1830
    %v2172 = vunpack.c.h.b16 %v1830
    %v2173 = vunpack.c.l.b16 %v1831
    %v2174 = vunpack.c.h.b16 %v1831
    %v2175 = vunpack.c.l.b16 %v1832
    %v2176 = vunpack.c.h.b16 %v1832
    %v2177 = vunpack.c.l.b16 %v1833
    %v2178 = vunpack.c.h.b16 %v1833
    %v2179 = vunpack.c.l.b16 %v1834
    %v2180 = vunpack.c.h.b16 %v1834
    %v2181 = vunpack.c.l.b16 %v1835
    %v2182 = vunpack.c.h.b16 %v1835
    %v2183 = vunpack.c.l.b16 %v1836
    %v2184 = vunpack.c.h.b16 %v1836
    %v2185 = vunpack.c.l.b16 %v1837
    %v2186 = vunpack.c.h.b16 %v1837
    %v2187 = vunpack.c.l.b16 %v1838
    %v2188 = vunpack.c.h.b16 %v1838
    %v2189 = vunpack.c.l.b16 %v1839
    %v2190 = vunpack.c.h.b16 %v1839
    %v2191 = vunpack.c.l.b16 %v1840
    %v2192 = vunpack.c.h.b16 %v1840
    %v2193 = vunpack.c.l.b16 %v1841
    %v2194 = vunpack.c.h.b16 %v1841
    %v2195 = vunpack.c.l.b16 %v1842
    %v2196 = vunpack.c.h.b16 %v1842
    %v2197 = vunpack.c.l.b16 %v1843
    %v2198 = vunpack.c.h.b16 %v1843
    %v2199 = vunpack.c.l.b16 %v1844
    %v2200 = vunpack.c.h.b16 %v1844
    %v2201 = vunpack.c.l.b16 %v1845
    %v2202 = vunpack.c.h.b16 %v1845
    %v2203 = vunpack.c.l.b16 %v1846
    %v2204 = vunpack.c.h.b16 %v1846
    %v2205 = vunpack.c.l.b16 %v1847
    %v2206 = vunpack.c.h.b16 %v1847
    %v2207 = vunpack.c.l.b16 %v1848
    %v2208 = vunpack.c.h.b16 %v1848
    %v2209 = vunpack.c.l.b16 %v1849
    %v2210 = vunpack.c.h.b16 %v1849
    %v2211 = vunpack.c.l.b16 %v1850
    %v2212 = vunpack.c.h.b16 %v1850
    %v2213 = vunpack.c.l.b16 %v1851
    %v2214 = vunpack.c.h.b16 %v1851
    %v2215 = vunpack.c.l.b16 %v1852
    %v2216 = vunpack.c.h.b16 %v1852
    %v2217 = vunpack.c.l.b16 %v1853
    %v2218 = vunpack.c.h.b16 %v1853
    %v2219 = vunpack.c.l.b16 %v1854
    %v2220 = vunpack.c.h.b16 %v1854
    %v2221 = vunpack.c.l.b16 %v1855
    %v2222 = vunpack.c.h.b16 %v1855
    %v2223 = vunpack.c.l.b16 %v1856
    %v2224 = vunpack.c.h.b16 %v1856
    %v2225 = vunpack.c.l.b16 %v1857
    %v2226 = vunpack.c.h.b16 %v1857
    %v2227 = vunpack.c.l.b16 %v1858
    %v2228 = vunpack.c.h.b16 %v1858
    %v2229 = vpack.c.b16 %v2169, %v2165
    %v2230 = vpack.c.b16 %v2170, %v2166
    %v2231 = vpack.c.b16 %v2171, %v2167
    %v2232 = vpack.c.b16 %v2172, %v2168
    %v2233 = vpack.c.b16 %v2177, %v2173
    %v2234 = vpack.c.b16 %v2178, %v2174
    %v2235 = vpack.c.b16 %v2179, %v2175
    %v2236 = vpack.c.b16 %v2180, %v2176
    %v2237 = vpack.c.b16 %v2185, %v2181
    %v2238 = vpack.c.b16 %v2186, %v2182
    %v2239 = vpack.c.b16 %v2187, %v2183
    %v2240 = vpack.c.b16 %v2188, %v2184
    %v2241 = vpack.c.b16 %v2193, %v2189
    %v2242 = vpack.c.b16 %v2194, %v2190
    %v2243 = vpack.c.b16 %v2195, %v2191
    %v2244 = vpack.c.b16 %v2196, %v2192
    %v2245 = vpack.c.b16 %v2201, %v2197
    %v2246 = vpack.c.b16 %v2202, %v2198
    %v2247 = vpack.c.b16 %v2203, %v2199
    %v2248 = vpack.c.b16 %v2204, %v2200
    %v2249 = vpack.c.b16 %v2209, %v2205
    %v2250 = vpack.c.b16 %v2210, %v2206
    %v2251 = vpack.c.b16 %v2211, %v2207
    %v2252 = vpack.c.b16 %v2212, %v2208
    %v2253 = vpack.c.b16 %v2217, %v2213
    %v2254 = vpack.c.b16 %v2218, %v2214
    %v2255 = vpack.c.b16 %v2219, %v2215
    %v2256 = vpack.c.b16 %v2220, %v2216
    %v2257 = vpack.c.b16 %v2225, %v2221
    %v2258 = vpack.c.b16 %v2226, %v2222
    %v2259 = vpack.c.b16 %v2227, %v2223
    %v2260 = vpack.c.b16 %v2228, %v2224
    %2293 = vmatprep.subr.bf16.mxu0 %v2230
    %2294 = vmatpush1.bf16.msra.mxu0 %v2229
    %2295 = vmatprep.subr.bf16.mxu0 %v2234
    %2296 = vmatpush1.bf16.msra.mxu0 %v2233
    %2297 = vmatprep.subr.bf16.mxu0 %v2238
    %2298 = vmatpush1.bf16.msra.mxu0 %v2237
    %2299 = vmatprep.subr.bf16.mxu0 %v2242
    %2300 = vmatpush1.bf16.msra.mxu0 %v2241
    %2301 = vmatprep.subr.bf16.mxu0 %v2246
    %2302 = vmatpush1.bf16.msra.mxu0 %v2245
    %2303 = vmatprep.subr.bf16.mxu0 %v2250
    %2304 = vmatpush1.bf16.msra.mxu0 %v2249
    %2305 = vmatprep.subr.bf16.mxu0 %v2254
    %2306 = vmatpush1.bf16.msra.mxu0 %v2253
    %2307 = vmatprep.subr.bf16.mxu0 %v2258
    %2308 = vmatpush1.bf16.msra.mxu0 %v2257
    %2309 = vmatprep.subr.bf16.mxu0 0
    %2310 = vmatpush1.bf16.msra.mxu0 0
    %2311 = vmatprep.subr.bf16.mxu0 0
    %2312 = vmatpush1.bf16.msra.mxu0 0
    %2313 = vmatprep.subr.bf16.mxu0 0
    %2314 = vmatpush1.bf16.msra.mxu0 0
    %2315 = vmatprep.subr.bf16.mxu0 0
    %2316 = vmatpush1.bf16.msra.mxu0 0
    %2317 = vmatprep.subr.bf16.mxu0 0
    %2318 = vmatpush1.bf16.msra.mxu0 0
    %2319 = vmatprep.subr.bf16.mxu0 0
    %2320 = vmatpush1.bf16.msra.mxu0 0
    %2321 = vmatprep.subr.bf16.mxu0 0
    %2322 = vmatpush1.bf16.msra.mxu0 0
    %2323 = vmatprep.subr.bf16.mxu0 0
    %2324 = vmatpush1.bf16.msra.mxu0 0
    %2325 = vmatprep.mubr.bf16.mxu0 0
    %2326 = vmatmul.mubr.bf16.gmra.mrb[0].mxu0 %v1811
    %v2327 = vpop.f32.mrb[0].mxu0
    %v2328 = vadd.f32 %v2086, %v2327
    %v2329 = vpop.f32.mrb[0].mxu0
    %v2330 = vadd.f32 %v2088, %v2329
    %v2331 = vpop.f32.mrb[0].mxu0
    %v2332 = vpop.f32.mrb[0].mxu0
    %2333 = vdwg.mxu0
    %2334 = vmatprep.subr.bf16.mxu0 %v2232
    %2335 = vmatpush1.bf16.msra.mxu0 %v2231
    %2336 = vmatprep.subr.bf16.mxu0 %v2236
    %2337 = vmatpush1.bf16.msra.mxu0 %v2235
    %2338 = vmatprep.subr.bf16.mxu0 %v2240
    %2339 = vmatpush1.bf16.msra.mxu0 %v2239
    %2340 = vmatprep.subr.bf16.mxu0 %v2244
    %2341 = vmatpush1.bf16.msra.mxu0 %v2243
    %2342 = vmatprep.subr.bf16.mxu0 %v2248
    %2343 = vmatpush1.bf16.msra.mxu0 %v2247
    %2344 = vmatprep.subr.bf16.mxu0 %v2252
    %2345 = vmatpush1.bf16.msra.mxu0 %v2251
    %2346 = vmatprep.subr.bf16.mxu0 %v2256
    %2347 = vmatpush1.bf16.msra.mxu0 %v2255
    %2348 = vmatprep.subr.bf16.mxu0 %v2260
    %2349 = vmatpush1.bf16.msra.mxu0 %v2259
    %2350 = vmatprep.subr.bf16.mxu0 0
    %2351 = vmatpush1.bf16.msra.mxu0 0
    %2352 = vmatprep.subr.bf16.mxu0 0
    %2353 = vmatpush1.bf16.msra.mxu0 0
    %2354 = vmatprep.subr.bf16.mxu0 0
    %2355 = vmatpush1.bf16.msra.mxu0 0
    %2356 = vmatprep.subr.bf16.mxu0 0
    %2357 = vmatpush1.bf16.msra.mxu0 0
    %2358 = vmatprep.subr.bf16.mxu0 0
    %2359 = vmatpush1.bf16.msra.mxu0 0
    %2360 = vmatprep.subr.bf16.mxu0 0
    %2361 = vmatpush1.bf16.msra.mxu0 0
    %2362 = vmatprep.subr.bf16.mxu0 0
    %2363 = vmatpush1.bf16.msra.mxu0 0
    %2364 = vmatprep.subr.bf16.mxu0 0
    %2365 = vmatpush1.bf16.msra.mxu0 0
    %2366 = vmatprep.mubr.bf16.mxu0 0
    %2367 = vmatmul.mubr.bf16.gmra.mrb[0].mxu0 %v1811
    %v2368 = vpop.f32.mrb[0].mxu0
    %v2369 = vadd.f32 %v2127, %v2368
    %v2370 = vpop.f32.mrb[0].mxu0
    %v2371 = vadd.f32 %v2129, %v2370
    %v2372 = vpop.f32.mrb[0].mxu0
    %v2373 = vpop.f32.mrb[0].mxu0
    %2374 = vdwg.mxu0
    %v2375 = vld [vmem:[#allocation11 + $0x200] sm:$0xff]
    %v2376 = vld [vmem:[#allocation11 + $0x208] sm:$0xff]
    %v2377 = vld [vmem:[#allocation11 + $0x210] sm:$0xff]
    %v2378 = vld [vmem:[#allocation11 + $0x218] sm:$0xff]
    %v2379 = vld [vmem:[#allocation11 + $0x220] sm:$0xff]
    %v2380 = vld [vmem:[#allocation11 + $0x228] sm:$0xff]
    %v2381 = vld [vmem:[#allocation11 + $0x230] sm:$0xff]
    %v2382 = vld [vmem:[#allocation11 + $0x238] sm:$0xff]
    %v2383 = vld [vmem:[#allocation11 + $0x240] sm:$0xff]
    %v2384 = vld [vmem:[#allocation11 + $0x248] sm:$0xff]
    %v2385 = vld [vmem:[#allocation11 + $0x250] sm:$0xff]
    %v2386 = vld [vmem:[#allocation11 + $0x258] sm:$0xff]
    %v2387 = vld [vmem:[#allocation11 + $0x260] sm:$0xff]
    %v2388 = vld [vmem:[#allocation11 + $0x268] sm:$0xff]
    %v2389 = vld [vmem:[#allocation11 + $0x270] sm:$0xff]
    %v2390 = vld [vmem:[#allocation11 + $0x278] sm:$0xff]
    %v2391 = vld [vmem:[#allocation11 + $0x280] sm:$0xff]
    %v2392 = vld [vmem:[#allocation11 + $0x288] sm:$0xff]
    %v2393 = vld [vmem:[#allocation11 + $0x290] sm:$0xff]
    %v2394 = vld [vmem:[#allocation11 + $0x298] sm:$0xff]
    %v2395 = vld [vmem:[#allocation11 + $0x2a0] sm:$0xff]
    %v2396 = vld [vmem:[#allocation11 + $0x2a8] sm:$0xff]
    %v2397 = vld [vmem:[#allocation11 + $0x2b0] sm:$0xff]
    %v2398 = vld [vmem:[#allocation11 + $0x2b8] sm:$0xff]
    %v2399 = vld [vmem:[#allocation11 + $0x2c0] sm:$0xff]
    %v2400 = vld [vmem:[#allocation11 + $0x2c8] sm:$0xff]
    %v2401 = vld [vmem:[#allocation11 + $0x2d0] sm:$0xff]
    %v2402 = vld [vmem:[#allocation11 + $0x2d8] sm:$0xff]
    %v2403 = vld [vmem:[#allocation11 + $0x2e0] sm:$0xff]
    %v2404 = vld [vmem:[#allocation11 + $0x2e8] sm:$0xff]
    %v2405 = vld [vmem:[#allocation11 + $0x2f0] sm:$0xff]
    %v2406 = vld [vmem:[#allocation11 + $0x2f8] sm:$0xff]
    %v2439 = vunpack.c.l.b16 %v2375
    %v2440 = vunpack.c.h.b16 %v2375
    %v2441 = vunpack.c.l.b16 %v2376
    %v2442 = vunpack.c.h.b16 %v2376
    %v2443 = vunpack.c.l.b16 %v2377
    %v2444 = vunpack.c.h.b16 %v2377
    %v2445 = vunpack.c.l.b16 %v2378
    %v2446 = vunpack.c.h.b16 %v2378
    %v2447 = vunpack.c.l.b16 %v2379
    %v2448 = vunpack.c.h.b16 %v2379
    %v2449 = vunpack.c.l.b16 %v2380
    %v2450 = vunpack.c.h.b16 %v2380
    %v2451 = vunpack.c.l.b16 %v2381
    %v2452 = vunpack.c.h.b16 %v2381
    %v2453 = vunpack.c.l.b16 %v2382
    %v2454 = vunpack.c.h.b16 %v2382
    %v2455 = vunpack.c.l.b16 %v2383
    %v2456 = vunpack.c.h.b16 %v2383
    %v2457 = vunpack.c.l.b16 %v2384
    %v2458 = vunpack.c.h.b16 %v2384
    %v2459 = vunpack.c.l.b16 %v2385
    %v2460 = vunpack.c.h.b16 %v2385
    %v2461 = vunpack.c.l.b16 %v2386
    %v2462 = vunpack.c.h.b16 %v2386
    %v2463 = vunpack.c.l.b16 %v2387
    %v2464 = vunpack.c.h.b16 %v2387
    %v2465 = vunpack.c.l.b16 %v2388
    %v2466 = vunpack.c.h.b16 %v2388
    %v2467 = vunpack.c.l.b16 %v2389
    %v2468 = vunpack.c.h.b16 %v2389
    %v2469 = vunpack.c.l.b16 %v2390
    %v2470 = vunpack.c.h.b16 %v2390
    %v2471 = vunpack.c.l.b16 %v2391
    %v2472 = vunpack.c.h.b16 %v2391
    %v2473 = vunpack.c.l.b16 %v2392
    %v2474 = vunpack.c.h.b16 %v2392
    %v2475 = vunpack.c.l.b16 %v2393
    %v2476 = vunpack.c.h.b16 %v2393
    %v2477 = vunpack.c.l.b16 %v2394
    %v2478 = vunpack.c.h.b16 %v2394
    %v2479 = vunpack.c.l.b16 %v2395
    %v2480 = vunpack.c.h.b16 %v2395
    %v2481 = vunpack.c.l.b16 %v2396
    %v2482 = vunpack.c.h.b16 %v2396
    %v2483 = vunpack.c.l.b16 %v2397
    %v2484 = vunpack.c.h.b16 %v2397
    %v2485 = vunpack.c.l.b16 %v2398
    %v2486 = vunpack.c.h.b16 %v2398
    %v2487 = vunpack.c.l.b16 %v2399
    %v2488 = vunpack.c.h.b16 %v2399
    %v2489 = vunpack.c.l.b16 %v2400
    %v2490 = vunpack.c.h.b16 %v2400
    %v2491 = vunpack.c.l.b16 %v2401
    %v2492 = vunpack.c.h.b16 %v2401
    %v2493 = vunpack.c.l.b16 %v2402
    %v2494 = vunpack.c.h.b16 %v2402
    %v2495 = vunpack.c.l.b16 %v2403
    %v2496 = vunpack.c.h.b16 %v2403
    %v2497 = vunpack.c.l.b16 %v2404
    %v2498 = vunpack.c.h.b16 %v2404
    %v2499 = vunpack.c.l.b16 %v2405
    %v2500 = vunpack.c.h.b16 %v2405
    %v2501 = vunpack.c.l.b16 %v2406
    %v2502 = vunpack.c.h.b16 %v2406
    %v2503 = vpack.c.b16 %v2443, %v2439
    %v2504 = vpack.c.b16 %v2444, %v2440
    %v2505 = vpack.c.b16 %v2445, %v2441
    %v2506 = vpack.c.b16 %v2446, %v2442
    %v2507 = vpack.c.b16 %v2451, %v2447
    %v2508 = vpack.c.b16 %v2452, %v2448
    %v2509 = vpack.c.b16 %v2453, %v2449
    %v2510 = vpack.c.b16 %v2454, %v2450
    %v2511 = vpack.c.b16 %v2459, %v2455
    %v2512 = vpack.c.b16 %v2460, %v2456
    %v2513 = vpack.c.b16 %v2461, %v2457
    %v2514 = vpack.c.b16 %v2462, %v2458
    %v2515 = vpack.c.b16 %v2467, %v2463
    %v2516 = vpack.c.b16 %v2468, %v2464
    %v2517 = vpack.c.b16 %v2469, %v2465
    %v2518 = vpack.c.b16 %v2470, %v2466
    %v2519 = vpack.c.b16 %v2475, %v2471
    %v2520 = vpack.c.b16 %v2476, %v2472
    %v2521 = vpack.c.b16 %v2477, %v2473
    %v2522 = vpack.c.b16 %v2478, %v2474
    %v2523 = vpack.c.b16 %v2483, %v2479
    %v2524 = vpack.c.b16 %v2484, %v2480
    %v2525 = vpack.c.b16 %v2485, %v2481
    %v2526 = vpack.c.b16 %v2486, %v2482
    %v2527 = vpack.c.b16 %v2491, %v2487
    %v2528 = vpack.c.b16 %v2492, %v2488
    %v2529 = vpack.c.b16 %v2493, %v2489
    %v2530 = vpack.c.b16 %v2494, %v2490
    %v2531 = vpack.c.b16 %v2499, %v2495
    %v2532 = vpack.c.b16 %v2500, %v2496
    %v2533 = vpack.c.b16 %v2501, %v2497
    %v2534 = vpack.c.b16 %v2502, %v2498
    %2567 = vmatprep.subr.bf16.mxu0 %v2504
    %2568 = vmatpush1.bf16.msra.mxu0 %v2503
    %2569 = vmatprep.subr.bf16.mxu0 %v2508
    %2570 = vmatpush1.bf16.msra.mxu0 %v2507
    %2571 = vmatprep.subr.bf16.mxu0 %v2512
    %2572 = vmatpush1.bf16.msra.mxu0 %v2511
    %2573 = vmatprep.subr.bf16.mxu0 %v2516
    %2574 = vmatpush1.bf16.msra.mxu0 %v2515
    %2575 = vmatprep.subr.bf16.mxu0 %v2520
    %2576 = vmatpush1.bf16.msra.mxu0 %v2519
    %2577 = vmatprep.subr.bf16.mxu0 %v2524
    %2578 = vmatpush1.bf16.msra.mxu0 %v2523
    %2579 = vmatprep.subr.bf16.mxu0 %v2528
    %2580 = vmatpush1.bf16.msra.mxu0 %v2527
    %2581 = vmatprep.subr.bf16.mxu0 %v2532
    %2582 = vmatpush1.bf16.msra.mxu0 %v2531
    %2583 = vmatprep.subr.bf16.mxu0 0
    %2584 = vmatpush1.bf16.msra.mxu0 0
    %2585 = vmatprep.subr.bf16.mxu0 0
    %2586 = vmatpush1.bf16.msra.mxu0 0
    %2587 = vmatprep.subr.bf16.mxu0 0
    %2588 = vmatpush1.bf16.msra.mxu0 0
    %2589 = vmatprep.subr.bf16.mxu0 0
    %2590 = vmatpush1.bf16.msra.mxu0 0
    %2591 = vmatprep.subr.bf16.mxu0 0
    %2592 = vmatpush1.bf16.msra.mxu0 0
    %2593 = vmatprep.subr.bf16.mxu0 0
    %2594 = vmatpush1.bf16.msra.mxu0 0
    %2595 = vmatprep.subr.bf16.mxu0 0
    %2596 = vmatpush1.bf16.msra.mxu0 0
    %2597 = vmatprep.subr.bf16.mxu0 0
    %2598 = vmatpush1.bf16.msra.mxu0 0
    %2599 = vmatprep.mubr.bf16.mxu0 0
    %2600 = vmatmul.mubr.bf16.gmra.mrb[0].mxu0 %v1813
    %v2601 = vpop.f32.mrb[0].mxu0
    %v2602 = vadd.f32 0.0, %v2601
    %v2603 = vpop.f32.mrb[0].mxu0
    %v2604 = vadd.f32 0.0, %v2603
    %v2605 = vpop.f32.mrb[0].mxu0
    %v2606 = vpop.f32.mrb[0].mxu0
    %2607 = vdwg.mxu0
    %2608 = vmatprep.subr.bf16.mxu0 %v2506
    %2609 = vmatpush1.bf16.msra.mxu0 %v2505
    %2610 = vmatprep.subr.bf16.mxu0 %v2510
    %2611 = vmatpush1.bf16.msra.mxu0 %v2509
    %2612 = vmatprep.subr.bf16.mxu0 %v2514
    %2613 = vmatpush1.bf16.msra.mxu0 %v2513
    %2614 = vmatprep.subr.bf16.mxu0 %v2518
    %2615 = vmatpush1.bf16.msra.mxu0 %v2517
    %2616 = vmatprep.subr.bf16.mxu0 %v2522
    %2617 = vmatpush1.bf16.msra.mxu0 %v2521
    %2618 = vmatprep.subr.bf16.mxu0 %v2526
    %2619 = vmatpush1.bf16.msra.mxu0 %v2525
    %2620 = vmatprep.subr.bf16.mxu0 %v2530
    %2621 = vmatpush1.bf16.msra.mxu0 %v2529
    %2622 = vmatprep.subr.bf16.mxu0 %v2534
    %2623 = vmatpush1.bf16.msra.mxu0 %v2533
    %2624 = vmatprep.subr.bf16.mxu0 0
    %2625 = vmatpush1.bf16.msra.mxu0 0
    %2626 = vmatprep.subr.bf16.mxu0 0
    %2627 = vmatpush1.bf16.msra.mxu0 0
    %2628 = vmatprep.subr.bf16.mxu0 0
    %2629 = vmatpush1.bf16.msra.mxu0 0
    %2630 = vmatprep.subr.bf16.mxu0 0
    %2631 = vmatpush1.bf16.msra.mxu0 0
    %2632 = vmatprep.subr.bf16.mxu0 0
    %2633 = vmatpush1.bf16.msra.mxu0 0
    %2634 = vmatprep.subr.bf16.mxu0 0
    %2635 = vmatpush1.bf16.msra.mxu0 0
    %2636 = vmatprep.subr.bf16.mxu0 0
    %2637 = vmatpush1.bf16.msra.mxu0 0
    %2638 = vmatprep.subr.bf16.mxu0 0
    %2639 = vmatpush1.bf16.msra.mxu0 0
    %2640 = vmatprep.mubr.bf16.mxu0 0
    %2641 = vmatmul.mubr.bf16.gmra.mrb[0].mxu0 %v1813
    %v2642 = vpop.f32.mrb[0].mxu0
    %v2643 = vadd.f32 0.0, %v2642
    %v2644 = vpop.f32.mrb[0].mxu0
    %v2645 = vadd.f32 0.0, %v2644
    %v2646 = vpop.f32.mrb[0].mxu0
    %v2647 = vpop.f32.mrb[0].mxu0
    %2648 = vdwg.mxu0
    %v2649 = vadd.f32 %v2328, %v2602
    %v2650 = vadd.f32 %v2330, %v2604
    %v2651 = vadd.f32 %v2369, %v2643
    %v2652 = vadd.f32 %v2371, %v2645
    %v2653 = vld [vmem:[#allocation11 + $0x300] sm:$0xff]
    %v2654 = vld [vmem:[#allocation11 + $0x308] sm:$0xff]
    %v2655 = vld [vmem:[#allocation11 + $0x310] sm:$0xff]
    %v2656 = vld [vmem:[#allocation11 + $0x318] sm:$0xff]
    %v2657 = vld [vmem:[#allocation11 + $0x320] sm:$0xff]
    %v2658 = vld [vmem:[#allocation11 + $0x328] sm:$0xff]
    %v2659 = vld [vmem:[#allocation11 + $0x330] sm:$0xff]
    %v2660 = vld [vmem:[#allocation11 + $0x338] sm:$0xff]
    %v2661 = vld [vmem:[#allocation11 + $0x340] sm:$0xff]
    %v2662 = vld [vmem:[#allocation11 + $0x348] sm:$0xff]
    %v2663 = vld [vmem:[#allocation11 + $0x350] sm:$0xff]
    %v2664 = vld [vmem:[#allocation11 + $0x358] sm:$0xff]
    %v2665 = vld [vmem:[#allocation11 + $0x360] sm:$0xff]
    %v2666 = vld [vmem:[#allocation11 + $0x368] sm:$0xff]
    %v2667 = vld [vmem:[#allocation11 + $0x370] sm:$0xff]
    %v2668 = vld [vmem:[#allocation11 + $0x378] sm:$0xff]
    %v2669 = vld [vmem:[#allocation11 + $0x380] sm:$0xff]
    %v2670 = vld [vmem:[#allocation11 + $0x388] sm:$0xff]
    %v2671 = vld [vmem:[#allocation11 + $0x390] sm:$0xff]
    %v2672 = vld [vmem:[#allocation11 + $0x398] sm:$0xff]
    %v2673 = vld [vmem:[#allocation11 + $0x3a0] sm:$0xff]
    %v2674 = vld [vmem:[#allocation11 + $0x3a8] sm:$0xff]
    %v2675 = vld [vmem:[#allocation11 + $0x3b0] sm:$0xff]
    %v2676 = vld [vmem:[#allocation11 + $0x3b8] sm:$0xff]
    %v2677 = vld [vmem:[#allocation11 + $0x3c0] sm:$0xff]
    %v2678 = vld [vmem:[#allocation11 + $0x3c8] sm:$0xff]
    %v2679 = vld [vmem:[#allocation11 + $0x3d0] sm:$0xff]
    %v2680 = vld [vmem:[#allocation11 + $0x3d8] sm:$0xff]
    %v2681 = vld [vmem:[#allocation11 + $0x3e0] sm:$0xff]
    %v2682 = vld [vmem:[#allocation11 + $0x3e8] sm:$0xff]
    %v2683 = vld [vmem:[#allocation11 + $0x3f0] sm:$0xff]
    %v2684 = vld [vmem:[#allocation11 + $0x3f8] sm:$0xff]
    %v2717 = vunpack.c.l.b16 %v2653
    %v2718 = vunpack.c.h.b16 %v2653
    %v2719 = vunpack.c.l.b16 %v2654
    %v2720 = vunpack.c.h.b16 %v2654
    %v2721 = vunpack.c.l.b16 %v2655
    %v2722 = vunpack.c.h.b16 %v2655
    %v2723 = vunpack.c.l.b16 %v2656
    %v2724 = vunpack.c.h.b16 %v2656
    %v2725 = vunpack.c.l.b16 %v2657
    %v2726 = vunpack.c.h.b16 %v2657
    %v2727 = vunpack.c.l.b16 %v2658
    %v2728 = vunpack.c.h.b16 %v2658
    %v2729 = vunpack.c.l.b16 %v2659
    %v2730 = vunpack.c.h.b16 %v2659
    %v2731 = vunpack.c.l.b16 %v2660
    %v2732 = vunpack.c.h.b16 %v2660
    %v2733 = vunpack.c.l.b16 %v2661
    %v2734 = vunpack.c.h.b16 %v2661
    %v2735 = vunpack.c.l.b16 %v2662
    %v2736 = vunpack.c.h.b16 %v2662
    %v2737 = vunpack.c.l.b16 %v2663
    %v2738 = vunpack.c.h.b16 %v2663
    %v2739 = vunpack.c.l.b16 %v2664
    %v2740 = vunpack.c.h.b16 %v2664
    %v2741 = vunpack.c.l.b16 %v2665
    %v2742 = vunpack.c.h.b16 %v2665
    %v2743 = vunpack.c.l.b16 %v2666
    %v2744 = vunpack.c.h.b16 %v2666
    %v2745 = vunpack.c.l.b16 %v2667
    %v2746 = vunpack.c.h.b16 %v2667
    %v2747 = vunpack.c.l.b16 %v2668
    %v2748 = vunpack.c.h.b16 %v2668
    %v2749 = vunpack.c.l.b16 %v2669
    %v2750 = vunpack.c.h.b16 %v2669
    %v2751 = vunpack.c.l.b16 %v2670
    %v2752 = vunpack.c.h.b16 %v2670
    %v2753 = vunpack.c.l.b16 %v2671
    %v2754 = vunpack.c.h.b16 %v2671
    %v2755 = vunpack.c.l.b16 %v2672
    %v2756 = vunpack.c.h.b16 %v2672
    %v2757 = vunpack.c.l.b16 %v2673
    %v2758 = vunpack.c.h.b16 %v2673
    %v2759 = vunpack.c.l.b16 %v2674
    %v2760 = vunpack.c.h.b16 %v2674
    %v2761 = vunpack.c.l.b16 %v2675
    %v2762 = vunpack.c.h.b16 %v2675
    %v2763 = vunpack.c.l.b16 %v2676
    %v2764 = vunpack.c.h.b16 %v2676
    %v2765 = vunpack.c.l.b16 %v2677
    %v2766 = vunpack.c.h.b16 %v2677
    %v2767 = vunpack.c.l.b16 %v2678
    %v2768 = vunpack.c.h.b16 %v2678
    %v2769 = vunpack.c.l.b16 %v2679
    %v2770 = vunpack.c.h.b16 %v2679
    %v2771 = vunpack.c.l.b16 %v2680
    %v2772 = vunpack.c.h.b16 %v2680
    %v2773 = vunpack.c.l.b16 %v2681
    %v2774 = vunpack.c.h.b16 %v2681
    %v2775 = vunpack.c.l.b16 %v2682
    %v2776 = vunpack.c.h.b16 %v2682
    %v2777 = vunpack.c.l.b16 %v2683
    %v2778 = vunpack.c.h.b16 %v2683
    %v2779 = vunpack.c.l.b16 %v2684
    %v2780 = vunpack.c.h.b16 %v2684
    %v2781 = vpack.c.b16 %v2721, %v2717
    %v2782 = vpack.c.b16 %v2722, %v2718
    %v2783 = vpack.c.b16 %v2723, %v2719
    %v2784 = vpack.c.b16 %v2724, %v2720
    %v2785 = vpack.c.b16 %v2729, %v2725
    %v2786 = vpack.c.b16 %v2730, %v2726
    %v2787 = vpack.c.b16 %v2731, %v2727
    %v2788 = vpack.c.b16 %v2732, %v2728
    %v2789 = vpack.c.b16 %v2737, %v2733
    %v2790 = vpack.c.b16 %v2738, %v2734
    %v2791 = vpack.c.b16 %v2739, %v2735
    %v2792 = vpack.c.b16 %v2740, %v2736
    %v2793 = vpack.c.b16 %v2745, %v2741
    %v2794 = vpack.c.b16 %v2746, %v2742
    %v2795 = vpack.c.b16 %v2747, %v2743
    %v2796 = vpack.c.b16 %v2748, %v2744
    %v2797 = vpack.c.b16 %v2753, %v2749
    %v2798 = vpack.c.b16 %v2754, %v2750
    %v2799 = vpack.c.b16 %v2755, %v2751
    %v2800 = vpack.c.b16 %v2756, %v2752
    %v2801 = vpack.c.b16 %v2761, %v2757
    %v2802 = vpack.c.b16 %v2762, %v2758
    %v2803 = vpack.c.b16 %v2763, %v2759
    %v2804 = vpack.c.b16 %v2764, %v2760
    %v2805 = vpack.c.b16 %v2769, %v2765
    %v2806 = vpack.c.b16 %v2770, %v2766
    %v2807 = vpack.c.b16 %v2771, %v2767
    %v2808 = vpack.c.b16 %v2772, %v2768
    %v2809 = vpack.c.b16 %v2777, %v2773
    %v2810 = vpack.c.b16 %v2778, %v2774
    %v2811 = vpack.c.b16 %v2779, %v2775
    %v2812 = vpack.c.b16 %v2780, %v2776
    %2845 = vmatprep.subr.bf16.mxu0 %v2782
    %2846 = vmatpush1.bf16.msra.mxu0 %v2781
    %2847 = vmatprep.subr.bf16.mxu0 %v2786
    %2848 = vmatpush1.bf16.msra.mxu0 %v2785
    %2849 = vmatprep.subr.bf16.mxu0 %v2790
    %2850 = vmatpush1.bf16.msra.mxu0 %v2789
    %2851 = vmatprep.subr.bf16.mxu0 %v2794
    %2852 = vmatpush1.bf16.msra.mxu0 %v2793
    %2853 = vmatprep.subr.bf16.mxu0 %v2798
    %2854 = vmatpush1.bf16.msra.mxu0 %v2797
    %2855 = vmatprep.subr.bf16.mxu0 %v2802
    %2856 = vmatpush1.bf16.msra.mxu0 %v2801
    %2857 = vmatprep.subr.bf16.mxu0 %v2806
    %2858 = vmatpush1.bf16.msra.mxu0 %v2805
    %2859 = vmatprep.subr.bf16.mxu0 %v2810
    %2860 = vmatpush1.bf16.msra.mxu0 %v2809
    %2861 = vmatprep.subr.bf16.mxu0 0
    %2862 = vmatpush1.bf16.msra.mxu0 0
    %2863 = vmatprep.subr.bf16.mxu0 0
    %2864 = vmatpush1.bf16.msra.mxu0 0
    %2865 = vmatprep.subr.bf16.mxu0 0
    %2866 = vmatpush1.bf16.msra.mxu0 0
    %2867 = vmatprep.subr.bf16.mxu0 0
    %2868 = vmatpush1.bf16.msra.mxu0 0
    %2869 = vmatprep.subr.bf16.mxu0 0
    %2870 = vmatpush1.bf16.msra.mxu0 0
    %2871 = vmatprep.subr.bf16.mxu0 0
    %2872 = vmatpush1.bf16.msra.mxu0 0
    %2873 = vmatprep.subr.bf16.mxu0 0
    %2874 = vmatpush1.bf16.msra.mxu0 0
    %2875 = vmatprep.subr.bf16.mxu0 0
    %2876 = vmatpush1.bf16.msra.mxu0 0
    %2877 = vmatprep.mubr.bf16.mxu0 0
    %2878 = vmatmul.mubr.bf16.gmra.mrb[0].mxu0 %v1814
    %v2879 = vpop.f32.mrb[0].mxu0
    %v2880 = vadd.f32 0.0, %v2879
    %v2881 = vpop.f32.mrb[0].mxu0
    %v2882 = vadd.f32 0.0, %v2881
    %v2883 = vpop.f32.mrb[0].mxu0
    %v2884 = vpop.f32.mrb[0].mxu0
    %2885 = vdwg.mxu0
    %2886 = vmatprep.subr.bf16.mxu0 %v2784
    %2887 = vmatpush1.bf16.msra.mxu0 %v2783
    %2888 = vmatprep.subr.bf16.mxu0 %v2788
    %2889 = vmatpush1.bf16.msra.mxu0 %v2787
    %2890 = vmatprep.subr.bf16.mxu0 %v2792
    %2891 = vmatpush1.bf16.msra.mxu0 %v2791
    %2892 = vmatprep.subr.bf16.mxu0 %v2796
    %2893 = vmatpush1.bf16.msra.mxu0 %v2795
    %2894 = vmatprep.subr.bf16.mxu0 %v2800
    %2895 = vmatpush1.bf16.msra.mxu0 %v2799
    %2896 = vmatprep.subr.bf16.mxu0 %v2804
    %2897 = vmatpush1.bf16.msra.mxu0 %v2803
    %2898 = vmatprep.subr.bf16.mxu0 %v2808
    %2899 = vmatpush1.bf16.msra.mxu0 %v2807
    %2900 = vmatprep.subr.bf16.mxu0 %v2812
    %2901 = vmatpush1.bf16.msra.mxu0 %v2811
    %2902 = vmatprep.subr.bf16.mxu0 0
    %2903 = vmatpush1.bf16.msra.mxu0 0
    %2904 = vmatprep.subr.bf16.mxu0 0
    %2905 = vmatpush1.bf16.msra.mxu0 0
    %2906 = vmatprep.subr.bf16.mxu0 0
    %2907 = vmatpush1.bf16.msra.mxu0 0
    %2908 = vmatprep.subr.bf16.mxu0 0
    %2909 = vmatpush1.bf16.msra.mxu0 0
    %2910 = vmatprep.subr.bf16.mxu0 0
    %2911 = vmatpush1.bf16.msra.mxu0 0
    %2912 = vmatprep.subr.bf16.mxu0 0
    %2913 = vmatpush1.bf16.msra.mxu0 0
    %2914 = vmatprep.subr.bf16.mxu0 0
    %2915 = vmatpush1.bf16.msra.mxu0 0
    %2916 = vmatprep.subr.bf16.mxu0 0
    %2917 = vmatpush1.bf16.msra.mxu0 0
    %2918 = vmatprep.mubr.bf16.mxu0 0
    %2919 = vmatmul.mubr.bf16.gmra.mrb[0].mxu0 %v1814
    %v2920 = vpop.f32.mrb[0].mxu0
    %v2921 = vadd.f32 0.0, %v2920
    %v2922 = vpop.f32.mrb[0].mxu0
    %v2923 = vadd.f32 0.0, %v2922
    %v2924 = vpop.f32.mrb[0].mxu0
    %v2925 = vpop.f32.mrb[0].mxu0
    %2926 = vdwg.mxu0
    %v2927 = vadd.f32 %v2649, %v2880
    %v2928 = vadd.f32 %v2650, %v2882
    %v2929 = vadd.f32 %v2651, %v2921
    %v2930 = vadd.f32 %v2652, %v2923
    %v2931 = vld [vmem:[#allocation11 + $0x400] sm:$0xff]
    %v2932 = vld [vmem:[#allocation11 + $0x408] sm:$0xff]
    %v2933 = vld [vmem:[#allocation11 + $0x410] sm:$0xff]
    %v2934 = vld [vmem:[#allocation11 + $0x418] sm:$0xff]
    %v2935 = vld [vmem:[#allocation11 + $0x420] sm:$0xff]
    %v2936 = vld [vmem:[#allocation11 + $0x428] sm:$0xff]
    %v2937 = vld [vmem:[#allocation11 + $0x430] sm:$0xff]
    %v2938 = vld [vmem:[#allocation11 + $0x438] sm:$0xff]
    %v2939 = vld [vmem:[#allocation11 + $0x440] sm:$0xff]
    %v2940 = vld [vmem:[#allocation11 + $0x448] sm:$0xff]
    %v2941 = vld [vmem:[#allocation11 + $0x450] sm:$0xff]
    %v2942 = vld [vmem:[#allocation11 + $0x458] sm:$0xff]
    %v2943 = vld [vmem:[#allocation11 + $0x460] sm:$0xff]
    %v2944 = vld [vmem:[#allocation11 + $0x468] sm:$0xff]
    %v2945 = vld [vmem:[#allocation11 + $0x470] sm:$0xff]
    %v2946 = vld [vmem:[#allocation11 + $0x478] sm:$0xff]
    %v2947 = vld [vmem:[#allocation11 + $0x480] sm:$0xff]
    %v2948 = vld [vmem:[#allocation11 + $0x488] sm:$0xff]
    %v2949 = vld [vmem:[#allocation11 + $0x490] sm:$0xff]
    %v2950 = vld [vmem:[#allocation11 + $0x498] sm:$0xff]
    %v2951 = vld [vmem:[#allocation11 + $0x4a0] sm:$0xff]
    %v2952 = vld [vmem:[#allocation11 + $0x4a8] sm:$0xff]
    %v2953 = vld [vmem:[#allocation11 + $0x4b0] sm:$0xff]
    %v2954 = vld [vmem:[#allocation11 + $0x4b8] sm:$0xff]
    %v2955 = vld [vmem:[#allocation11 + $0x4c0] sm:$0xff]
    %v2956 = vld [vmem:[#allocation11 + $0x4c8] sm:$0xff]
    %v2957 = vld [vmem:[#allocation11 + $0x4d0] sm:$0xff]
    %v2958 = vld [vmem:[#allocation11 + $0x4d8] sm:$0xff]
    %v2959 = vld [vmem:[#allocation11 + $0x4e0] sm:$0xff]
    %v2960 = vld [vmem:[#allocation11 + $0x4e8] sm:$0xff]
    %v2961 = vld [vmem:[#allocation11 + $0x4f0] sm:$0xff]
    %v2962 = vld [vmem:[#allocation11 + $0x4f8] sm:$0xff]
    %v2995 = vunpack.c.l.b16 %v2931
    %v2996 = vunpack.c.h.b16 %v2931
    %v2997 = vunpack.c.l.b16 %v2932
    %v2998 = vunpack.c.h.b16 %v2932
    %v2999 = vunpack.c.l.b16 %v2933
    %v3000 = vunpack.c.h.b16 %v2933
    %v3001 = vunpack.c.l.b16 %v2934
    %v3002 = vunpack.c.h.b16 %v2934
    %v3003 = vunpack.c.l.b16 %v2935
    %v3004 = vunpack.c.h.b16 %v2935
    %v3005 = vunpack.c.l.b16 %v2936
    %v3006 = vunpack.c.h.b16 %v2936
    %v3007 = vunpack.c.l.b16 %v2937
    %v3008 = vunpack.c.h.b16 %v2937
    %v3009 = vunpack.c.l.b16 %v2938
    %v3010 = vunpack.c.h.b16 %v2938
    %v3011 = vunpack.c.l.b16 %v2939
    %v3012 = vunpack.c.h.b16 %v2939
    %v3013 = vunpack.c.l.b16 %v2940
    %v3014 = vunpack.c.h.b16 %v2940
    %v3015 = vunpack.c.l.b16 %v2941
    %v3016 = vunpack.c.h.b16 %v2941
    %v3017 = vunpack.c.l.b16 %v2942
    %v3018 = vunpack.c.h.b16 %v2942
    %v3019 = vunpack.c.l.b16 %v2943
    %v3020 = vunpack.c.h.b16 %v2943
    %v3021 = vunpack.c.l.b16 %v2944
    %v3022 = vunpack.c.h.b16 %v2944
    %v3023 = vunpack.c.l.b16 %v2945
    %v3024 = vunpack.c.h.b16 %v2945
    %v3025 = vunpack.c.l.b16 %v2946
    %v3026 = vunpack.c.h.b16 %v2946
    %v3027 = vunpack.c.l.b16 %v2947
    %v3028 = vunpack.c.h.b16 %v2947
    %v3029 = vunpack.c.l.b16 %v2948
    %v3030 = vunpack.c.h.b16 %v2948
    %v3031 = vunpack.c.l.b16 %v2949
    %v3032 = vunpack.c.h.b16 %v2949
    %v3033 = vunpack.c.l.b16 %v2950
    %v3034 = vunpack.c.h.b16 %v2950
    %v3035 = vunpack.c.l.b16 %v2951
    %v3036 = vunpack.c.h.b16 %v2951
    %v3037 = vunpack.c.l.b16 %v2952
    %v3038 = vunpack.c.h.b16 %v2952
    %v3039 = vunpack.c.l.b16 %v2953
    %v3040 = vunpack.c.h.b16 %v2953
    %v3041 = vunpack.c.l.b16 %v2954
    %v3042 = vunpack.c.h.b16 %v2954
    %v3043 = vunpack.c.l.b16 %v2955
    %v3044 = vunpack.c.h.b16 %v2955
    %v3045 = vunpack.c.l.b16 %v2956
    %v3046 = vunpack.c.h.b16 %v2956
    %v3047 = vunpack.c.l.b16 %v2957
    %v3048 = vunpack.c.h.b16 %v2957
    %v3049 = vunpack.c.l.b16 %v2958
    %v3050 = vunpack.c.h.b16 %v2958
    %v3051 = vunpack.c.l.b16 %v2959
    %v3052 = vunpack.c.h.b16 %v2959
    %v3053 = vunpack.c.l.b16 %v2960
    %v3054 = vunpack.c.h.b16 %v2960
    %v3055 = vunpack.c.l.b16 %v2961
    %v3056 = vunpack.c.h.b16 %v2961
    %v3057 = vunpack.c.l.b16 %v2962
    %v3058 = vunpack.c.h.b16 %v2962
    %v3059 = vpack.c.b16 %v2999, %v2995
    %v3060 = vpack.c.b16 %v3000, %v2996
    %v3061 = vpack.c.b16 %v3001, %v2997
    %v3062 = vpack.c.b16 %v3002, %v2998
    %v3063 = vpack.c.b16 %v3007, %v3003
    %v3064 = vpack.c.b16 %v3008, %v3004
    %v3065 = vpack.c.b16 %v3009, %v3005
    %v3066 = vpack.c.b16 %v3010, %v3006
    %v3067 = vpack.c.b16 %v3015, %v3011
    %v3068 = vpack.c.b16 %v3016, %v3012
    %v3069 = vpack.c.b16 %v3017, %v3013
    %v3070 = vpack.c.b16 %v3018, %v3014
    %v3071 = vpack.c.b16 %v3023, %v3019
    %v3072 = vpack.c.b16 %v3024, %v3020
    %v3073 = vpack.c.b16 %v3025, %v3021
    %v3074 = vpack.c.b16 %v3026, %v3022
    %v3075 = vpack.c.b16 %v3031, %v3027
    %v3076 = vpack.c.b16 %v3032, %v3028
    %v3077 = vpack.c.b16 %v3033, %v3029
    %v3078 = vpack.c.b16 %v3034, %v3030
    %v3079 = vpack.c.b16 %v3039, %v3035
    %v3080 = vpack.c.b16 %v3040, %v3036
    %v3081 = vpack.c.b16 %v3041, %v3037
    %v3082 = vpack.c.b16 %v3042, %v3038
    %v3083 = vpack.c.b16 %v3047, %v3043
    %v3084 = vpack.c.b16 %v3048, %v3044
    %v3085 = vpack.c.b16 %v3049, %v3045
    %v3086 = vpack.c.b16 %v3050, %v3046
    %v3087 = vpack.c.b16 %v3055, %v3051
    %v3088 = vpack.c.b16 %v3056, %v3052
    %v3089 = vpack.c.b16 %v3057, %v3053
    %v3090 = vpack.c.b16 %v3058, %v3054
    %3123 = vmatprep.subr.bf16.mxu0 %v3060
    %3124 = vmatpush1.bf16.msra.mxu0 %v3059
    %3125 = vmatprep.subr.bf16.mxu0 %v3064
    %3126 = vmatpush1.bf16.msra.mxu0 %v3063
    %3127 = vmatprep.subr.bf16.mxu0 %v3068
    %3128 = vmatpush1.bf16.msra.mxu0 %v3067
    %3129 = vmatprep.subr.bf16.mxu0 %v3072
    %3130 = vmatpush1.bf16.msra.mxu0 %v3071
    %3131 = vmatprep.subr.bf16.mxu0 %v3076
    %3132 = vmatpush1.bf16.msra.mxu0 %v3075
    %3133 = vmatprep.subr.bf16.mxu0 %v3080
    %3134 = vmatpush1.bf16.msra.mxu0 %v3079
    %3135 = vmatprep.subr.bf16.mxu0 %v3084
    %3136 = vmatpush1.bf16.msra.mxu0 %v3083
    %3137 = vmatprep.subr.bf16.mxu0 %v3088
    %3138 = vmatpush1.bf16.msra.mxu0 %v3087
    %3139 = vmatprep.subr.bf16.mxu0 0
    %3140 = vmatpush1.bf16.msra.mxu0 0
    %3141 = vmatprep.subr.bf16.mxu0 0
    %3142 = vmatpush1.bf16.msra.mxu0 0
    %3143 = vmatprep.subr.bf16.mxu0 0
    %3144 = vmatpush1.bf16.msra.mxu0 0
    %3145 = vmatprep.subr.bf16.mxu0 0
    %3146 = vmatpush1.bf16.msra.mxu0 0
    %3147 = vmatprep.subr.bf16.mxu0 0
    %3148 = vmatpush1.bf16.msra.mxu0 0
    %3149 = vmatprep.subr.bf16.mxu0 0
    %3150 = vmatpush1.bf16.msra.mxu0 0
    %3151 = vmatprep.subr.bf16.mxu0 0
    %3152 = vmatpush1.bf16.msra.mxu0 0
    %3153 = vmatprep.subr.bf16.mxu0 0
    %3154 = vmatpush1.bf16.msra.mxu0 0
    %3155 = vmatprep.mubr.bf16.mxu0 0
    %3156 = vmatmul.mubr.bf16.gmra.mrb[0].mxu0 %v1815
    %v3157 = vpop.f32.mrb[0].mxu0
    %v3158 = vadd.f32 0.0, %v3157
    %v3159 = vpop.f32.mrb[0].mxu0
    %v3160 = vadd.f32 0.0, %v3159
    %v3161 = vpop.f32.mrb[0].mxu0
    %v3162 = vpop.f32.mrb[0].mxu0
    %3163 = vdwg.mxu0
    %3164 = vmatprep.subr.bf16.mxu0 %v3062
    %3165 = vmatpush1.bf16.msra.mxu0 %v3061
    %3166 = vmatprep.subr.bf16.mxu0 %v3066
    %3167 = vmatpush1.bf16.msra.mxu0 %v3065
    %3168 = vmatprep.subr.bf16.mxu0 %v3070
    %3169 = vmatpush1.bf16.msra.mxu0 %v3069
    %3170 = vmatprep.subr.bf16.mxu0 %v3074
    %3171 = vmatpush1.bf16.msra.mxu0 %v3073
    %3172 = vmatprep.subr.bf16.mxu0 %v3078
    %3173 = vmatpush1.bf16.msra.mxu0 %v3077
    %3174 = vmatprep.subr.bf16.mxu0 %v3082
    %3175 = vmatpush1.bf16.msra.mxu0 %v3081
    %3176 = vmatprep.subr.bf16.mxu0 %v3086
    %3177 = vmatpush1.bf16.msra.mxu0 %v3085
    %3178 = vmatprep.subr.bf16.mxu0 %v3090
    %3179 = vmatpush1.bf16.msra.mxu0 %v3089
    %3180 = vmatprep.subr.bf16.mxu0 0
    %3181 = vmatpush1.bf16.msra.mxu0 0
    %3182 = vmatprep.subr.bf16.mxu0 0
    %3183 = vmatpush1.bf16.msra.mxu0 0
    %3184 = vmatprep.subr.bf16.mxu0 0
    %3185 = vmatpush1.bf16.msra.mxu0 0
    %3186 = vmatprep.subr.bf16.mxu0 0
    %3187 = vmatpush1.bf16.msra.mxu0 0
    %3188 = vmatprep.subr.bf16.mxu0 0
    %3189 = vmatpush1.bf16.msra.mxu0 0
    %3190 = vmatprep.subr.bf16.mxu0 0
    %3191 = vmatpush1.bf16.msra.mxu0 0
    %3192 = vmatprep.subr.bf16.mxu0 0
    %3193 = vmatpush1.bf16.msra.mxu0 0
    %3194 = vmatprep.subr.bf16.mxu0 0
    %3195 = vmatpush1.bf16.msra.mxu0 0
    %3196 = vmatprep.mubr.bf16.mxu0 0
    %3197 = vmatmul.mubr.bf16.gmra.mrb[0].mxu0 %v1815
    %v3198 = vpop.f32.mrb[0].mxu0
    %v3199 = vadd.f32 0.0, %v3198
    %v3200 = vpop.f32.mrb[0].mxu0
    %v3201 = vadd.f32 0.0, %v3200
    %v3202 = vpop.f32.mrb[0].mxu0
    %v3203 = vpop.f32.mrb[0].mxu0
    %3204 = vdwg.mxu0
    %v3205 = vadd.f32 %v2927, %v3158
    %v3206 = vadd.f32 %v2928, %v3160
    %v3207 = vadd.f32 %v2929, %v3199
    %v3208 = vadd.f32 %v2930, %v3201
    %v3209 = vld [vmem:[#allocation11 + $0x500] sm:$0xff]
    %v3210 = vld [vmem:[#allocation11 + $0x508] sm:$0xff]
    %v3211 = vld [vmem:[#allocation11 + $0x510] sm:$0xff]
    %v3212 = vld [vmem:[#allocation11 + $0x518] sm:$0xff]
    %v3213 = vld [vmem:[#allocation11 + $0x520] sm:$0xff]
    %v3214 = vld [vmem:[#allocation11 + $0x528] sm:$0xff]
    %v3215 = vld [vmem:[#allocation11 + $0x530] sm:$0xff]
    %v3216 = vld [vmem:[#allocation11 + $0x538] sm:$0xff]
    %v3217 = vld [vmem:[#allocation11 + $0x540] sm:$0xff]
    %v3218 = vld [vmem:[#allocation11 + $0x548] sm:$0xff]
    %v3219 = vld [vmem:[#allocation11 + $0x550] sm:$0xff]
    %v3220 = vld [vmem:[#allocation11 + $0x558] sm:$0xff]
    %v3221 = vld [vmem:[#allocation11 + $0x560] sm:$0xff]
    %v3222 = vld [vmem:[#allocation11 + $0x568] sm:$0xff]
    %v3223 = vld [vmem:[#allocation11 + $0x570] sm:$0xff]
    %v3224 = vld [vmem:[#allocation11 + $0x578] sm:$0xff]
    %v3225 = vld [vmem:[#allocation11 + $0x580] sm:$0xff]
    %v3226 = vld [vmem:[#allocation11 + $0x588] sm:$0xff]
    %v3227 = vld [vmem:[#allocation11 + $0x590] sm:$0xff]
    %v3228 = vld [vmem:[#allocation11 + $0x598] sm:$0xff]
    %v3229 = vld [vmem:[#allocation11 + $0x5a0] sm:$0xff]
    %v3230 = vld [vmem:[#allocation11 + $0x5a8] sm:$0xff]
    %v3231 = vld [vmem:[#allocation11 + $0x5b0] sm:$0xff]
    %v3232 = vld [vmem:[#allocation11 + $0x5b8] sm:$0xff]
    %v3233 = vld [vmem:[#allocation11 + $0x5c0] sm:$0xff]
    %v3234 = vld [vmem:[#allocation11 + $0x5c8] sm:$0xff]
    %v3235 = vld [vmem:[#allocation11 + $0x5d0] sm:$0xff]
    %v3236 = vld [vmem:[#allocation11 + $0x5d8] sm:$0xff]
    %v3237 = vld [vmem:[#allocation11 + $0x5e0] sm:$0xff]
    %v3238 = vld [vmem:[#allocation11 + $0x5e8] sm:$0xff]
    %v3239 = vld [vmem:[#allocation11 + $0x5f0] sm:$0xff]
    %v3240 = vld [vmem:[#allocation11 + $0x5f8] sm:$0xff]
    %v3273 = vunpack.c.l.b16 %v3209
    %v3274 = vunpack.c.h.b16 %v3209
    %v3275 = vunpack.c.l.b16 %v3210
    %v3276 = vunpack.c.h.b16 %v3210
    %v3277 = vunpack.c.l.b16 %v3211
    %v3278 = vunpack.c.h.b16 %v3211
    %v3279 = vunpack.c.l.b16 %v3212
    %v3280 = vunpack.c.h.b16 %v3212
    %v3281 = vunpack.c.l.b16 %v3213
    %v3282 = vunpack.c.h.b16 %v3213
    %v3283 = vunpack.c.l.b16 %v3214
    %v3284 = vunpack.c.h.b16 %v3214
    %v3285 = vunpack.c.l.b16 %v3215
    %v3286 = vunpack.c.h.b16 %v3215
    %v3287 = vunpack.c.l.b16 %v3216
    %v3288 = vunpack.c.h.b16 %v3216
    %v3289 = vunpack.c.l.b16 %v3217
    %v3290 = vunpack.c.h.b16 %v3217
    %v3291 = vunpack.c.l.b16 %v3218
    %v3292 = vunpack.c.h.b16 %v3218
    %v3293 = vunpack.c.l.b16 %v3219
    %v3294 = vunpack.c.h.b16 %v3219
    %v3295 = vunpack.c.l.b16 %v3220
    %v3296 = vunpack.c.h.b16 %v3220
    %v3297 = vunpack.c.l.b16 %v3221
    %v3298 = vunpack.c.h.b16 %v3221
    %v3299 = vunpack.c.l.b16 %v3222
    %v3300 = vunpack.c.h.b16 %v3222
    %v3301 = vunpack.c.l.b16 %v3223
    %v3302 = vunpack.c.h.b16 %v3223
    %v3303 = vunpack.c.l.b16 %v3224
    %v3304 = vunpack.c.h.b16 %v3224
    %v3305 = vunpack.c.l.b16 %v3225
    %v3306 = vunpack.c.h.b16 %v3225
    %v3307 = vunpack.c.l.b16 %v3226
    %v3308 = vunpack.c.h.b16 %v3226
    %v3309 = vunpack.c.l.b16 %v3227
    %v3310 = vunpack.c.h.b16 %v3227
    %v3311 = vunpack.c.l.b16 %v3228
    %v3312 = vunpack.c.h.b16 %v3228
    %v3313 = vunpack.c.l.b16 %v3229
    %v3314 = vunpack.c.h.b16 %v3229
    %v3315 = vunpack.c.l.b16 %v3230
    %v3316 = vunpack.c.h.b16 %v3230
    %v3317 = vunpack.c.l.b16 %v3231
    %v3318 = vunpack.c.h.b16 %v3231
    %v3319 = vunpack.c.l.b16 %v3232
    %v3320 = vunpack.c.h.b16 %v3232
    %v3321 = vunpack.c.l.b16 %v3233
    %v3322 = vunpack.c.h.b16 %v3233
    %v3323 = vunpack.c.l.b16 %v3234
    %v3324 = vunpack.c.h.b16 %v3234
    %v3325 = vunpack.c.l.b16 %v3235
    %v3326 = vunpack.c.h.b16 %v3235
    %v3327 = vunpack.c.l.b16 %v3236
    %v3328 = vunpack.c.h.b16 %v3236
    %v3329 = vunpack.c.l.b16 %v3237
    %v3330 = vunpack.c.h.b16 %v3237
    %v3331 = vunpack.c.l.b16 %v3238
    %v3332 = vunpack.c.h.b16 %v3238
    %v3333 = vunpack.c.l.b16 %v3239
    %v3334 = vunpack.c.h.b16 %v3239
    %v3335 = vunpack.c.l.b16 %v3240
    %v3336 = vunpack.c.h.b16 %v3240
    %v3337 = vpack.c.b16 %v3277, %v3273
    %v3338 = vpack.c.b16 %v3278, %v3274
    %v3339 = vpack.c.b16 %v3279, %v3275
    %v3340 = vpack.c.b16 %v3280, %v3276
    %v3341 = vpack.c.b16 %v3285, %v3281
    %v3342 = vpack.c.b16 %v3286, %v3282
    %v3343 = vpack.c.b16 %v3287, %v3283
    %v3344 = vpack.c.b16 %v3288, %v3284
    %v3345 = vpack.c.b16 %v3293, %v3289
    %v3346 = vpack.c.b16 %v3294, %v3290
    %v3347 = vpack.c.b16 %v3295, %v3291
    %v3348 = vpack.c.b16 %v3296, %v3292
    %v3349 = vpack.c.b16 %v3301, %v3297
    %v3350 = vpack.c.b16 %v3302, %v3298
    %v3351 = vpack.c.b16 %v3303, %v3299
    %v3352 = vpack.c.b16 %v3304, %v3300
    %v3353 = vpack.c.b16 %v3309, %v3305
    %v3354 = vpack.c.b16 %v3310, %v3306
    %v3355 = vpack.c.b16 %v3311, %v3307
    %v3356 = vpack.c.b16 %v3312, %v3308
    %v3357 = vpack.c.b16 %v3317, %v3313
    %v3358 = vpack.c.b16 %v3318, %v3314
    %v3359 = vpack.c.b16 %v3319, %v3315
    %v3360 = vpack.c.b16 %v3320, %v3316
    %v3361 = vpack.c.b16 %v3325, %v3321
    %v3362 = vpack.c.b16 %v3326, %v3322
    %v3363 = vpack.c.b16 %v3327, %v3323
    %v3364 = vpack.c.b16 %v3328, %v3324
    %v3365 = vpack.c.b16 %v3333, %v3329
    %v3366 = vpack.c.b16 %v3334, %v3330
    %v3367 = vpack.c.b16 %v3335, %v3331
    %v3368 = vpack.c.b16 %v3336, %v3332
    %3401 = vmatprep.subr.bf16.mxu0 %v3338
    %3402 = vmatpush1.bf16.msra.mxu0 %v3337
    %3403 = vmatprep.subr.bf16.mxu0 %v3342
    %3404 = vmatpush1.bf16.msra.mxu0 %v3341
    %3405 = vmatprep.subr.bf16.mxu0 %v3346
    %3406 = vmatpush1.bf16.msra.mxu0 %v3345
    %3407 = vmatprep.subr.bf16.mxu0 %v3350
    %3408 = vmatpush1.bf16.msra.mxu0 %v3349
    %3409 = vmatprep.subr.bf16.mxu0 %v3354
    %3410 = vmatpush1.bf16.msra.mxu0 %v3353
    %3411 = vmatprep.subr.bf16.mxu0 %v3358
    %3412 = vmatpush1.bf16.msra.mxu0 %v3357
    %3413 = vmatprep.subr.bf16.mxu0 %v3362
    %3414 = vmatpush1.bf16.msra.mxu0 %v3361
    %3415 = vmatprep.subr.bf16.mxu0 %v3366
    %3416 = vmatpush1.bf16.msra.mxu0 %v3365
    %3417 = vmatprep.subr.bf16.mxu0 0
    %3418 = vmatpush1.bf16.msra.mxu0 0
    %3419 = vmatprep.subr.bf16.mxu0 0
    %3420 = vmatpush1.bf16.msra.mxu0 0
    %3421 = vmatprep.subr.bf16.mxu0 0
    %3422 = vmatpush1.bf16.msra.mxu0 0
    %3423 = vmatprep.subr.bf16.mxu0 0
    %3424 = vmatpush1.bf16.msra.mxu0 0
    %3425 = vmatprep.subr.bf16.mxu0 0
    %3426 = vmatpush1.bf16.msra.mxu0 0
    %3427 = vmatprep.subr.bf16.mxu0 0
    %3428 = vmatpush1.bf16.msra.mxu0 0
    %3429 = vmatprep.subr.bf16.mxu0 0
    %3430 = vmatpush1.bf16.msra.mxu0 0
    %3431 = vmatprep.subr.bf16.mxu0 0
    %3432 = vmatpush1.bf16.msra.mxu0 0
    %3433 = vmatprep.mubr.bf16.mxu0 0
    %3434 = vmatmul.mubr.bf16.gmra.mrb[0].mxu0 %v1816
    %v3435 = vpop.f32.mrb[0].mxu0
    %v3436 = vadd.f32 0.0, %v3435
    %v3437 = vpop.f32.mrb[0].mxu0
    %v3438 = vadd.f32 0.0, %v3437
    %v3439 = vpop.f32.mrb[0].mxu0
    %v3440 = vpop.f32.mrb[0].mxu0
    %3441 = vdwg.mxu0
    %3442 = vmatprep.subr.bf16.mxu0 %v3340
    %3443 = vmatpush1.bf16.msra.mxu0 %v3339
    %3444 = vmatprep.subr.bf16.mxu0 %v3344
    %3445 = vmatpush1.bf16.msra.mxu0 %v3343
    %3446 = vmatprep.subr.bf16.mxu0 %v3348
    %3447 = vmatpush1.bf16.msra.mxu0 %v3347
    %3448 = vmatprep.subr.bf16.mxu0 %v3352
    %3449 = vmatpush1.bf16.msra.mxu0 %v3351
    %3450 = vmatprep.subr.bf16.mxu0 %v3356
    %3451 = vmatpush1.bf16.msra.mxu0 %v3355
    %3452 = vmatprep.subr.bf16.mxu0 %v3360
    %3453 = vmatpush1.bf16.msra.mxu0 %v3359
    %3454 = vmatprep.subr.bf16.mxu0 %v3364
    %3455 = vmatpush1.bf16.msra.mxu0 %v3363
    %3456 = vmatprep.subr.bf16.mxu0 %v3368
    %3457 = vmatpush1.bf16.msra.mxu0 %v3367
    %3458 = vmatprep.subr.bf16.mxu0 0
    %3459 = vmatpush1.bf16.msra.mxu0 0
    %3460 = vmatprep.subr.bf16.mxu0 0
    %3461 = vmatpush1.bf16.msra.mxu0 0
    %3462 = vmatprep.subr.bf16.mxu0 0
    %3463 = vmatpush1.bf16.msra.mxu0 0
    %3464 = vmatprep.subr.bf16.mxu0 0
    %3465 = vmatpush1.bf16.msra.mxu0 0
    %3466 = vmatprep.subr.bf16.mxu0 0
    %3467 = vmatpush1.bf16.msra.mxu0 0
    %3468 = vmatprep.subr.bf16.mxu0 0
    %3469 = vmatpush1.bf16.msra.mxu0 0
    %3470 = vmatprep.subr.bf16.mxu0 0
    %3471 = vmatpush1.bf16.msra.mxu0 0
    %3472 = vmatprep.subr.bf16.mxu0 0
    %3473 = vmatpush1.bf16.msra.mxu0 0
    %3474 = vmatprep.mubr.bf16.mxu0 0
    %3475 = vmatmul.mubr.bf16.gmra.mrb[0].mxu0 %v1816
    %v3476 = vpop.f32.mrb[0].mxu0
    %v3477 = vadd.f32 0.0, %v3476
    %v3478 = vpop.f32.mrb[0].mxu0
    %v3479 = vadd.f32 0.0, %v3478
    %v3480 = vpop.f32.mrb[0].mxu0
    %v3481 = vpop.f32.mrb[0].mxu0
    %3482 = vdwg.mxu0
    %v3483 = vadd.f32 %v3205, %v3436
    %v3484 = vadd.f32 %v3206, %v3438
    %v3485 = vadd.f32 %v3207, %v3477
    %v3486 = vadd.f32 %v3208, %v3479
    %v3487 = vld [vmem:[#allocation11 + $0x600] sm:$0xff]
    %v3488 = vld [vmem:[#allocation11 + $0x608] sm:$0xff]
    %v3489 = vld [vmem:[#allocation11 + $0x610] sm:$0xff]
    %v3490 = vld [vmem:[#allocation11 + $0x618] sm:$0xff]
    %v3491 = vld [vmem:[#allocation11 + $0x620] sm:$0xff]
    %v3492 = vld [vmem:[#allocation11 + $0x628] sm:$0xff]
    %v3493 = vld [vmem:[#allocation11 + $0x630] sm:$0xff]
    %v3494 = vld [vmem:[#allocation11 + $0x638] sm:$0xff]
    %v3495 = vld [vmem:[#allocation11 + $0x640] sm:$0xff]
    %v3496 = vld [vmem:[#allocation11 + $0x648] sm:$0xff]
    %v3497 = vld [vmem:[#allocation11 + $0x650] sm:$0xff]
    %v3498 = vld [vmem:[#allocation11 + $0x658] sm:$0xff]
    %v3499 = vld [vmem:[#allocation11 + $0x660] sm:$0xff]
    %v3500 = vld [vmem:[#allocation11 + $0x668] sm:$0xff]
    %v3501 = vld [vmem:[#allocation11 + $0x670] sm:$0xff]
    %v3502 = vld [vmem:[#allocation11 + $0x678] sm:$0xff]
    %v3503 = vld [vmem:[#allocation11 + $0x680] sm:$0xff]
    %v3504 = vld [vmem:[#allocation11 + $0x688] sm:$0xff]
    %v3505 = vld [vmem:[#allocation11 + $0x690] sm:$0xff]
    %v3506 = vld [vmem:[#allocation11 + $0x698] sm:$0xff]
    %v3507 = vld [vmem:[#allocation11 + $0x6a0] sm:$0xff]
    %v3508 = vld [vmem:[#allocation11 + $0x6a8] sm:$0xff]
    %v3509 = vld [vmem:[#allocation11 + $0x6b0] sm:$0xff]
    %v3510 = vld [vmem:[#allocation11 + $0x6b8] sm:$0xff]
    %v3511 = vld [vmem:[#allocation11 + $0x6c0] sm:$0xff]
    %v3512 = vld [vmem:[#allocation11 + $0x6c8] sm:$0xff]
    %v3513 = vld [vmem:[#allocation11 + $0x6d0] sm:$0xff]
    %v3514 = vld [vmem:[#allocation11 + $0x6d8] sm:$0xff]
    %v3515 = vld [vmem:[#allocation11 + $0x6e0] sm:$0xff]
    %v3516 = vld [vmem:[#allocation11 + $0x6e8] sm:$0xff]
    %v3517 = vld [vmem:[#allocation11 + $0x6f0] sm:$0xff]
    %v3518 = vld [vmem:[#allocation11 + $0x6f8] sm:$0xff]
    %v3551 = vunpack.c.l.b16 %v3487
    %v3552 = vunpack.c.h.b16 %v3487
    %v3553 = vunpack.c.l.b16 %v3488
    %v3554 = vunpack.c.h.b16 %v3488
    %v3555 = vunpack.c.l.b16 %v3489
    %v3556 = vunpack.c.h.b16 %v3489
    %v3557 = vunpack.c.l.b16 %v3490
    %v3558 = vunpack.c.h.b16 %v3490
    %v3559 = vunpack.c.l.b16 %v3491
    %v3560 = vunpack.c.h.b16 %v3491
    %v3561 = vunpack.c.l.b16 %v3492
    %v3562 = vunpack.c.h.b16 %v3492
    %v3563 = vunpack.c.l.b16 %v3493
    %v3564 = vunpack.c.h.b16 %v3493
    %v3565 = vunpack.c.l.b16 %v3494
    %v3566 = vunpack.c.h.b16 %v3494
    %v3567 = vunpack.c.l.b16 %v3495
    %v3568 = vunpack.c.h.b16 %v3495
    %v3569 = vunpack.c.l.b16 %v3496
    %v3570 = vunpack.c.h.b16 %v3496
    %v3571 = vunpack.c.l.b16 %v3497
    %v3572 = vunpack.c.h.b16 %v3497
    %v3573 = vunpack.c.l.b16 %v3498
    %v3574 = vunpack.c.h.b16 %v3498
    %v3575 = vunpack.c.l.b16 %v3499
    %v3576 = vunpack.c.h.b16 %v3499
    %v3577 = vunpack.c.l.b16 %v3500
    %v3578 = vunpack.c.h.b16 %v3500
    %v3579 = vunpack.c.l.b16 %v3501
    %v3580 = vunpack.c.h.b16 %v3501
    %v3581 = vunpack.c.l.b16 %v3502
    %v3582 = vunpack.c.h.b16 %v3502
    %v3583 = vunpack.c.l.b16 %v3503
    %v3584 = vunpack.c.h.b16 %v3503
    %v3585 = vunpack.c.l.b16 %v3504
    %v3586 = vunpack.c.h.b16 %v3504
    %v3587 = vunpack.c.l.b16 %v3505
    %v3588 = vunpack.c.h.b16 %v3505
    %v3589 = vunpack.c.l.b16 %v3506
    %v3590 = vunpack.c.h.b16 %v3506
    %v3591 = vunpack.c.l.b16 %v3507
    %v3592 = vunpack.c.h.b16 %v3507
    %v3593 = vunpack.c.l.b16 %v3508
    %v3594 = vunpack.c.h.b16 %v3508
    %v3595 = vunpack.c.l.b16 %v3509
    %v3596 = vunpack.c.h.b16 %v3509
    %v3597 = vunpack.c.l.b16 %v3510
    %v3598 = vunpack.c.h.b16 %v3510
    %v3599 = vunpack.c.l.b16 %v3511
    %v3600 = vunpack.c.h.b16 %v3511
    %v3601 = vunpack.c.l.b16 %v3512
    %v3602 = vunpack.c.h.b16 %v3512
    %v3603 = vunpack.c.l.b16 %v3513
    %v3604 = vunpack.c.h.b16 %v3513
    %v3605 = vunpack.c.l.b16 %v3514
    %v3606 = vunpack.c.h.b16 %v3514
    %v3607 = vunpack.c.l.b16 %v3515
    %v3608 = vunpack.c.h.b16 %v3515
    %v3609 = vunpack.c.l.b16 %v3516
    %v3610 = vunpack.c.h.b16 %v3516
    %v3611 = vunpack.c.l.b16 %v3517
    %v3612 = vunpack.c.h.b16 %v3517
    %v3613 = vunpack.c.l.b16 %v3518
    %v3614 = vunpack.c.h.b16 %v3518
    %v3615 = vpack.c.b16 %v3555, %v3551
    %v3616 = vpack.c.b16 %v3556, %v3552
    %v3617 = vpack.c.b16 %v3557, %v3553
    %v3618 = vpack.c.b16 %v3558, %v3554
    %v3619 = vpack.c.b16 %v3563, %v3559
    %v3620 = vpack.c.b16 %v3564, %v3560
    %v3621 = vpack.c.b16 %v3565, %v3561
    %v3622 = vpack.c.b16 %v3566, %v3562
    %v3623 = vpack.c.b16 %v3571, %v3567
    %v3624 = vpack.c.b16 %v3572, %v3568
    %v3625 = vpack.c.b16 %v3573, %v3569
    %v3626 = vpack.c.b16 %v3574, %v3570
    %v3627 = vpack.c.b16 %v3579, %v3575
    %v3628 = vpack.c.b16 %v3580, %v3576
    %v3629 = vpack.c.b16 %v3581, %v3577
    %v3630 = vpack.c.b16 %v3582, %v3578
    %v3631 = vpack.c.b16 %v3587, %v3583
    %v3632 = vpack.c.b16 %v3588, %v3584
    %v3633 = vpack.c.b16 %v3589, %v3585
    %v3634 = vpack.c.b16 %v3590, %v3586
    %v3635 = vpack.c.b16 %v3595, %v3591
    %v3636 = vpack.c.b16 %v3596, %v3592
    %v3637 = vpack.c.b16 %v3597, %v3593
    %v3638 = vpack.c.b16 %v3598, %v3594
    %v3639 = vpack.c.b16 %v3603, %v3599
    %v3640 = vpack.c.b16 %v3604, %v3600
    %v3641 = vpack.c.b16 %v3605, %v3601
    %v3642 = vpack.c.b16 %v3606, %v3602
    %v3643 = vpack.c.b16 %v3611, %v3607
    %v3644 = vpack.c.b16 %v3612, %v3608
    %v3645 = vpack.c.b16 %v3613, %v3609
    %v3646 = vpack.c.b16 %v3614, %v3610
    %3679 = vmatprep.subr.bf16.mxu0 %v3616
    %3680 = vmatpush1.bf16.msra.mxu0 %v3615
    %3681 = vmatprep.subr.bf16.mxu0 %v3620
    %3682 = vmatpush1.bf16.msra.mxu0 %v3619
    %3683 = vmatprep.subr.bf16.mxu0 %v3624
    %3684 = vmatpush1.bf16.msra.mxu0 %v3623
    %3685 = vmatprep.subr.bf16.mxu0 %v3628
    %3686 = vmatpush1.bf16.msra.mxu0 %v3627
    %3687 = vmatprep.subr.bf16.mxu0 %v3632
    %3688 = vmatpush1.bf16.msra.mxu0 %v3631
    %3689 = vmatprep.subr.bf16.mxu0 %v3636
    %3690 = vmatpush1.bf16.msra.mxu0 %v3635
    %3691 = vmatprep.subr.bf16.mxu0 %v3640
    %3692 = vmatpush1.bf16.msra.mxu0 %v3639
    %3693 = vmatprep.subr.bf16.mxu0 %v3644
    %3694 = vmatpush1.bf16.msra.mxu0 %v3643
    %3695 = vmatprep.subr.bf16.mxu0 0
    %3696 = vmatpush1.bf16.msra.mxu0 0
    %3697 = vmatprep.subr.bf16.mxu0 0
    %3698 = vmatpush1.bf16.msra.mxu0 0
    %3699 = vmatprep.subr.bf16.mxu0 0
    %3700 = vmatpush1.bf16.msra.mxu0 0
    %3701 = vmatprep.subr.bf16.mxu0 0
    %3702 = vmatpush1.bf16.msra.mxu0 0
    %3703 = vmatprep.subr.bf16.mxu0 0
    %3704 = vmatpush1.bf16.msra.mxu0 0
    %3705 = vmatprep.subr.bf16.mxu0 0
    %3706 = vmatpush1.bf16.msra.mxu0 0
    %3707 = vmatprep.subr.bf16.mxu0 0
    %3708 = vmatpush1.bf16.msra.mxu0 0
    %3709 = vmatprep.subr.bf16.mxu0 0
    %3710 = vmatpush1.bf16.msra.mxu0 0
    %3711 = vmatprep.mubr.bf16.mxu0 0
    %3712 = vmatmul.mubr.bf16.gmra.mrb[0].mxu0 %v1817
    %v3713 = vpop.f32.mrb[0].mxu0
    %v3714 = vadd.f32 0.0, %v3713
    %v3715 = vpop.f32.mrb[0].mxu0
    %v3716 = vadd.f32 0.0, %v3715
    %v3717 = vpop.f32.mrb[0].mxu0
    %v3718 = vpop.f32.mrb[0].mxu0
    %3719 = vdwg.mxu0
    %3720 = vmatprep.subr.bf16.mxu0 %v3618
    %3721 = vmatpush1.bf16.msra.mxu0 %v3617
    %3722 = vmatprep.subr.bf16.mxu0 %v3622
    %3723 = vmatpush1.bf16.msra.mxu0 %v3621
    %3724 = vmatprep.subr.bf16.mxu0 %v3626
    %3725 = vmatpush1.bf16.msra.mxu0 %v3625
    %3726 = vmatprep.subr.bf16.mxu0 %v3630
    %3727 = vmatpush1.bf16.msra.mxu0 %v3629
    %3728 = vmatprep.subr.bf16.mxu0 %v3634
    %3729 = vmatpush1.bf16.msra.mxu0 %v3633
    %3730 = vmatprep.subr.bf16.mxu0 %v3638
    %3731 = vmatpush1.bf16.msra.mxu0 %v3637
    %3732 = vmatprep.subr.bf16.mxu0 %v3642
    %3733 = vmatpush1.bf16.msra.mxu0 %v3641
    %3734 = vmatprep.subr.bf16.mxu0 %v3646
    %3735 = vmatpush1.bf16.msra.mxu0 %v3645
    %3736 = vmatprep.subr.bf16.mxu0 0
    %3737 = vmatpush1.bf16.msra.mxu0 0
    %3738 = vmatprep.subr.bf16.mxu0 0
    %3739 = vmatpush1.bf16.msra.mxu0 0
    %3740 = vmatprep.subr.bf16.mxu0 0
    %3741 = vmatpush1.bf16.msra.mxu0 0
    %3742 = vmatprep.subr.bf16.mxu0 0
    %3743 = vmatpush1.bf16.msra.mxu0 0
    %3744 = vmatprep.subr.bf16.mxu0 0
    %3745 = vmatpush1.bf16.msra.mxu0 0
    %3746 = vmatprep.subr.bf16.mxu0 0
    %3747 = vmatpush1.bf16.msra.mxu0 0
    %3748 = vmatprep.subr.bf16.mxu0 0
    %3749 = vmatpush1.bf16.msra.mxu0 0
    %3750 = vmatprep.subr.bf16.mxu0 0
    %3751 = vmatpush1.bf16.msra.mxu0 0
    %3752 = vmatprep.mubr.bf16.mxu0 0
    %3753 = vmatmul.mubr.bf16.gmra.mrb[0].mxu0 %v1817
    %v3754 = vpop.f32.mrb[0].mxu0
    %v3755 = vadd.f32 0.0, %v3754
    %v3756 = vpop.f32.mrb[0].mxu0
    %v3757 = vadd.f32 0.0, %v3756
    %v3758 = vpop.f32.mrb[0].mxu0
    %v3759 = vpop.f32.mrb[0].mxu0
    %3760 = vdwg.mxu0
    %v3761 = vadd.f32 %v3483, %v3714
    %v3762 = vadd.f32 %v3484, %v3716
    %v3763 = vadd.f32 %v3485, %v3755
    %v3764 = vadd.f32 %v3486, %v3757
    %v3765 = vld [vmem:[#allocation11 + $0x700] sm:$0xff]
    %v3766 = vld [vmem:[#allocation11 + $0x708] sm:$0xff]
    %v3767 = vld [vmem:[#allocation11 + $0x710] sm:$0xff]
    %v3768 = vld [vmem:[#allocation11 + $0x718] sm:$0xff]
    %v3769 = vld [vmem:[#allocation11 + $0x720] sm:$0xff]
    %v3770 = vld [vmem:[#allocation11 + $0x728] sm:$0xff]
    %v3771 = vld [vmem:[#allocation11 + $0x730] sm:$0xff]
    %v3772 = vld [vmem:[#allocation11 + $0x738] sm:$0xff]
    %v3773 = vld [vmem:[#allocation11 + $0x740] sm:$0xff]
    %v3774 = vld [vmem:[#allocation11 + $0x748] sm:$0xff]
    %v3775 = vld [vmem:[#allocation11 + $0x750] sm:$0xff]
    %v3776 = vld [vmem:[#allocation11 + $0x758] sm:$0xff]
    %v3777 = vld [vmem:[#allocation11 + $0x760] sm:$0xff]
    %v3778 = vld [vmem:[#allocation11 + $0x768] sm:$0xff]
    %v3779 = vld [vmem:[#allocation11 + $0x770] sm:$0xff]
    %v3780 = vld [vmem:[#allocation11 + $0x778] sm:$0xff]
    %v3781 = vld [vmem:[#allocation11 + $0x780] sm:$0xff]
    %v3782 = vld [vmem:[#allocation11 + $0x788] sm:$0xff]
    %v3783 = vld [vmem:[#allocation11 + $0x790] sm:$0xff]
    %v3784 = vld [vmem:[#allocation11 + $0x798] sm:$0xff]
    %v3785 = vld [vmem:[#allocation11 + $0x7a0] sm:$0xff]
    %v3786 = vld [vmem:[#allocation11 + $0x7a8] sm:$0xff]
    %v3787 = vld [vmem:[#allocation11 + $0x7b0] sm:$0xff]
    %v3788 = vld [vmem:[#allocation11 + $0x7b8] sm:$0xff]
    %v3789 = vld [vmem:[#allocation11 + $0x7c0] sm:$0xff]
    %v3790 = vld [vmem:[#allocation11 + $0x7c8] sm:$0xff]
    %v3791 = vld [vmem:[#allocation11 + $0x7d0] sm:$0xff]
    %v3792 = vld [vmem:[#allocation11 + $0x7d8] sm:$0xff]
    %v3793 = vld [vmem:[#allocation11 + $0x7e0] sm:$0xff]
    %v3794 = vld [vmem:[#allocation11 + $0x7e8] sm:$0xff]
    %v3795 = vld [vmem:[#allocation11 + $0x7f0] sm:$0xff]
    %v3796 = vld [vmem:[#allocation11 + $0x7f8] sm:$0xff]
    %v3829 = vunpack.c.l.b16 %v3765
    %v3830 = vunpack.c.h.b16 %v3765
    %v3831 = vunpack.c.l.b16 %v3766
    %v3832 = vunpack.c.h.b16 %v3766
    %v3833 = vunpack.c.l.b16 %v3767
    %v3834 = vunpack.c.h.b16 %v3767
    %v3835 = vunpack.c.l.b16 %v3768
    %v3836 = vunpack.c.h.b16 %v3768
    %v3837 = vunpack.c.l.b16 %v3769
    %v3838 = vunpack.c.h.b16 %v3769
    %v3839 = vunpack.c.l.b16 %v3770
    %v3840 = vunpack.c.h.b16 %v3770
    %v3841 = vunpack.c.l.b16 %v3771
    %v3842 = vunpack.c.h.b16 %v3771
    %v3843 = vunpack.c.l.b16 %v3772
    %v3844 = vunpack.c.h.b16 %v3772
    %v3845 = vunpack.c.l.b16 %v3773
    %v3846 = vunpack.c.h.b16 %v3773
    %v3847 = vunpack.c.l.b16 %v3774
    %v3848 = vunpack.c.h.b16 %v3774
    %v3849 = vunpack.c.l.b16 %v3775
    %v3850 = vunpack.c.h.b16 %v3775
    %v3851 = vunpack.c.l.b16 %v3776
    %v3852 = vunpack.c.h.b16 %v3776
    %v3853 = vunpack.c.l.b16 %v3777
    %v3854 = vunpack.c.h.b16 %v3777
    %v3855 = vunpack.c.l.b16 %v3778
    %v3856 = vunpack.c.h.b16 %v3778
    %v3857 = vunpack.c.l.b16 %v3779
    %v3858 = vunpack.c.h.b16 %v3779
    %v3859 = vunpack.c.l.b16 %v3780
    %v3860 = vunpack.c.h.b16 %v3780
    %v3861 = vunpack.c.l.b16 %v3781
    %v3862 = vunpack.c.h.b16 %v3781
    %v3863 = vunpack.c.l.b16 %v3782
    %v3864 = vunpack.c.h.b16 %v3782
    %v3865 = vunpack.c.l.b16 %v3783
    %v3866 = vunpack.c.h.b16 %v3783
    %v3867 = vunpack.c.l.b16 %v3784
    %v3868 = vunpack.c.h.b16 %v3784
    %v3869 = vunpack.c.l.b16 %v3785
    %v3870 = vunpack.c.h.b16 %v3785
    %v3871 = vunpack.c.l.b16 %v3786
    %v3872 = vunpack.c.h.b16 %v3786
    %v3873 = vunpack.c.l.b16 %v3787
    %v3874 = vunpack.c.h.b16 %v3787
    %v3875 = vunpack.c.l.b16 %v3788
    %v3876 = vunpack.c.h.b16 %v3788
    %v3877 = vunpack.c.l.b16 %v3789
    %v3878 = vunpack.c.h.b16 %v3789
    %v3879 = vunpack.c.l.b16 %v3790
    %v3880 = vunpack.c.h.b16 %v3790
    %v3881 = vunpack.c.l.b16 %v3791
    %v3882 = vunpack.c.h.b16 %v3791
    %v3883 = vunpack.c.l.b16 %v3792
    %v3884 = vunpack.c.h.b16 %v3792
    %v3885 = vunpack.c.l.b16 %v3793
    %v3886 = vunpack.c.h.b16 %v3793
    %v3887 = vunpack.c.l.b16 %v3794
    %v3888 = vunpack.c.h.b16 %v3794
    %v3889 = vunpack.c.l.b16 %v3795
    %v3890 = vunpack.c.h.b16 %v3795
    %v3891 = vunpack.c.l.b16 %v3796
    %v3892 = vunpack.c.h.b16 %v3796
    %v3893 = vpack.c.b16 %v3833, %v3829
    %v3894 = vpack.c.b16 %v3834, %v3830
    %v3895 = vpack.c.b16 %v3835, %v3831
    %v3896 = vpack.c.b16 %v3836, %v3832
    %v3897 = vpack.c.b16 %v3841, %v3837
    %v3898 = vpack.c.b16 %v3842, %v3838
    %v3899 = vpack.c.b16 %v3843, %v3839
    %v3900 = vpack.c.b16 %v3844, %v3840
    %v3901 = vpack.c.b16 %v3849, %v3845
    %v3902 = vpack.c.b16 %v3850, %v3846
    %v3903 = vpack.c.b16 %v3851, %v3847
    %v3904 = vpack.c.b16 %v3852, %v3848
    %v3905 = vpack.c.b16 %v3857, %v3853
    %v3906 = vpack.c.b16 %v3858, %v3854
    %v3907 = vpack.c.b16 %v3859, %v3855
    %v3908 = vpack.c.b16 %v3860, %v3856
    %v3909 = vpack.c.b16 %v3865, %v3861
    %v3910 = vpack.c.b16 %v3866, %v3862
    %v3911 = vpack.c.b16 %v3867, %v3863
    %v3912 = vpack.c.b16 %v3868, %v3864
    %v3913 = vpack.c.b16 %v3873, %v3869
    %v3914 = vpack.c.b16 %v3874, %v3870
    %v3915 = vpack.c.b16 %v3875, %v3871
    %v3916 = vpack.c.b16 %v3876, %v3872
    %v3917 = vpack.c.b16 %v3881, %v3877
    %v3918 = vpack.c.b16 %v3882, %v3878
    %v3919 = vpack.c.b16 %v3883, %v3879
    %v3920 = vpack.c.b16 %v3884, %v3880
    %v3921 = vpack.c.b16 %v3889, %v3885
    %v3922 = vpack.c.b16 %v3890, %v3886
    %v3923 = vpack.c.b16 %v3891, %v3887
    %v3924 = vpack.c.b16 %v3892, %v3888
    %3957 = vmatprep.subr.bf16.mxu0 %v3894
    %3958 = vmatpush1.bf16.msra.mxu0 %v3893
    %3959 = vmatprep.subr.bf16.mxu0 %v3898
    %3960 = vmatpush1.bf16.msra.mxu0 %v3897
    %3961 = vmatprep.subr.bf16.mxu0 %v3902
    %3962 = vmatpush1.bf16.msra.mxu0 %v3901
    %3963 = vmatprep.subr.bf16.mxu0 %v3906
    %3964 = vmatpush1.bf16.msra.mxu0 %v3905
    %3965 = vmatprep.subr.bf16.mxu0 %v3910
    %3966 = vmatpush1.bf16.msra.mxu0 %v3909
    %3967 = vmatprep.subr.bf16.mxu0 %v3914
    %3968 = vmatpush1.bf16.msra.mxu0 %v3913
    %3969 = vmatprep.subr.bf16.mxu0 %v3918
    %3970 = vmatpush1.bf16.msra.mxu0 %v3917
    %3971 = vmatprep.subr.bf16.mxu0 %v3922
    %3972 = vmatpush1.bf16.msra.mxu0 %v3921
    %3973 = vmatprep.subr.bf16.mxu0 0
    %3974 = vmatpush1.bf16.msra.mxu0 0
    %3975 = vmatprep.subr.bf16.mxu0 0
    %3976 = vmatpush1.bf16.msra.mxu0 0
    %3977 = vmatprep.subr.bf16.mxu0 0
    %3978 = vmatpush1.bf16.msra.mxu0 0
    %3979 = vmatprep.subr.bf16.mxu0 0
    %3980 = vmatpush1.bf16.msra.mxu0 0
    %3981 = vmatprep.subr.bf16.mxu0 0
    %3982 = vmatpush1.bf16.msra.mxu0 0
    %3983 = vmatprep.subr.bf16.mxu0 0
    %3984 = vmatpush1.bf16.msra.mxu0 0
    %3985 = vmatprep.subr.bf16.mxu0 0
    %3986 = vmatpush1.bf16.msra.mxu0 0
    %3987 = vmatprep.subr.bf16.mxu0 0
    %3988 = vmatpush1.bf16.msra.mxu0 0
    %3989 = vmatprep.mubr.bf16.mxu0 0
    %3990 = vmatmul.mubr.bf16.gmra.mrb[0].mxu0 %v1818
    %v3991 = vpop.f32.mrb[0].mxu0
    %v3992 = vadd.f32 0.0, %v3991
    %v3993 = vpop.f32.mrb[0].mxu0
    %v3994 = vadd.f32 0.0, %v3993
    %v3995 = vpop.f32.mrb[0].mxu0
    %v3996 = vpop.f32.mrb[0].mxu0
    %3997 = vdwg.mxu0
    %3998 = vmatprep.subr.bf16.mxu0 %v3896
    %3999 = vmatpush1.bf16.msra.mxu0 %v3895
    %4000 = vmatprep.subr.bf16.mxu0 %v3900
    %4001 = vmatpush1.bf16.msra.mxu0 %v3899
    %4002 = vmatprep.subr.bf16.mxu0 %v3904
    %4003 = vmatpush1.bf16.msra.mxu0 %v3903
    %4004 = vmatprep.subr.bf16.mxu0 %v3908
    %4005 = vmatpush1.bf16.msra.mxu0 %v3907
    %4006 = vmatprep.subr.bf16.mxu0 %v3912
    %4007 = vmatpush1.bf16.msra.mxu0 %v3911
    %4008 = vmatprep.subr.bf16.mxu0 %v3916
    %4009 = vmatpush1.bf16.msra.mxu0 %v3915
    %4010 = vmatprep.subr.bf16.mxu0 %v3920
    %4011 = vmatpush1.bf16.msra.mxu0 %v3919
    %4012 = vmatprep.subr.bf16.mxu0 %v3924
    %4013 = vmatpush1.bf16.msra.mxu0 %v3923
    %4014 = vmatprep.subr.bf16.mxu0 0
    %4015 = vmatpush1.bf16.msra.mxu0 0
    %4016 = vmatprep.subr.bf16.mxu0 0
    %4017 = vmatpush1.bf16.msra.mxu0 0
    %4018 = vmatprep.subr.bf16.mxu0 0
    %4019 = vmatpush1.bf16.msra.mxu0 0
    %4020 = vmatprep.subr.bf16.mxu0 0
    %4021 = vmatpush1.bf16.msra.mxu0 0
    %4022 = vmatprep.subr.bf16.mxu0 0
    %4023 = vmatpush1.bf16.msra.mxu0 0
    %4024 = vmatprep.subr.bf16.mxu0 0
    %4025 = vmatpush1.bf16.msra.mxu0 0
    %4026 = vmatprep.subr.bf16.mxu0 0
    %4027 = vmatpush1.bf16.msra.mxu0 0
    %4028 = vmatprep.subr.bf16.mxu0 0
    %4029 = vmatpush1.bf16.msra.mxu0 0
    %4030 = vmatprep.mubr.bf16.mxu0 0
    %4031 = vmatmul.mubr.bf16.gmra.mrb[0].mxu0 %v1818
    %v4032 = vpop.f32.mrb[0].mxu0
    %v4033 = vadd.f32 0.0, %v4032
    %v4034 = vpop.f32.mrb[0].mxu0
    %v4035 = vadd.f32 0.0, %v4034
    %v4036 = vpop.f32.mrb[0].mxu0
    %v4037 = vpop.f32.mrb[0].mxu0
    %4038 = vdwg.mxu0
    %v4039 = vadd.f32 %v3761, %v3992
    %v4040 = vadd.f32 %v3762, %v3994
    %v4041 = vadd.f32 %v3763, %v4033
    %v4042 = vadd.f32 %v3764, %v4035
    %v4043 = vld [vmem:[%s9] sm:$0xf]
    %v4045 = vlaneseq
    %v4046 = vshrl.u32 %v4045, 7
    %v4047 = vsub.s32 0, %v4046
    %v4048 = vrot.slane %v4043, %v4047
    %v4049 = vlaneseq
    %v4050 = vshrl.u32 %v4049, 7
    %v4051 = vsub.s32 1, %v4050
    %v4052 = vrot.slane %v4043, %v4051
    %v4053 = vlaneseq
    %v4054 = vshrl.u32 %v4053, 7
    %v4055 = vsub.s32 2, %v4054
    %v4056 = vrot.slane %v4043, %v4055
    %v4057 = vlaneseq
    %v4058 = vshrl.u32 %v4057, 7
    %v4059 = vsub.s32 3, %v4058
    %v4060 = vrot.slane %v4043, %v4059
    %v4065 = vadd.f32 %v4039, %v4048
    %v4066 = vadd.f32 %v4040, %v4052
    %v4067 = vadd.f32 %v4041, %v4056
    %v4068 = vadd.f32 %v4042, %v4060
    %v4069 = vmax.f32 %v4065, 0.0
    %v4070 = vmax.f32 %v4066, 0.0
    %v4071 = vmax.f32 %v4067, 0.0
    %v4072 = vmax.f32 %v4068, 0.0
    %v4073 = vpack.c.bf16 %v4069, %v4069
    %v4074 = vpack.c.bf16 %v4070, %v4070
    %v4075 = vpack.c.bf16 %v4071, %v4071
    %v4076 = vpack.c.bf16 %v4072, %v4072
    %v4077 = vld [vmem:[#allocation12] sm:$0xff]
    %v4078 = vld [vmem:[#allocation12 + $0x8] sm:$0xff]
    %v4079 = vld [vmem:[#allocation12 + $0x10] sm:$0xff]
    %v4080 = vld [vmem:[#allocation12 + $0x18] sm:$0xff]
    %v4081 = vld [vmem:[#allocation12 + $0x20] sm:$0xff]
    %v4082 = vld [vmem:[#allocation12 + $0x28] sm:$0xff]
    %v4083 = vld [vmem:[#allocation12 + $0x30] sm:$0xff]
    %v4084 = vld [vmem:[#allocation12 + $0x38] sm:$0xff]
    %v4085 = vld [vmem:[#allocation12 + $0x40] sm:$0xff]
    %v4086 = vld [vmem:[#allocation12 + $0x48] sm:$0xff]
    %v4087 = vld [vmem:[#allocation12 + $0x50] sm:$0xff]
    %v4088 = vld [vmem:[#allocation12 + $0x58] sm:$0xff]
    %v4089 = vld [vmem:[#allocation12 + $0x60] sm:$0xff]
    %v4090 = vld [vmem:[#allocation12 + $0x68] sm:$0xff]
    %v4091 = vld [vmem:[#allocation12 + $0x70] sm:$0xff]
    %v4092 = vld [vmem:[#allocation12 + $0x78] sm:$0xff]
    %v4093 = vld [vmem:[#allocation12 + $0x80] sm:$0xff]
    %v4094 = vld [vmem:[#allocation12 + $0x88] sm:$0xff]
    %v4095 = vld [vmem:[#allocation12 + $0x90] sm:$0xff]
    %v4096 = vld [vmem:[#allocation12 + $0x98] sm:$0xff]
    %v4097 = vld [vmem:[#allocation12 + $0xa0] sm:$0xff]
    %v4098 = vld [vmem:[#allocation12 + $0xa8] sm:$0xff]
    %v4099 = vld [vmem:[#allocation12 + $0xb0] sm:$0xff]
    %v4100 = vld [vmem:[#allocation12 + $0xb8] sm:$0xff]
    %v4101 = vld [vmem:[#allocation12 + $0xc0] sm:$0xff]
    %v4102 = vld [vmem:[#allocation12 + $0xc8] sm:$0xff]
    %v4103 = vld [vmem:[#allocation12 + $0xd0] sm:$0xff]
    %v4104 = vld [vmem:[#allocation12 + $0xd8] sm:$0xff]
    %v4105 = vld [vmem:[#allocation12 + $0xe0] sm:$0xff]
    %v4106 = vld [vmem:[#allocation12 + $0xe8] sm:$0xff]
    %v4107 = vld [vmem:[#allocation12 + $0xf0] sm:$0xff]
    %v4108 = vld [vmem:[#allocation12 + $0xf8] sm:$0xff]
    %v4109 = vld [vmem:[#allocation12 + $0x100] sm:$0xff]
    %v4110 = vld [vmem:[#allocation12 + $0x108] sm:$0xff]
    %v4111 = vld [vmem:[#allocation12 + $0x110] sm:$0xff]
    %v4112 = vld [vmem:[#allocation12 + $0x118] sm:$0xff]
    %v4113 = vld [vmem:[#allocation12 + $0x120] sm:$0xff]
    %v4114 = vld [vmem:[#allocation12 + $0x128] sm:$0xff]
    %v4115 = vld [vmem:[#allocation12 + $0x130] sm:$0xff]
    %v4116 = vld [vmem:[#allocation12 + $0x138] sm:$0xff]
    %v4117 = vld [vmem:[#allocation12 + $0x140] sm:$0xff]
    %v4118 = vld [vmem:[#allocation12 + $0x148] sm:$0xff]
    %v4119 = vld [vmem:[#allocation12 + $0x150] sm:$0xff]
    %v4120 = vld [vmem:[#allocation12 + $0x158] sm:$0xff]
    %v4121 = vld [vmem:[#allocation12 + $0x160] sm:$0xff]
    %v4122 = vld [vmem:[#allocation12 + $0x168] sm:$0xff]
    %v4123 = vld [vmem:[#allocation12 + $0x170] sm:$0xff]
    %v4124 = vld [vmem:[#allocation12 + $0x178] sm:$0xff]
    %v4125 = vld [vmem:[#allocation12 + $0x180] sm:$0xff]
    %v4126 = vld [vmem:[#allocation12 + $0x188] sm:$0xff]
    %v4127 = vld [vmem:[#allocation12 + $0x190] sm:$0xff]
    %v4128 = vld [vmem:[#allocation12 + $0x198] sm:$0xff]
    %v4129 = vld [vmem:[#allocation12 + $0x1a0] sm:$0xff]
    %v4130 = vld [vmem:[#allocation12 + $0x1a8] sm:$0xff]
    %v4131 = vld [vmem:[#allocation12 + $0x1b0] sm:$0xff]
    %v4132 = vld [vmem:[#allocation12 + $0x1b8] sm:$0xff]
    %v4133 = vld [vmem:[#allocation12 + $0x1c0] sm:$0xff]
    %v4134 = vld [vmem:[#allocation12 + $0x1c8] sm:$0xff]
    %v4135 = vld [vmem:[#allocation12 + $0x1d0] sm:$0xff]
    %v4136 = vld [vmem:[#allocation12 + $0x1d8] sm:$0xff]
    %v4137 = vld [vmem:[#allocation12 + $0x1e0] sm:$0xff]
    %v4138 = vld [vmem:[#allocation12 + $0x1e8] sm:$0xff]
    %v4139 = vld [vmem:[#allocation12 + $0x1f0] sm:$0xff]
    %v4140 = vld [vmem:[#allocation12 + $0x1f8] sm:$0xff]
    %v4141 = vld [vmem:[#allocation12 + $0x200] sm:$0xff]
    %v4142 = vld [vmem:[#allocation12 + $0x208] sm:$0xff]
    %v4143 = vld [vmem:[#allocation12 + $0x210] sm:$0xff]
    %v4144 = vld [vmem:[#allocation12 + $0x218] sm:$0xff]
    %v4145 = vld [vmem:[#allocation12 + $0x220] sm:$0xff]
    %v4146 = vld [vmem:[#allocation12 + $0x228] sm:$0xff]
    %v4147 = vld [vmem:[#allocation12 + $0x230] sm:$0xff]
    %v4148 = vld [vmem:[#allocation12 + $0x238] sm:$0xff]
    %v4149 = vld [vmem:[#allocation12 + $0x240] sm:$0xff]
    %v4150 = vld [vmem:[#allocation12 + $0x248] sm:$0xff]
    %v4151 = vld [vmem:[#allocation12 + $0x250] sm:$0xff]
    %v4152 = vld [vmem:[#allocation12 + $0x258] sm:$0xff]
    %v4153 = vld [vmem:[#allocation12 + $0x260] sm:$0xff]
    %v4154 = vld [vmem:[#allocation12 + $0x268] sm:$0xff]
    %v4155 = vld [vmem:[#allocation12 + $0x270] sm:$0xff]
    %v4156 = vld [vmem:[#allocation12 + $0x278] sm:$0xff]
    %v4157 = vld [vmem:[#allocation12 + $0x280] sm:$0xff]
    %v4158 = vld [vmem:[#allocation12 + $0x288] sm:$0xff]
    %v4159 = vld [vmem:[#allocation12 + $0x290] sm:$0xff]
    %v4160 = vld [vmem:[#allocation12 + $0x298] sm:$0xff]
    %v4161 = vld [vmem:[#allocation12 + $0x2a0] sm:$0xff]
    %v4162 = vld [vmem:[#allocation12 + $0x2a8] sm:$0xff]
    %v4163 = vld [vmem:[#allocation12 + $0x2b0] sm:$0xff]
    %v4164 = vld [vmem:[#allocation12 + $0x2b8] sm:$0xff]
    %v4165 = vld [vmem:[#allocation12 + $0x2c0] sm:$0xff]
    %v4166 = vld [vmem:[#allocation12 + $0x2c8] sm:$0xff]
    %v4167 = vld [vmem:[#allocation12 + $0x2d0] sm:$0xff]
    %v4168 = vld [vmem:[#allocation12 + $0x2d8] sm:$0xff]
    %v4169 = vld [vmem:[#allocation12 + $0x2e0] sm:$0xff]
    %v4170 = vld [vmem:[#allocation12 + $0x2e8] sm:$0xff]
    %v4171 = vld [vmem:[#allocation12 + $0x2f0] sm:$0xff]
    %v4172 = vld [vmem:[#allocation12 + $0x2f8] sm:$0xff]
    %v4173 = vld [vmem:[#allocation12 + $0x300] sm:$0xff]
    %v4174 = vld [vmem:[#allocation12 + $0x308] sm:$0xff]
    %v4175 = vld [vmem:[#allocation12 + $0x310] sm:$0xff]
    %v4176 = vld [vmem:[#allocation12 + $0x318] sm:$0xff]
    %v4177 = vld [vmem:[#allocation12 + $0x320] sm:$0xff]
    %v4178 = vld [vmem:[#allocation12 + $0x328] sm:$0xff]
    %v4179 = vld [vmem:[#allocation12 + $0x330] sm:$0xff]
    %v4180 = vld [vmem:[#allocation12 + $0x338] sm:$0xff]
    %v4181 = vld [vmem:[#allocation12 + $0x340] sm:$0xff]
    %v4182 = vld [vmem:[#allocation12 + $0x348] sm:$0xff]
    %v4183 = vld [vmem:[#allocation12 + $0x350] sm:$0xff]
    %v4184 = vld [vmem:[#allocation12 + $0x358] sm:$0xff]
    %v4185 = vld [vmem:[#allocation12 + $0x360] sm:$0xff]
    %v4186 = vld [vmem:[#allocation12 + $0x368] sm:$0xff]
    %v4187 = vld [vmem:[#allocation12 + $0x370] sm:$0xff]
    %v4188 = vld [vmem:[#allocation12 + $0x378] sm:$0xff]
    %v4189 = vld [vmem:[#allocation12 + $0x380] sm:$0xff]
    %v4190 = vld [vmem:[#allocation12 + $0x388] sm:$0xff]
    %v4191 = vld [vmem:[#allocation12 + $0x390] sm:$0xff]
    %v4192 = vld [vmem:[#allocation12 + $0x398] sm:$0xff]
    %v4193 = vld [vmem:[#allocation12 + $0x3a0] sm:$0xff]
    %v4194 = vld [vmem:[#allocation12 + $0x3a8] sm:$0xff]
    %v4195 = vld [vmem:[#allocation12 + $0x3b0] sm:$0xff]
    %v4196 = vld [vmem:[#allocation12 + $0x3b8] sm:$0xff]
    %v4197 = vld [vmem:[#allocation12 + $0x3c0] sm:$0xff]
    %v4198 = vld [vmem:[#allocation12 + $0x3c8] sm:$0xff]
    %v4199 = vld [vmem:[#allocation12 + $0x3d0] sm:$0xff]
    %v4200 = vld [vmem:[#allocation12 + $0x3d8] sm:$0xff]
    %v4201 = vld [vmem:[#allocation12 + $0x3e0] sm:$0xff]
    %v4202 = vld [vmem:[#allocation12 + $0x3e8] sm:$0xff]
    %v4203 = vld [vmem:[#allocation12 + $0x3f0] sm:$0xff]
    %v4204 = vld [vmem:[#allocation12 + $0x3f8] sm:$0xff]
    %v4205 = vld [vmem:[%s11] sm:$0xf]
    %v4207 = vlaneseq
    %v4208 = vshrl.u32 %v4207, 7
    %v4209 = vsub.s32 0, %v4208
    %v4210 = vrot.slane %v4205, %v4209
    %v4211 = vlaneseq
    %v4212 = vshrl.u32 %v4211, 7
    %v4213 = vsub.s32 1, %v4212
    %v4214 = vrot.slane %v4205, %v4213
    %v4215 = vlaneseq
    %v4216 = vshrl.u32 %v4215, 7
    %v4217 = vsub.s32 2, %v4216
    %v4218 = vrot.slane %v4205, %v4217
    %v4219 = vlaneseq
    %v4220 = vshrl.u32 %v4219, 7
    %v4221 = vsub.s32 3, %v4220
    %v4222 = vrot.slane %v4205, %v4221
    %v4355 = vunpack.c.l.b16 %v4077
    %v4356 = vunpack.c.h.b16 %v4077
    %v4357 = vunpack.c.l.b16 %v4078
    %v4358 = vunpack.c.h.b16 %v4078
    %v4359 = vunpack.c.l.b16 %v4079
    %v4360 = vunpack.c.h.b16 %v4079
    %v4361 = vunpack.c.l.b16 %v4080
    %v4362 = vunpack.c.h.b16 %v4080
    %v4363 = vunpack.c.l.b16 %v4081
    %v4364 = vunpack.c.h.b16 %v4081
    %v4365 = vunpack.c.l.b16 %v4082
    %v4366 = vunpack.c.h.b16 %v4082
    %v4367 = vunpack.c.l.b16 %v4083
    %v4368 = vunpack.c.h.b16 %v4083
    %v4369 = vunpack.c.l.b16 %v4084
    %v4370 = vunpack.c.h.b16 %v4084
    %v4371 = vunpack.c.l.b16 %v4085
    %v4372 = vunpack.c.h.b16 %v4085
    %v4373 = vunpack.c.l.b16 %v4086
    %v4374 = vunpack.c.h.b16 %v4086
    %v4375 = vunpack.c.l.b16 %v4087
    %v4376 = vunpack.c.h.b16 %v4087
    %v4377 = vunpack.c.l.b16 %v4088
    %v4378 = vunpack.c.h.b16 %v4088
    %v4379 = vunpack.c.l.b16 %v4089
    %v4380 = vunpack.c.h.b16 %v4089
    %v4381 = vunpack.c.l.b16 %v4090
    %v4382 = vunpack.c.h.b16 %v4090
    %v4383 = vunpack.c.l.b16 %v4091
    %v4384 = vunpack.c.h.b16 %v4091
    %v4385 = vunpack.c.l.b16 %v4092
    %v4386 = vunpack.c.h.b16 %v4092
    %v4387 = vunpack.c.l.b16 %v4093
    %v4388 = vunpack.c.h.b16 %v4093
    %v4389 = vunpack.c.l.b16 %v4094
    %v4390 = vunpack.c.h.b16 %v4094
    %v4391 = vunpack.c.l.b16 %v4095
    %v4392 = vunpack.c.h.b16 %v4095
    %v4393 = vunpack.c.l.b16 %v4096
    %v4394 = vunpack.c.h.b16 %v4096
    %v4395 = vunpack.c.l.b16 %v4097
    %v4396 = vunpack.c.h.b16 %v4097
    %v4397 = vunpack.c.l.b16 %v4098
    %v4398 = vunpack.c.h.b16 %v4098
    %v4399 = vunpack.c.l.b16 %v4099
    %v4400 = vunpack.c.h.b16 %v4099
    %v4401 = vunpack.c.l.b16 %v4100
    %v4402 = vunpack.c.h.b16 %v4100
    %v4403 = vunpack.c.l.b16 %v4101
    %v4404 = vunpack.c.h.b16 %v4101
    %v4405 = vunpack.c.l.b16 %v4102
    %v4406 = vunpack.c.h.b16 %v4102
    %v4407 = vunpack.c.l.b16 %v4103
    %v4408 = vunpack.c.h.b16 %v4103
    %v4409 = vunpack.c.l.b16 %v4104
    %v4410 = vunpack.c.h.b16 %v4104
    %v4411 = vunpack.c.l.b16 %v4105
    %v4412 = vunpack.c.h.b16 %v4105
    %v4413 = vunpack.c.l.b16 %v4106
    %v4414 = vunpack.c.h.b16 %v4106
    %v4415 = vunpack.c.l.b16 %v4107
    %v4416 = vunpack.c.h.b16 %v4107
    %v4417 = vunpack.c.l.b16 %v4108
    %v4418 = vunpack.c.h.b16 %v4108
    %v4419 = vunpack.c.l.b16 %v4109
    %v4420 = vunpack.c.h.b16 %v4109
    %v4421 = vunpack.c.l.b16 %v4110
    %v4422 = vunpack.c.h.b16 %v4110
    %v4423 = vunpack.c.l.b16 %v4111
    %v4424 = vunpack.c.h.b16 %v4111
    %v4425 = vunpack.c.l.b16 %v4112
    %v4426 = vunpack.c.h.b16 %v4112
    %v4427 = vunpack.c.l.b16 %v4113
    %v4428 = vunpack.c.h.b16 %v4113
    %v4429 = vunpack.c.l.b16 %v4114
    %v4430 = vunpack.c.h.b16 %v4114
    %v4431 = vunpack.c.l.b16 %v4115
    %v4432 = vunpack.c.h.b16 %v4115
    %v4433 = vunpack.c.l.b16 %v4116
    %v4434 = vunpack.c.h.b16 %v4116
    %v4435 = vunpack.c.l.b16 %v4117
    %v4436 = vunpack.c.h.b16 %v4117
    %v4437 = vunpack.c.l.b16 %v4118
    %v4438 = vunpack.c.h.b16 %v4118
    %v4439 = vunpack.c.l.b16 %v4119
    %v4440 = vunpack.c.h.b16 %v4119
    %v4441 = vunpack.c.l.b16 %v4120
    %v4442 = vunpack.c.h.b16 %v4120
    %v4443 = vunpack.c.l.b16 %v4121
    %v4444 = vunpack.c.h.b16 %v4121
    %v4445 = vunpack.c.l.b16 %v4122
    %v4446 = vunpack.c.h.b16 %v4122
    %v4447 = vunpack.c.l.b16 %v4123
    %v4448 = vunpack.c.h.b16 %v4123
    %v4449 = vunpack.c.l.b16 %v4124
    %v4450 = vunpack.c.h.b16 %v4124
    %v4451 = vunpack.c.l.b16 %v4125
    %v4452 = vunpack.c.h.b16 %v4125
    %v4453 = vunpack.c.l.b16 %v4126
    %v4454 = vunpack.c.h.b16 %v4126
    %v4455 = vunpack.c.l.b16 %v4127
    %v4456 = vunpack.c.h.b16 %v4127
    %v4457 = vunpack.c.l.b16 %v4128
    %v4458 = vunpack.c.h.b16 %v4128
    %v4459 = vunpack.c.l.b16 %v4129
    %v4460 = vunpack.c.h.b16 %v4129
    %v4461 = vunpack.c.l.b16 %v4130
    %v4462 = vunpack.c.h.b16 %v4130
    %v4463 = vunpack.c.l.b16 %v4131
    %v4464 = vunpack.c.h.b16 %v4131
    %v4465 = vunpack.c.l.b16 %v4132
    %v4466 = vunpack.c.h.b16 %v4132
    %v4467 = vunpack.c.l.b16 %v4133
    %v4468 = vunpack.c.h.b16 %v4133
    %v4469 = vunpack.c.l.b16 %v4134
    %v4470 = vunpack.c.h.b16 %v4134
    %v4471 = vunpack.c.l.b16 %v4135
    %v4472 = vunpack.c.h.b16 %v4135
    %v4473 = vunpack.c.l.b16 %v4136
    %v4474 = vunpack.c.h.b16 %v4136
    %v4475 = vunpack.c.l.b16 %v4137
    %v4476 = vunpack.c.h.b16 %v4137
    %v4477 = vunpack.c.l.b16 %v4138
    %v4478 = vunpack.c.h.b16 %v4138
    %v4479 = vunpack.c.l.b16 %v4139
    %v4480 = vunpack.c.h.b16 %v4139
    %v4481 = vunpack.c.l.b16 %v4140
    %v4482 = vunpack.c.h.b16 %v4140
    %v4483 = vunpack.c.l.b16 %v4141
    %v4484 = vunpack.c.h.b16 %v4141
    %v4485 = vunpack.c.l.b16 %v4142
    %v4486 = vunpack.c.h.b16 %v4142
    %v4487 = vunpack.c.l.b16 %v4143
    %v4488 = vunpack.c.h.b16 %v4143
    %v4489 = vunpack.c.l.b16 %v4144
    %v4490 = vunpack.c.h.b16 %v4144
    %v4491 = vunpack.c.l.b16 %v4145
    %v4492 = vunpack.c.h.b16 %v4145
    %v4493 = vunpack.c.l.b16 %v4146
    %v4494 = vunpack.c.h.b16 %v4146
    %v4495 = vunpack.c.l.b16 %v4147
    %v4496 = vunpack.c.h.b16 %v4147
    %v4497 = vunpack.c.l.b16 %v4148
    %v4498 = vunpack.c.h.b16 %v4148
    %v4499 = vunpack.c.l.b16 %v4149
    %v4500 = vunpack.c.h.b16 %v4149
    %v4501 = vunpack.c.l.b16 %v4150
    %v4502 = vunpack.c.h.b16 %v4150
    %v4503 = vunpack.c.l.b16 %v4151
    %v4504 = vunpack.c.h.b16 %v4151
    %v4505 = vunpack.c.l.b16 %v4152
    %v4506 = vunpack.c.h.b16 %v4152
    %v4507 = vunpack.c.l.b16 %v4153
    %v4508 = vunpack.c.h.b16 %v4153
    %v4509 = vunpack.c.l.b16 %v4154
    %v4510 = vunpack.c.h.b16 %v4154
    %v4511 = vunpack.c.l.b16 %v4155
    %v4512 = vunpack.c.h.b16 %v4155
    %v4513 = vunpack.c.l.b16 %v4156
    %v4514 = vunpack.c.h.b16 %v4156
    %v4515 = vunpack.c.l.b16 %v4157
    %v4516 = vunpack.c.h.b16 %v4157
    %v4517 = vunpack.c.l.b16 %v4158
    %v4518 = vunpack.c.h.b16 %v4158
    %v4519 = vunpack.c.l.b16 %v4159
    %v4520 = vunpack.c.h.b16 %v4159
    %v4521 = vunpack.c.l.b16 %v4160
    %v4522 = vunpack.c.h.b16 %v4160
    %v4523 = vunpack.c.l.b16 %v4161
    %v4524 = vunpack.c.h.b16 %v4161
    %v4525 = vunpack.c.l.b16 %v4162
    %v4526 = vunpack.c.h.b16 %v4162
    %v4527 = vunpack.c.l.b16 %v4163
    %v4528 = vunpack.c.h.b16 %v4163
    %v4529 = vunpack.c.l.b16 %v4164
    %v4530 = vunpack.c.h.b16 %v4164
    %v4531 = vunpack.c.l.b16 %v4165
    %v4532 = vunpack.c.h.b16 %v4165
    %v4533 = vunpack.c.l.b16 %v4166
    %v4534 = vunpack.c.h.b16 %v4166
    %v4535 = vunpack.c.l.b16 %v4167
    %v4536 = vunpack.c.h.b16 %v4167
    %v4537 = vunpack.c.l.b16 %v4168
    %v4538 = vunpack.c.h.b16 %v4168
    %v4539 = vunpack.c.l.b16 %v4169
    %v4540 = vunpack.c.h.b16 %v4169
    %v4541 = vunpack.c.l.b16 %v4170
    %v4542 = vunpack.c.h.b16 %v4170
    %v4543 = vunpack.c.l.b16 %v4171
    %v4544 = vunpack.c.h.b16 %v4171
    %v4545 = vunpack.c.l.b16 %v4172
    %v4546 = vunpack.c.h.b16 %v4172
    %v4547 = vunpack.c.l.b16 %v4173
    %v4548 = vunpack.c.h.b16 %v4173
    %v4549 = vunpack.c.l.b16 %v4174
    %v4550 = vunpack.c.h.b16 %v4174
    %v4551 = vunpack.c.l.b16 %v4175
    %v4552 = vunpack.c.h.b16 %v4175
    %v4553 = vunpack.c.l.b16 %v4176
    %v4554 = vunpack.c.h.b16 %v4176
    %v4555 = vunpack.c.l.b16 %v4177
    %v4556 = vunpack.c.h.b16 %v4177
    %v4557 = vunpack.c.l.b16 %v4178
    %v4558 = vunpack.c.h.b16 %v4178
    %v4559 = vunpack.c.l.b16 %v4179
    %v4560 = vunpack.c.h.b16 %v4179
    %v4561 = vunpack.c.l.b16 %v4180
    %v4562 = vunpack.c.h.b16 %v4180
    %v4563 = vunpack.c.l.b16 %v4181
    %v4564 = vunpack.c.h.b16 %v4181
    %v4565 = vunpack.c.l.b16 %v4182
    %v4566 = vunpack.c.h.b16 %v4182
    %v4567 = vunpack.c.l.b16 %v4183
    %v4568 = vunpack.c.h.b16 %v4183
    %v4569 = vunpack.c.l.b16 %v4184
    %v4570 = vunpack.c.h.b16 %v4184
    %v4571 = vunpack.c.l.b16 %v4185
    %v4572 = vunpack.c.h.b16 %v4185
    %v4573 = vunpack.c.l.b16 %v4186
    %v4574 = vunpack.c.h.b16 %v4186
    %v4575 = vunpack.c.l.b16 %v4187
    %v4576 = vunpack.c.h.b16 %v4187
    %v4577 = vunpack.c.l.b16 %v4188
    %v4578 = vunpack.c.h.b16 %v4188
    %v4579 = vunpack.c.l.b16 %v4189
    %v4580 = vunpack.c.h.b16 %v4189
    %v4581 = vunpack.c.l.b16 %v4190
    %v4582 = vunpack.c.h.b16 %v4190
    %v4583 = vunpack.c.l.b16 %v4191
    %v4584 = vunpack.c.h.b16 %v4191
    %v4585 = vunpack.c.l.b16 %v4192
    %v4586 = vunpack.c.h.b16 %v4192
    %v4587 = vunpack.c.l.b16 %v4193
    %v4588 = vunpack.c.h.b16 %v4193
    %v4589 = vunpack.c.l.b16 %v4194
    %v4590 = vunpack.c.h.b16 %v4194
    %v4591 = vunpack.c.l.b16 %v4195
    %v4592 = vunpack.c.h.b16 %v4195
    %v4593 = vunpack.c.l.b16 %v4196
    %v4594 = vunpack.c.h.b16 %v4196
    %v4595 = vunpack.c.l.b16 %v4197
    %v4596 = vunpack.c.h.b16 %v4197
    %v4597 = vunpack.c.l.b16 %v4198
    %v4598 = vunpack.c.h.b16 %v4198
    %v4599 = vunpack.c.l.b16 %v4199
    %v4600 = vunpack.c.h.b16 %v4199
    %v4601 = vunpack.c.l.b16 %v4200
    %v4602 = vunpack.c.h.b16 %v4200
    %v4603 = vunpack.c.l.b16 %v4201
    %v4604 = vunpack.c.h.b16 %v4201
    %v4605 = vunpack.c.l.b16 %v4202
    %v4606 = vunpack.c.h.b16 %v4202
    %v4607 = vunpack.c.l.b16 %v4203
    %v4608 = vunpack.c.h.b16 %v4203
    %v4609 = vunpack.c.l.b16 %v4204
    %v4610 = vunpack.c.h.b16 %v4204
    %v4611 = vpack.c.b16 %v4359, %v4355
    %v4612 = vpack.c.b16 %v4360, %v4356
    %v4613 = vpack.c.b16 %v4361, %v4357
    %v4614 = vpack.c.b16 %v4362, %v4358
    %v4615 = vpack.c.b16 %v4367, %v4363
    %v4616 = vpack.c.b16 %v4368, %v4364
    %v4617 = vpack.c.b16 %v4369, %v4365
    %v4618 = vpack.c.b16 %v4370, %v4366
    %v4619 = vpack.c.b16 %v4375, %v4371
    %v4620 = vpack.c.b16 %v4376, %v4372
    %v4621 = vpack.c.b16 %v4377, %v4373
    %v4622 = vpack.c.b16 %v4378, %v4374
    %v4623 = vpack.c.b16 %v4383, %v4379
    %v4624 = vpack.c.b16 %v4384, %v4380
    %v4625 = vpack.c.b16 %v4385, %v4381
    %v4626 = vpack.c.b16 %v4386, %v4382
    %v4627 = vpack.c.b16 %v4391, %v4387
    %v4628 = vpack.c.b16 %v4392, %v4388
    %v4629 = vpack.c.b16 %v4393, %v4389
    %v4630 = vpack.c.b16 %v4394, %v4390
    %v4631 = vpack.c.b16 %v4399, %v4395
    %v4632 = vpack.c.b16 %v4400, %v4396
    %v4633 = vpack.c.b16 %v4401, %v4397
    %v4634 = vpack.c.b16 %v4402, %v4398
    %v4635 = vpack.c.b16 %v4407, %v4403
    %v4636 = vpack.c.b16 %v4408, %v4404
    %v4637 = vpack.c.b16 %v4409, %v4405
    %v4638 = vpack.c.b16 %v4410, %v4406
    %v4639 = vpack.c.b16 %v4415, %v4411
    %v4640 = vpack.c.b16 %v4416, %v4412
    %v4641 = vpack.c.b16 %v4417, %v4413
    %v4642 = vpack.c.b16 %v4418, %v4414
    %v4643 = vpack.c.b16 %v4423, %v4419
    %v4644 = vpack.c.b16 %v4424, %v4420
    %v4645 = vpack.c.b16 %v4425, %v4421
    %v4646 = vpack.c.b16 %v4426, %v4422
    %v4647 = vpack.c.b16 %v4431, %v4427
    %v4648 = vpack.c.b16 %v4432, %v4428
    %v4649 = vpack.c.b16 %v4433, %v4429
    %v4650 = vpack.c.b16 %v4434, %v4430
    %v4651 = vpack.c.b16 %v4439, %v4435
    %v4652 = vpack.c.b16 %v4440, %v4436
    %v4653 = vpack.c.b16 %v4441, %v4437
    %v4654 = vpack.c.b16 %v4442, %v4438
    %v4655 = vpack.c.b16 %v4447, %v4443
    %v4656 = vpack.c.b16 %v4448, %v4444
    %v4657 = vpack.c.b16 %v4449, %v4445
    %v4658 = vpack.c.b16 %v4450, %v4446
    %v4659 = vpack.c.b16 %v4455, %v4451
    %v4660 = vpack.c.b16 %v4456, %v4452
    %v4661 = vpack.c.b16 %v4457, %v4453
    %v4662 = vpack.c.b16 %v4458, %v4454
    %v4663 = vpack.c.b16 %v4463, %v4459
    %v4664 = vpack.c.b16 %v4464, %v4460
    %v4665 = vpack.c.b16 %v4465, %v4461
    %v4666 = vpack.c.b16 %v4466, %v4462
    %v4667 = vpack.c.b16 %v4471, %v4467
    %v4668 = vpack.c.b16 %v4472, %v4468
    %v4669 = vpack.c.b16 %v4473, %v4469
    %v4670 = vpack.c.b16 %v4474, %v4470
    %v4671 = vpack.c.b16 %v4479, %v4475
    %v4672 = vpack.c.b16 %v4480, %v4476
    %v4673 = vpack.c.b16 %v4481, %v4477
    %v4674 = vpack.c.b16 %v4482, %v4478
    %v4675 = vpack.c.b16 %v4487, %v4483
    %v4676 = vpack.c.b16 %v4488, %v4484
    %v4677 = vpack.c.b16 %v4489, %v4485
    %v4678 = vpack.c.b16 %v4490, %v4486
    %v4679 = vpack.c.b16 %v4495, %v4491
    %v4680 = vpack.c.b16 %v4496, %v4492
    %v4681 = vpack.c.b16 %v4497, %v4493
    %v4682 = vpack.c.b16 %v4498, %v4494
    %v4683 = vpack.c.b16 %v4503, %v4499
    %v4684 = vpack.c.b16 %v4504, %v4500
    %v4685 = vpack.c.b16 %v4505, %v4501
    %v4686 = vpack.c.b16 %v4506, %v4502
    %v4687 = vpack.c.b16 %v4511, %v4507
    %v4688 = vpack.c.b16 %v4512, %v4508
    %v4689 = vpack.c.b16 %v4513, %v4509
    %v4690 = vpack.c.b16 %v4514, %v4510
    %v4691 = vpack.c.b16 %v4519, %v4515
    %v4692 = vpack.c.b16 %v4520, %v4516
    %v4693 = vpack.c.b16 %v4521, %v4517
    %v4694 = vpack.c.b16 %v4522, %v4518
    %v4695 = vpack.c.b16 %v4527, %v4523
    %v4696 = vpack.c.b16 %v4528, %v4524
    %v4697 = vpack.c.b16 %v4529, %v4525
    %v4698 = vpack.c.b16 %v4530, %v4526
    %v4699 = vpack.c.b16 %v4535, %v4531
    %v4700 = vpack.c.b16 %v4536, %v4532
    %v4701 = vpack.c.b16 %v4537, %v4533
    %v4702 = vpack.c.b16 %v4538, %v4534
    %v4703 = vpack.c.b16 %v4543, %v4539
    %v4704 = vpack.c.b16 %v4544, %v4540
    %v4705 = vpack.c.b16 %v4545, %v4541
    %v4706 = vpack.c.b16 %v4546, %v4542
    %v4707 = vpack.c.b16 %v4551, %v4547
    %v4708 = vpack.c.b16 %v4552, %v4548
    %v4709 = vpack.c.b16 %v4553, %v4549
    %v4710 = vpack.c.b16 %v4554, %v4550
    %v4711 = vpack.c.b16 %v4559, %v4555
    %v4712 = vpack.c.b16 %v4560, %v4556
    %v4713 = vpack.c.b16 %v4561, %v4557
    %v4714 = vpack.c.b16 %v4562, %v4558
    %v4715 = vpack.c.b16 %v4567, %v4563
    %v4716 = vpack.c.b16 %v4568, %v4564
    %v4717 = vpack.c.b16 %v4569, %v4565
    %v4718 = vpack.c.b16 %v4570, %v4566
    %v4719 = vpack.c.b16 %v4575, %v4571
    %v4720 = vpack.c.b16 %v4576, %v4572
    %v4721 = vpack.c.b16 %v4577, %v4573
    %v4722 = vpack.c.b16 %v4578, %v4574
    %v4723 = vpack.c.b16 %v4583, %v4579
    %v4724 = vpack.c.b16 %v4584, %v4580
    %v4725 = vpack.c.b16 %v4585, %v4581
    %v4726 = vpack.c.b16 %v4586, %v4582
    %v4727 = vpack.c.b16 %v4591, %v4587
    %v4728 = vpack.c.b16 %v4592, %v4588
    %v4729 = vpack.c.b16 %v4593, %v4589
    %v4730 = vpack.c.b16 %v4594, %v4590
    %v4731 = vpack.c.b16 %v4599, %v4595
    %v4732 = vpack.c.b16 %v4600, %v4596
    %v4733 = vpack.c.b16 %v4601, %v4597
    %v4734 = vpack.c.b16 %v4602, %v4598
    %v4735 = vpack.c.b16 %v4607, %v4603
    %v4736 = vpack.c.b16 %v4608, %v4604
    %v4737 = vpack.c.b16 %v4609, %v4605
    %v4738 = vpack.c.b16 %v4610, %v4606
    %4867 = vmatprep.subr.bf16.mxu0 %v4612
    %4868 = vmatpush1.bf16.msra.mxu0 %v4611
    %4869 = vmatprep.subr.bf16.mxu0 %v4616
    %4870 = vmatpush1.bf16.msra.mxu0 %v4615
    %4871 = vmatprep.subr.bf16.mxu0 %v4620
    %4872 = vmatpush1.bf16.msra.mxu0 %v4619
    %4873 = vmatprep.subr.bf16.mxu0 %v4624
    %4874 = vmatpush1.bf16.msra.mxu0 %v4623
    %4875 = vmatprep.subr.bf16.mxu0 %v4628
    %4876 = vmatpush1.bf16.msra.mxu0 %v4627
    %4877 = vmatprep.subr.bf16.mxu0 %v4632
    %4878 = vmatpush1.bf16.msra.mxu0 %v4631
    %4879 = vmatprep.subr.bf16.mxu0 %v4636
    %4880 = vmatpush1.bf16.msra.mxu0 %v4635
    %4881 = vmatprep.subr.bf16.mxu0 %v4640
    %4882 = vmatpush1.bf16.msra.mxu0 %v4639
    %4883 = vmatprep.subr.bf16.mxu0 %v4644
    %4884 = vmatpush1.bf16.msra.mxu0 %v4643
    %4885 = vmatprep.subr.bf16.mxu0 %v4648
    %4886 = vmatpush1.bf16.msra.mxu0 %v4647
    %4887 = vmatprep.subr.bf16.mxu0 %v4652
    %4888 = vmatpush1.bf16.msra.mxu0 %v4651
    %4889 = vmatprep.subr.bf16.mxu0 %v4656
    %4890 = vmatpush1.bf16.msra.mxu0 %v4655
    %4891 = vmatprep.subr.bf16.mxu0 %v4660
    %4892 = vmatpush1.bf16.msra.mxu0 %v4659
    %4893 = vmatprep.subr.bf16.mxu0 %v4664
    %4894 = vmatpush1.bf16.msra.mxu0 %v4663
    %4895 = vmatprep.subr.bf16.mxu0 %v4668
    %4896 = vmatpush1.bf16.msra.mxu0 %v4667
    %4897 = vmatprep.subr.bf16.mxu0 %v4672
    %4898 = vmatpush1.bf16.msra.mxu0 %v4671
    %4899 = vmatprep.mubr.bf16.mxu0 %v4074
    %4900 = vmatmul.mubr.bf16.gmra.mrb[0].mxu0 %v4073
    %v4901 = vpop.f32.mrb[0].mxu0
    %v4902 = vadd.f32 %v4210, %v4901
    %v4903 = vpop.f32.mrb[0].mxu0
    %v4904 = vadd.f32 %v4214, %v4903
    %v4905 = vpop.f32.mrb[0].mxu0
    %v4906 = vpop.f32.mrb[0].mxu0
    %4907 = vdwg.mxu0
    %4908 = vmatprep.subr.bf16.mxu0 %v4676
    %4909 = vmatpush1.bf16.msra.mxu0 %v4675
    %4910 = vmatprep.subr.bf16.mxu0 %v4680
    %4911 = vmatpush1.bf16.msra.mxu0 %v4679
    %4912 = vmatprep.subr.bf16.mxu0 %v4684
    %4913 = vmatpush1.bf16.msra.mxu0 %v4683
    %4914 = vmatprep.subr.bf16.mxu0 %v4688
    %4915 = vmatpush1.bf16.msra.mxu0 %v4687
    %4916 = vmatprep.subr.bf16.mxu0 %v4692
    %4917 = vmatpush1.bf16.msra.mxu0 %v4691
    %4918 = vmatprep.subr.bf16.mxu0 %v4696
    %4919 = vmatpush1.bf16.msra.mxu0 %v4695
    %4920 = vmatprep.subr.bf16.mxu0 %v4700
    %4921 = vmatpush1.bf16.msra.mxu0 %v4699
    %4922 = vmatprep.subr.bf16.mxu0 %v4704
    %4923 = vmatpush1.bf16.msra.mxu0 %v4703
    %4924 = vmatprep.subr.bf16.mxu0 %v4708
    %4925 = vmatpush1.bf16.msra.mxu0 %v4707
    %4926 = vmatprep.subr.bf16.mxu0 %v4712
    %4927 = vmatpush1.bf16.msra.mxu0 %v4711
    %4928 = vmatprep.subr.bf16.mxu0 %v4716
    %4929 = vmatpush1.bf16.msra.mxu0 %v4715
    %4930 = vmatprep.subr.bf16.mxu0 %v4720
    %4931 = vmatpush1.bf16.msra.mxu0 %v4719
    %4932 = vmatprep.subr.bf16.mxu0 %v4724
    %4933 = vmatpush1.bf16.msra.mxu0 %v4723
    %4934 = vmatprep.subr.bf16.mxu0 %v4728
    %4935 = vmatpush1.bf16.msra.mxu0 %v4727
    %4936 = vmatprep.subr.bf16.mxu0 %v4732
    %4937 = vmatpush1.bf16.msra.mxu0 %v4731
    %4938 = vmatprep.subr.bf16.mxu0 %v4736
    %4939 = vmatpush1.bf16.msra.mxu0 %v4735
    %4940 = vmatprep.mubr.bf16.mxu0 %v4076
    %4941 = vmatmul.mubr.bf16.gmra.mrb[0].mxu0 %v4075
    %v4942 = vpop.f32.mrb[0].mxu0
    %v4943 = vadd.f32 %v4902, %v4942
    %v4944 = vpop.f32.mrb[0].mxu0
    %v4945 = vadd.f32 %v4904, %v4944
    %v4946 = vpop.f32.mrb[0].mxu0
    %v4947 = vpop.f32.mrb[0].mxu0
    %4948 = vdwg.mxu0
    %4949 = vmatprep.subr.bf16.mxu0 %v4614
    %4950 = vmatpush1.bf16.msra.mxu0 %v4613
    %4951 = vmatprep.subr.bf16.mxu0 %v4618
    %4952 = vmatpush1.bf16.msra.mxu0 %v4617
    %4953 = vmatprep.subr.bf16.mxu0 %v4622
    %4954 = vmatpush1.bf16.msra.mxu0 %v4621
    %4955 = vmatprep.subr.bf16.mxu0 %v4626
    %4956 = vmatpush1.bf16.msra.mxu0 %v4625
    %4957 = vmatprep.subr.bf16.mxu0 %v4630
    %4958 = vmatpush1.bf16.msra.mxu0 %v4629
    %4959 = vmatprep.subr.bf16.mxu0 %v4634
    %4960 = vmatpush1.bf16.msra.mxu0 %v4633
    %4961 = vmatprep.subr.bf16.mxu0 %v4638
    %4962 = vmatpush1.bf16.msra.mxu0 %v4637
    %4963 = vmatprep.subr.bf16.mxu0 %v4642
    %4964 = vmatpush1.bf16.msra.mxu0 %v4641
    %4965 = vmatprep.subr.bf16.mxu0 %v4646
    %4966 = vmatpush1.bf16.msra.mxu0 %v4645
    %4967 = vmatprep.subr.bf16.mxu0 %v4650
    %4968 = vmatpush1.bf16.msra.mxu0 %v4649
    %4969 = vmatprep.subr.bf16.mxu0 %v4654
    %4970 = vmatpush1.bf16.msra.mxu0 %v4653
    %4971 = vmatprep.subr.bf16.mxu0 %v4658
    %4972 = vmatpush1.bf16.msra.mxu0 %v4657
    %4973 = vmatprep.subr.bf16.mxu0 %v4662
    %4974 = vmatpush1.bf16.msra.mxu0 %v4661
    %4975 = vmatprep.subr.bf16.mxu0 %v4666
    %4976 = vmatpush1.bf16.msra.mxu0 %v4665
    %4977 = vmatprep.subr.bf16.mxu0 %v4670
    %4978 = vmatpush1.bf16.msra.mxu0 %v4669
    %4979 = vmatprep.subr.bf16.mxu0 %v4674
    %4980 = vmatpush1.bf16.msra.mxu0 %v4673
    %4981 = vmatprep.mubr.bf16.mxu0 %v4074
    %4982 = vmatmul.mubr.bf16.gmra.mrb[0].mxu0 %v4073
    %v4983 = vpop.f32.mrb[0].mxu0
    %v4984 = vadd.f32 %v4218, %v4983
    %v4985 = vpop.f32.mrb[0].mxu0
    %v4986 = vadd.f32 %v4222, %v4985
    %v4987 = vpop.f32.mrb[0].mxu0
    %v4988 = vpop.f32.mrb[0].mxu0
    %4989 = vdwg.mxu0
    %4990 = vmatprep.subr.bf16.mxu0 %v4678
    %4991 = vmatpush1.bf16.msra.mxu0 %v4677
    %4992 = vmatprep.subr.bf16.mxu0 %v4682
    %4993 = vmatpush1.bf16.msra.mxu0 %v4681
    %4994 = vmatprep.subr.bf16.mxu0 %v4686
    %4995 = vmatpush1.bf16.msra.mxu0 %v4685
    %4996 = vmatprep.subr.bf16.mxu0 %v4690
    %4997 = vmatpush1.bf16.msra.mxu0 %v4689
    %4998 = vmatprep.subr.bf16.mxu0 %v4694
    %4999 = vmatpush1.bf16.msra.mxu0 %v4693
    %5000 = vmatprep.subr.bf16.mxu0 %v4698
    %5001 = vmatpush1.bf16.msra.mxu0 %v4697
    %5002 = vmatprep.subr.bf16.mxu0 %v4702
    %5003 = vmatpush1.bf16.msra.mxu0 %v4701
    %5004 = vmatprep.subr.bf16.mxu0 %v4706
    %5005 = vmatpush1.bf16.msra.mxu0 %v4705
    %5006 = vmatprep.subr.bf16.mxu0 %v4710
    %5007 = vmatpush1.bf16.msra.mxu0 %v4709
    %5008 = vmatprep.subr.bf16.mxu0 %v4714
    %5009 = vmatpush1.bf16.msra.mxu0 %v4713
    %5010 = vmatprep.subr.bf16.mxu0 %v4718
    %5011 = vmatpush1.bf16.msra.mxu0 %v4717
    %5012 = vmatprep.subr.bf16.mxu0 %v4722
    %5013 = vmatpush1.bf16.msra.mxu0 %v4721
    %5014 = vmatprep.subr.bf16.mxu0 %v4726
    %5015 = vmatpush1.bf16.msra.mxu0 %v4725
    %5016 = vmatprep.subr.bf16.mxu0 %v4730
    %5017 = vmatpush1.bf16.msra.mxu0 %v4729
    %5018 = vmatprep.subr.bf16.mxu0 %v4734
    %5019 = vmatpush1.bf16.msra.mxu0 %v4733
    %5020 = vmatprep.subr.bf16.mxu0 %v4738
    %5021 = vmatpush1.bf16.msra.mxu0 %v4737
    %5022 = vmatprep.mubr.bf16.mxu0 %v4076
    %5023 = vmatmul.mubr.bf16.gmra.mrb[0].mxu0 %v4075
    %v5024 = vpop.f32.mrb[0].mxu0
    %v5025 = vadd.f32 %v4984, %v5024
    %v5026 = vpop.f32.mrb[0].mxu0
    %v5027 = vadd.f32 %v4986, %v5026
    %v5028 = vpop.f32.mrb[0].mxu0
    %v5029 = vpop.f32.mrb[0].mxu0
    %5030 = vdwg.mxu0
    %v5031 = vmax.f32 %v4943, 0.0
    %v5032 = vmax.f32 %v4945, 0.0
    %v5033 = vmax.f32 %v5025, 0.0
    %v5034 = vmax.f32 %v5027, 0.0
    %v5035 = vpack.c.bf16 %v5031, %v5031
    %v5036 = vpack.c.bf16 %v5032, %v5032
    %v5037 = vpack.c.bf16 %v5033, %v5033
    %v5038 = vpack.c.bf16 %v5034, %v5034
    %v5039 = vld [vmem:[#allocation14] sm:$0xf]
    %v5040 = vld [vmem:[#allocation14 + $0x4] sm:$0xf]
    %v5041 = vld [vmem:[#allocation14 + $0x8] sm:$0xf]
    %v5042 = vld [vmem:[#allocation14 + $0xc] sm:$0xf]
    %v5043 = vld [vmem:[#allocation14 + $0x10] sm:$0xf]
    %v5044 = vld [vmem:[#allocation14 + $0x14] sm:$0xf]
    %v5045 = vld [vmem:[#allocation14 + $0x18] sm:$0xf]
    %v5046 = vld [vmem:[#allocation14 + $0x1c] sm:$0xf]
    %v5047 = vld [vmem:[#allocation14 + $0x20] sm:$0xf]
    %v5048 = vld [vmem:[#allocation14 + $0x24] sm:$0xf]
    %v5049 = vld [vmem:[#allocation14 + $0x28] sm:$0xf]
    %v5050 = vld [vmem:[#allocation14 + $0x2c] sm:$0xf]
    %v5051 = vld [vmem:[#allocation14 + $0x30] sm:$0xf]
    %v5052 = vld [vmem:[#allocation14 + $0x34] sm:$0xf]
    %v5053 = vld [vmem:[#allocation14 + $0x38] sm:$0xf]
    %v5054 = vld [vmem:[#allocation14 + $0x3c] sm:$0xf]
    %v5055 = vld [vmem:[#allocation14 + $0x40] sm:$0xf]
    %v5056 = vld [vmem:[#allocation14 + $0x44] sm:$0xf]
    %v5057 = vld [vmem:[#allocation14 + $0x48] sm:$0xf]
    %v5058 = vld [vmem:[#allocation14 + $0x4c] sm:$0xf]
    %v5059 = vld [vmem:[#allocation14 + $0x50] sm:$0xf]
    %v5060 = vld [vmem:[#allocation14 + $0x54] sm:$0xf]
    %v5061 = vld [vmem:[#allocation14 + $0x58] sm:$0xf]
    %v5062 = vld [vmem:[#allocation14 + $0x5c] sm:$0xf]
    %v5063 = vld [vmem:[#allocation14 + $0x60] sm:$0xf]
    %v5064 = vld [vmem:[#allocation14 + $0x64] sm:$0xf]
    %v5065 = vld [vmem:[#allocation14 + $0x68] sm:$0xf]
    %v5066 = vld [vmem:[#allocation14 + $0x6c] sm:$0xf]
    %v5067 = vld [vmem:[#allocation14 + $0x70] sm:$0xf]
    %v5068 = vld [vmem:[#allocation14 + $0x74] sm:$0xf]
    %v5069 = vld [vmem:[#allocation14 + $0x78] sm:$0xf]
    %v5070 = vld [vmem:[#allocation14 + $0x7c] sm:$0xf]
    %v5071 = vld [vmem:[#allocation14 + $0x80] sm:$0xf]
    %v5072 = vld [vmem:[#allocation14 + $0x84] sm:$0xf]
    %v5073 = vld [vmem:[#allocation14 + $0x88] sm:$0xf]
    %v5074 = vld [vmem:[#allocation14 + $0x8c] sm:$0xf]
    %v5075 = vld [vmem:[#allocation14 + $0x90] sm:$0xf]
    %v5076 = vld [vmem:[#allocation14 + $0x94] sm:$0xf]
    %v5077 = vld [vmem:[#allocation14 + $0x98] sm:$0xf]
    %v5078 = vld [vmem:[#allocation14 + $0x9c] sm:$0xf]
    %v5079 = vld [vmem:[#allocation14 + $0xa0] sm:$0xf]
    %v5080 = vld [vmem:[#allocation14 + $0xa4] sm:$0xf]
    %v5081 = vld [vmem:[#allocation14 + $0xa8] sm:$0xf]
    %v5082 = vld [vmem:[#allocation14 + $0xac] sm:$0xf]
    %v5083 = vld [vmem:[#allocation14 + $0xb0] sm:$0xf]
    %v5084 = vld [vmem:[#allocation14 + $0xb4] sm:$0xf]
    %v5085 = vld [vmem:[#allocation14 + $0xb8] sm:$0xf]
    %v5086 = vld [vmem:[#allocation14 + $0xbc] sm:$0xf]
    %v5087 = vld [vmem:[#allocation14 + $0xc0] sm:$0xf]
    %v5088 = vld [vmem:[#allocation14 + $0xc4] sm:$0xf]
    %v5089 = vld [vmem:[#allocation14 + $0xc8] sm:$0xf]
    %v5090 = vld [vmem:[#allocation14 + $0xcc] sm:$0xf]
    %v5091 = vld [vmem:[#allocation14 + $0xd0] sm:$0xf]
    %v5092 = vld [vmem:[#allocation14 + $0xd4] sm:$0xf]
    %v5093 = vld [vmem:[#allocation14 + $0xd8] sm:$0xf]
    %v5094 = vld [vmem:[#allocation14 + $0xdc] sm:$0xf]
    %v5095 = vld [vmem:[#allocation14 + $0xe0] sm:$0xf]
    %v5096 = vld [vmem:[#allocation14 + $0xe4] sm:$0xf]
    %v5097 = vld [vmem:[#allocation14 + $0xe8] sm:$0xf]
    %v5098 = vld [vmem:[#allocation14 + $0xec] sm:$0xf]
    %v5099 = vld [vmem:[#allocation14 + $0xf0] sm:$0xf]
    %v5100 = vld [vmem:[#allocation14 + $0xf4] sm:$0xf]
    %v5101 = vld [vmem:[#allocation14 + $0xf8] sm:$0xf]
    %v5102 = vld [vmem:[#allocation14 + $0xfc] sm:$0xf]
    %v5103 = vld [vmem:[%s13] sm:$0x1]
    %v5105 = vlaneseq
    %v5106 = vshrl.u32 %v5105, 7
    %v5107 = vsub.s32 0, %v5106
    %v5108 = vrot.slane %v5103, %v5107
    %v5174 = vunpack.c.l.b16 %v5039
    %v5175 = vunpack.c.l.b16 %v5040
    %v5176 = vunpack.c.l.b16 %v5041
    %v5177 = vunpack.c.l.b16 %v5042
    %v5178 = vunpack.c.l.b16 %v5043
    %v5179 = vunpack.c.l.b16 %v5044
    %v5180 = vunpack.c.l.b16 %v5045
    %v5181 = vunpack.c.l.b16 %v5046
    %v5182 = vunpack.c.l.b16 %v5047
    %v5183 = vunpack.c.l.b16 %v5048
    %v5184 = vunpack.c.l.b16 %v5049
    %v5185 = vunpack.c.l.b16 %v5050
    %v5186 = vunpack.c.l.b16 %v5051
    %v5187 = vunpack.c.l.b16 %v5052
    %v5188 = vunpack.c.l.b16 %v5053
    %v5189 = vunpack.c.l.b16 %v5054
    %v5190 = vunpack.c.l.b16 %v5055
    %v5191 = vunpack.c.l.b16 %v5056
    %v5192 = vunpack.c.l.b16 %v5057
    %v5193 = vunpack.c.l.b16 %v5058
    %v5194 = vunpack.c.l.b16 %v5059
    %v5195 = vunpack.c.l.b16 %v5060
    %v5196 = vunpack.c.l.b16 %v5061
    %v5197 = vunpack.c.l.b16 %v5062
    %v5198 = vunpack.c.l.b16 %v5063
    %v5199 = vunpack.c.l.b16 %v5064
    %v5200 = vunpack.c.l.b16 %v5065
    %v5201 = vunpack.c.l.b16 %v5066
    %v5202 = vunpack.c.l.b16 %v5067
    %v5203 = vunpack.c.l.b16 %v5068
    %v5204 = vunpack.c.l.b16 %v5069
    %v5205 = vunpack.c.l.b16 %v5070
    %v5206 = vunpack.c.l.b16 %v5071
    %v5207 = vunpack.c.l.b16 %v5072
    %v5208 = vunpack.c.l.b16 %v5073
    %v5209 = vunpack.c.l.b16 %v5074
    %v5210 = vunpack.c.l.b16 %v5075
    %v5211 = vunpack.c.l.b16 %v5076
    %v5212 = vunpack.c.l.b16 %v5077
    %v5213 = vunpack.c.l.b16 %v5078
    %v5214 = vunpack.c.l.b16 %v5079
    %v5215 = vunpack.c.l.b16 %v5080
    %v5216 = vunpack.c.l.b16 %v5081
    %v5217 = vunpack.c.l.b16 %v5082
    %v5218 = vunpack.c.l.b16 %v5083
    %v5219 = vunpack.c.l.b16 %v5084
    %v5220 = vunpack.c.l.b16 %v5085
    %v5221 = vunpack.c.l.b16 %v5086
    %v5222 = vunpack.c.l.b16 %v5087
    %v5223 = vunpack.c.l.b16 %v5088
    %v5224 = vunpack.c.l.b16 %v5089
    %v5225 = vunpack.c.l.b16 %v5090
    %v5226 = vunpack.c.l.b16 %v5091
    %v5227 = vunpack.c.l.b16 %v5092
    %v5228 = vunpack.c.l.b16 %v5093
    %v5229 = vunpack.c.l.b16 %v5094
    %v5230 = vunpack.c.l.b16 %v5095
    %v5231 = vunpack.c.l.b16 %v5096
    %v5232 = vunpack.c.l.b16 %v5097
    %v5233 = vunpack.c.l.b16 %v5098
    %v5234 = vunpack.c.l.b16 %v5099
    %v5235 = vunpack.c.l.b16 %v5100
    %v5236 = vunpack.c.l.b16 %v5101
    %v5237 = vunpack.c.l.b16 %v5102
    %v5238 = vpack.c.b16 %v5175, %v5174
    %v5239 = vpack.c.b16 %v5177, %v5176
    %v5240 = vpack.c.b16 %v5179, %v5178
    %v5241 = vpack.c.b16 %v5181, %v5180
    %v5242 = vpack.c.b16 %v5183, %v5182
    %v5243 = vpack.c.b16 %v5185, %v5184
    %v5244 = vpack.c.b16 %v5187, %v5186
    %v5245 = vpack.c.b16 %v5189, %v5188
    %v5246 = vpack.c.b16 %v5191, %v5190
    %v5247 = vpack.c.b16 %v5193, %v5192
    %v5248 = vpack.c.b16 %v5195, %v5194
    %v5249 = vpack.c.b16 %v5197, %v5196
    %v5250 = vpack.c.b16 %v5199, %v5198
    %v5251 = vpack.c.b16 %v5201, %v5200
    %v5252 = vpack.c.b16 %v5203, %v5202
    %v5253 = vpack.c.b16 %v5205, %v5204
    %v5254 = vpack.c.b16 %v5207, %v5206
    %v5255 = vpack.c.b16 %v5209, %v5208
    %v5256 = vpack.c.b16 %v5211, %v5210
    %v5257 = vpack.c.b16 %v5213, %v5212
    %v5258 = vpack.c.b16 %v5215, %v5214
    %v5259 = vpack.c.b16 %v5217, %v5216
    %v5260 = vpack.c.b16 %v5219, %v5218
    %v5261 = vpack.c.b16 %v5221, %v5220
    %v5262 = vpack.c.b16 %v5223, %v5222
    %v5263 = vpack.c.b16 %v5225, %v5224
    %v5264 = vpack.c.b16 %v5227, %v5226
    %v5265 = vpack.c.b16 %v5229, %v5228
    %v5266 = vpack.c.b16 %v5231, %v5230
    %v5267 = vpack.c.b16 %v5233, %v5232
    %v5268 = vpack.c.b16 %v5235, %v5234
    %v5269 = vpack.c.b16 %v5237, %v5236
    %5302 = vmatprep.subr.bf16.mxu0 0
    %5303 = vmatpush1.bf16.msra.mxu0 %v5238
    %5304 = vmatprep.subr.bf16.mxu0 0
    %5305 = vmatpush1.bf16.msra.mxu0 %v5239
    %5306 = vmatprep.subr.bf16.mxu0 0
    %5307 = vmatpush1.bf16.msra.mxu0 %v5240
    %5308 = vmatprep.subr.bf16.mxu0 0
    %5309 = vmatpush1.bf16.msra.mxu0 %v5241
    %5310 = vmatprep.subr.bf16.mxu0 0
    %5311 = vmatpush1.bf16.msra.mxu0 %v5242
    %5312 = vmatprep.subr.bf16.mxu0 0
    %5313 = vmatpush1.bf16.msra.mxu0 %v5243
    %5314 = vmatprep.subr.bf16.mxu0 0
    %5315 = vmatpush1.bf16.msra.mxu0 %v5244
    %5316 = vmatprep.subr.bf16.mxu0 0
    %5317 = vmatpush1.bf16.msra.mxu0 %v5245
    %5318 = vmatprep.subr.bf16.mxu0 0
    %5319 = vmatpush1.bf16.msra.mxu0 %v5246
    %5320 = vmatprep.subr.bf16.mxu0 0
    %5321 = vmatpush1.bf16.msra.mxu0 %v5247
    %5322 = vmatprep.subr.bf16.mxu0 0
    %5323 = vmatpush1.bf16.msra.mxu0 %v5248
    %5324 = vmatprep.subr.bf16.mxu0 0
    %5325 = vmatpush1.bf16.msra.mxu0 %v5249
    %5326 = vmatprep.subr.bf16.mxu0 0
    %5327 = vmatpush1.bf16.msra.mxu0 %v5250
    %5328 = vmatprep.subr.bf16.mxu0 0
    %5329 = vmatpush1.bf16.msra.mxu0 %v5251
    %5330 = vmatprep.subr.bf16.mxu0 0
    %5331 = vmatpush1.bf16.msra.mxu0 %v5252
    %5332 = vmatprep.subr.bf16.mxu0 0
    %5333 = vmatpush1.bf16.msra.mxu0 %v5253
    %5334 = vmatprep.mubr.bf16.mxu0 %v5036
    %5335 = vmatmul.mubr.bf16.gmra.mrb[0].mxu0 %v5035
    %v5336 = vpop.f32.mrb[0].mxu0
    %v5337 = vadd.f32 %v5108, %v5336
    %v5338 = vpop.f32.mrb[0].mxu0
    %v5339 = vpop.f32.mrb[0].mxu0
    %v5340 = vpop.f32.mrb[0].mxu0
    %5341 = vdwg.mxu0
    %5342 = vmatprep.subr.bf16.mxu0 0
    %5343 = vmatpush1.bf16.msra.mxu0 %v5254
    %5344 = vmatprep.subr.bf16.mxu0 0
    %5345 = vmatpush1.bf16.msra.mxu0 %v5255
    %5346 = vmatprep.subr.bf16.mxu0 0
    %5347 = vmatpush1.bf16.msra.mxu0 %v5256
    %5348 = vmatprep.subr.bf16.mxu0 0
    %5349 = vmatpush1.bf16.msra.mxu0 %v5257
    %5350 = vmatprep.subr.bf16.mxu0 0
    %5351 = vmatpush1.bf16.msra.mxu0 %v5258
    %5352 = vmatprep.subr.bf16.mxu0 0
    %5353 = vmatpush1.bf16.msra.mxu0 %v5259
    %5354 = vmatprep.subr.bf16.mxu0 0
    %5355 = vmatpush1.bf16.msra.mxu0 %v5260
    %5356 = vmatprep.subr.bf16.mxu0 0
    %5357 = vmatpush1.bf16.msra.mxu0 %v5261
    %5358 = vmatprep.subr.bf16.mxu0 0
    %5359 = vmatpush1.bf16.msra.mxu0 %v5262
    %5360 = vmatprep.subr.bf16.mxu0 0
    %5361 = vmatpush1.bf16.msra.mxu0 %v5263
    %5362 = vmatprep.subr.bf16.mxu0 0
    %5363 = vmatpush1.bf16.msra.mxu0 %v5264
    %5364 = vmatprep.subr.bf16.mxu0 0
    %5365 = vmatpush1.bf16.msra.mxu0 %v5265
    %5366 = vmatprep.subr.bf16.mxu0 0
    %5367 = vmatpush1.bf16.msra.mxu0 %v5266
    %5368 = vmatprep.subr.bf16.mxu0 0
    %5369 = vmatpush1.bf16.msra.mxu0 %v5267
    %5370 = vmatprep.subr.bf16.mxu0 0
    %5371 = vmatpush1.bf16.msra.mxu0 %v5268
    %5372 = vmatprep.subr.bf16.mxu0 0
    %5373 = vmatpush1.bf16.msra.mxu0 %v5269
    %5374 = vmatprep.mubr.bf16.mxu0 %v5038
    %5375 = vmatmul.mubr.bf16.gmra.mrb[0].mxu0 %v5037
    %v5376 = vpop.f32.mrb[0].mxu0
    %v5377 = vadd.f32 %v5337, %v5376
    %v5378 = vpop.f32.mrb[0].mxu0
    %v5379 = vpop.f32.mrb[0].mxu0
    %v5380 = vpop.f32.mrb[0].mxu0
    %5381 = vdwg.mxu0
    %5382 = vst [vmem:[#allocation15] sm:$0xff] %v5377
    // Predicated region
    $region86: #{tpu_custom_call.1} parent=1 // pred_check
      _
    $region87: #{tpu_custom_call.1} parent=1 // pred_check_branch
      %5384 = sbr.rel (0) target = $region89
    $region88: #{tpu_custom_call.1} parent=1 // pred_region
      %s5386 = ssub.s32 128, 128
      %5387 = vsyncadd [#allocation5], %s5386
      %s5389 = sshll.u32 [#allocation15], 4
      %s5390 = int_to_ptr.vmem [resolvable:$true] %s5389
      %5392 = dma.vmem_to_hbm [thread:$0]  %s5390, 128, %s14, [#allocation5]
    $region89: #{tpu_custom_call.1} parent=1 // pred_fallthru
      _
    // Predicated region
    $region90: #{tpu_custom_call.1} parent=1 // pred_check
      _
    $region91: #{tpu_custom_call.1} parent=1 // pred_check_branch
      %5394 = sbr.rel (0) target = $region93
    $region92: #{tpu_custom_call.1} parent=1 // pred_region
      %5395 = dma.done [#allocation5], 128
    $region93: #{tpu_custom_call.1} parent=1 // pred_fallthru
      _
    %5396 = vsyncpa [#allocation4], 1
    %5397 = vsyncpa [#allocation7], 1
    %5398 = vsyncpa [#allocation10], 1
    %5399 = vsyncpa [#allocation13], 1
    %5400 = vsyncpa [#allocation5], 1

</llo_original>
